<compile_context>
chip_gen: v5e
topology: v5e:2x2
jax: 0.10.0
libtpu: 0.0.40
codegen_flags: <defaults>
</compile_context>

<pallas_src>
import functools

import jax
import jax.numpy as jnp
from jax.experimental import pallas as pl
from jax.experimental.pallas import tpu as pltpu

DIL = 3        # conv3 dilation along W
KW = 34        # conv3 kernel width
UNITS = 64     # conv3 requires 64 input channels -> self.units must be 64
BN_EPS = 1e-3


def pfn_kernel(x_ref, w1bd_ref, b1_ref, w3_ref, b3_ref, o_ref):
    """Fused conv1(1x1)+BN(eval)+ReLU -> conv3(1,KW,dil=DIL) for one tile of rows.

    x_ref   : (T, KW*cin)    bf16  im2col'd input rows, lane index = tap*cin + c
    w1bd_ref: (KW*cin, KW*U) bf16  block-diagonal conv1 weight (BN scale folded in)
    b1_ref  : (1, KW*U)      f32   conv1 bias (BN shift folded in), tiled per tap
    w3_ref  : (KW*U, U)      bf16  conv3 weight flattened as (tap, in_ch) -> out_ch
    b3_ref  : (1, U)         f32   conv3 bias
    o_ref   : (T, U)         bf16  output rows (Wout squeezed into the row dim)
    """
    # conv1 + folded BN + ReLU as ONE block-diagonal matmul (K=306, N=2176).
    # Zero blocks add exactly 0 in the f32 accumulator -> identical numerics to per-tap matmuls,
    # but no unaligned 9-lane slices and no masked 64-lane stores.
    h = jax.lax.dot_general(x_ref[...], w1bd_ref[...], (((1,), (0,)), ((), ())),
                            preferred_element_type=jnp.float32)        # (T, KW*U) f32
    y = jnp.maximum(h + b1_ref[...], 0.0).astype(jnp.bfloat16)          # (T, KW*U) bf16

    # conv3 as ONE im2col matmul (K = KW*U = 2176 keeps the MXU fed).
    acc = jax.lax.dot_general(y, w3_ref[...], (((1,), (0,)), ((), ())),
                              preferred_element_type=jnp.float32)       # (T, U) f32
    o_ref[...] = (acc + b3_ref[...]).astype(o_ref.dtype)


@functools.partial(jax.jit, static_argnames=("tile_m",))
def pfn_forward(x_nchw, params, tile_m=1136):
    """PFNLayer forward. x_nchw: [N, Cin, H, W] float32 -> [N, 64, H, W - 99]."""
    n, cin, h, w = x_nchw.shape
    u = UNITS
    w_out = w - DIL * (KW - 1)
    assert w_out >= 1, "W must be >= 100 for the dilated (1,34)/dil=3 conv"

    # ---- glue: fold BN (eval mode) into conv1, build block-diagonal weight ----
    w1 = params["conv1_w"][:, :, 0, 0]                                     # (U, Cin)
    scale = params["bn_gamma"] * jax.lax.rsqrt(params["bn_var"] + BN_EPS)   # (U,)
    w1f = (w1 * scale[:, None]).T                                           # (Cin, U) f32
    b1f = ((params["conv1_b"] - params["bn_mean"]) * scale
           + params["bn_beta"]).reshape(1, u)                               # (1, U) f32
    # W1bd[t*cin + c, t*U + k] = w1f[c, k]; zeros elsewhere.
    w1bd = jnp.kron(jnp.eye(KW, dtype=w1f.dtype), w1f).astype(jnp.bfloat16)  # (KW*cin, KW*U)
    b1t = jnp.tile(b1f, (1, KW)).astype(jnp.float32)                         # (1, KW*U)
    # conv3 weight (U, Cin_u, 1, KW) -> (KW, Cin_u, U) -> flat (KW*U, U), row = t*U + in_ch
    w3f = jnp.transpose(params["conv3_w"][:, :, 0, :], (2, 1, 0)) \
             .reshape(KW * u, u).astype(jnp.bfloat16)
    b3f = params["conv3_b"].reshape(1, u).astype(jnp.float32)

    # ---- glue: cast to bf16 first, then gather only the columns the dilated conv reads ----
    x_cl = jnp.transpose(x_nchw.astype(jnp.bfloat16), (0, 2, 3, 1))          # (N, H, W, Cin)
    if w_out == 1:
        # production case (W=100): output column 0 reads exactly input columns 0,3,...,99
        x_taps = x_cl[:, :, ::DIL, :]                                        # (N, H, KW, Cin)
    else:
        cols = jnp.arange(w_out)[:, None] + DIL * jnp.arange(KW)[None, :]    # (Wout, KW)
        x_taps = jnp.take(x_cl, cols.reshape(-1), axis=2)                    # (N, H, Wout*KW, Cin)
    m = n * h * w_out
    x2 = x_taps.reshape(m, KW * cin)                   # rows=(n,h,w0), lanes=(tap, channel)

    # pad rows to a multiple of tile_m (production N*H = 6815 is not divisible)
    num_tiles = pl.cdiv(m, tile_m)
    m_pad = num_tiles * tile_m
    if m_pad != m:
        x2 = jnp.pad(x2, ((0, m_pad - m), (0, 0)))

    flops = 2 * m_pad * (KW * cin * KW * u + KW * u * u)
    bytes_accessed = (m_pad * KW * cin * 2            # x2 (bf16)
                      + KW * cin * KW * u * 2         # block-diag conv1 weight (bf16)
                      + KW * u * u * 2                # conv3 weight (bf16)
                      + (KW * u + u) * 4              # biases (f32)
                      + m_pad * u * 2)                # output (bf16)

    out = pl.pallas_call(
        pfn_kernel,
        out_shape=jax.ShapeDtypeStruct((m_pad, u), jnp.bfloat16),
        grid_spec=pltpu.PrefetchScalarGridSpec(
            num_scalar_prefetch=0,
            grid=(num_tiles,),
            in_specs=[
                pl.BlockSpec((tile_m, KW * cin), lambda i: (i, 0)),   # x rows
                pl.BlockSpec((KW * cin, KW * u), lambda i: (0, 0)),   # block-diag conv1 weight
                pl.BlockSpec((1, KW * u), lambda i: (0, 0)),          # tiled conv1 bias
                pl.BlockSpec((KW * u, u), lambda i: (0, 0)),          # conv3 weight (flat)
                pl.BlockSpec((1, u), lambda i: (0, 0)),               # conv3 bias
            ],
            out_specs=pl.BlockSpec((tile_m, u), lambda i: (i, 0)),
        ),
        compiler_params=pltpu.CompilerParams(
            dimension_semantics=("parallel",),
            vmem_limit_bytes=48 * 1024 * 1024,
        ),
        cost_estimate=pl.CostEstimate(flops=flops, transcendentals=0,
                                      bytes_accessed=bytes_accessed),
    )(x2, w1bd, b1t, w3f, b3f)

    # (m, U) bf16 -> NCHW (N, U, H, Wout) f32
    out = out[:m].reshape(n, h, w_out, u).astype(jnp.float32)
    return jnp.transpose(out, (0, 3, 1, 2))


def pfn_reference(x_nchw, params):
    """Pure-JAX f32 reference matching PyTorch eval-mode semantics."""
    y = jnp.einsum("nchw,uc->nuhw", x_nchw, params["conv1_w"][:, :, 0, 0])
    y = y + params["conv1_b"][None, :, None, None]
    scale = params["bn_gamma"] * jax.lax.rsqrt(params["bn_var"] + BN_EPS)
    y = (y - params["bn_mean"][None, :, None, None]) * scale[None, :, None, None] \
        + params["bn_beta"][None, :, None, None]
    y = jnp.maximum(y, 0.0)
    out = jax.lax.conv_general_dilated(
        y, params["conv3_w"], window_strides=(1, 1), padding="VALID",
        rhs_dilation=(1, DIL), dimension_numbers=("NCHW", "OIHW", "NCHW"),
    )
    return out + params["conv3_b"][None, :, None, None]


def init_params(key, in_channels):
    ks = jax.random.split(key, 8)
    u = UNITS
    return {
        "conv1_w": 0.1 * jax.random.normal(ks[0], (u, in_channels, 1, 1), jnp.float32),
        "conv1_b": 0.05 * jax.random.normal(ks[1], (u,), jnp.float32),
        "bn_gamma": 1.0 + 0.1 * jax.random.normal(ks[2], (u,), jnp.float32),
        "bn_beta": 0.05 * jax.random.normal(ks[3], (u,), jnp.float32),
        "bn_mean": 0.1 * jax.random.normal(ks[4], (u,), jnp.float32),
        "bn_var": jax.random.uniform(ks[5], (u,), jnp.float32, 0.5, 1.5),
        "conv3_w": 0.05 * jax.random.normal(ks[6], (u, u, 1, KW), jnp.float32),
        "conv3_b": 0.05 * jax.random.normal(ks[7], (u,), jnp.float32),
    }


if __name__ == "__main__":
    key = jax.random.PRNGKey(0)
    k_in, k_p = jax.random.split(key)

    # Small shapes consistent with the module: original input was [1, 9, 6815, 100];
    # W must stay >= 100 for the dilated conv, so shrink H only. H=320 with tile_m=128
    # exercises both the row-padding path (320 -> 384) and a multi-step grid (3 tiles).
    # Production shapes use the default tile_m=1136 (6 even grid steps for m=6815).
    N, CIN, H, W = 1, 9, 320, 100
    x = jax.random.normal(k_in, (N, CIN, H, W), jnp.float32)
    params = init_params(k_p, CIN)

    out = pfn_forward(x, params, tile_m=128)
    out = jax.block_until_ready(out)

    ref = pfn_reference(x, params)
    assert out.shape == (N, UNITS, H, W - DIL * (KW - 1)), out.shape
    # bf16 MXU operands / bf16 output store with f32 accumulation -> looser tolerance than f32
    max_err = float(jnp.max(jnp.abs(out - ref)))
    assert jnp.allclose(out, ref, rtol=2e-2, atol=2e-2), max_err

    print("KERNEL_OK")
</pallas_src>

<mosaic_0001>
module attributes {stable_mosaic.version = 11 : i64} {
  func.func @pfn_kernel(%arg0: i32, %arg1: memref<128x306xbf16, #tpu.memory_space<vmem>>, %arg2: memref<306x2176xbf16, #tpu.memory_space<vmem>>, %arg3: memref<1x2176xf32, #tpu.memory_space<vmem>>, %arg4: memref<2176x64xbf16, #tpu.memory_space<vmem>>, %arg5: memref<1x64xf32, #tpu.memory_space<vmem>>, %arg6: memref<128x64xbf16, #tpu.memory_space<vmem>>) attributes {dimension_semantics = [#tpu.dimension_semantics<parallel>], iteration_bounds = array<i64: 3>, scalar_prefetch = 0 : i64, scratch_operands = 0 : i64, tpu.core_type = #tpu.core_type<tc>, window_params = [{transform_indices = @transform_0, window_bounds = array<i64: 128, 306>}, {pipeline_mode = #tpu.pipeline_mode<synchronous>, transform_indices = @transform_1, window_bounds = array<i64: 306, 2176>}, {pipeline_mode = #tpu.pipeline_mode<synchronous>, transform_indices = @transform_2, window_bounds = array<i64: 1, 2176>}, {pipeline_mode = #tpu.pipeline_mode<synchronous>, transform_indices = @transform_3, window_bounds = array<i64: 2176, 64>}, {pipeline_mode = #tpu.pipeline_mode<synchronous>, transform_indices = @transform_4, window_bounds = array<i64: 1, 64>}, {transform_indices = @transform_5, window_bounds = array<i64: 128, 64>}]} {
    %c0 = arith.constant 0 : index
    %c0_0 = arith.constant 0 : index
    %0 = vector.load %arg1[%c0, %c0_0] : memref<128x306xbf16, #tpu.memory_space<vmem>>, vector<128x306xbf16>
    %c0_1 = arith.constant 0 : index
    %c0_2 = arith.constant 0 : index
    %1 = vector.load %arg2[%c0_1, %c0_2] : memref<306x2176xbf16, #tpu.memory_space<vmem>>, vector<306x2176xbf16>
    %cst = arith.constant dense<0.000000e+00> : vector<128x2176xf32>
    %2 = tpu.matmul %0, %1, %cst {dimension_numbers = #tpu.dot_dimension_numbers<[1], [0], [0], [1], [0, 0, 1, 1], [], []>} : vector<128x306xbf16>, vector<306x2176xbf16>, vector<128x2176xf32> -> vector<128x2176xf32>
    %c0_3 = arith.constant 0 : index
    %c0_4 = arith.constant 0 : index
    %3 = vector.load %arg3[%c0_3, %c0_4] : memref<1x2176xf32, #tpu.memory_space<vmem>>, vector<1x2176xf32>
    %4 = vector.broadcast %3 : vector<1x2176xf32> to vector<128x2176xf32>
    %5 = arith.addf %2, %4 : vector<128x2176xf32>
    %cst_5 = arith.constant 0.000000e+00 : f32
    %6 = vector.broadcast %cst_5 : f32 to vector<128x2176xf32>
    %7 = arith.maximumf %5, %6 : vector<128x2176xf32>
    %8 = arith.truncf %7 : vector<128x2176xf32> to vector<128x2176xbf16>
    %c0_6 = arith.constant 0 : index
    %c0_7 = arith.constant 0 : index
    %9 = vector.load %arg4[%c0_6, %c0_7] : memref<2176x64xbf16, #tpu.memory_space<vmem>>, vector<2176x64xbf16>
    %cst_8 = arith.constant dense<0.000000e+00> : vector<128x64xf32>
    %10 = tpu.matmul %8, %9, %cst_8 {dimension_numbers = #tpu.dot_dimension_numbers<[1], [0], [0], [1], [0, 0, 1, 1], [], []>} : vector<128x2176xbf16>, vector<2176x64xbf16>, vector<128x64xf32> -> vector<128x64xf32>
    %c0_9 = arith.constant 0 : index
    %c0_10 = arith.constant 0 : index
    %11 = vector.load %arg5[%c0_9, %c0_10] : memref<1x64xf32, #tpu.memory_space<vmem>>, vector<1x64xf32>
    %12 = vector.broadcast %11 : vector<1x64xf32> to vector<128x64xf32>
    %13 = arith.addf %10, %12 : vector<128x64xf32>
    %14 = arith.truncf %13 : vector<128x64xf32> to vector<128x64xbf16>
    %c0_11 = arith.constant 0 : index
    %c0_12 = arith.constant 0 : index
    %15 = vector.load %arg6[%c0_11, %c0_12] : memref<128x64xbf16, #tpu.memory_space<vmem>>, vector<128x64xbf16>
    tpu.vector_store %arg6[%c0_11, %c0_12], %14 {strides = array<i32>} : memref<128x64xbf16, #tpu.memory_space<vmem>>, vector<128x64xbf16>,
    return
  }
  func.func @transform_0(%arg0: i32) -> (i32, i32) {
    %c0_i32 = arith.constant 0 : i32
    %c0_i32_0 = arith.constant 0 : i32
    return %arg0, %c0_i32 : i32, i32
  }
  func.func @transform_1(%arg0: i32) -> (i32, i32) {
    %c0_i32 = arith.constant 0 : i32
    %c0_i32_0 = arith.constant 0 : i32
    %c0_i32_1 = arith.constant 0 : i32
    return %c0_i32, %c0_i32_0 : i32, i32
  }
  func.func @transform_2(%arg0: i32) -> (i32, i32) {
    %c0_i32 = arith.constant 0 : i32
    %c0_i32_0 = arith.constant 0 : i32
    %c0_i32_1 = arith.constant 0 : i32
    return %c0_i32, %c0_i32_0 : i32, i32
  }
  func.func @transform_3(%arg0: i32) -> (i32, i32) {
    %c0_i32 = arith.constant 0 : i32
    %c0_i32_0 = arith.constant 0 : i32
    %c0_i32_1 = arith.constant 0 : i32
    return %c0_i32, %c0_i32_0 : i32, i32
  }
  func.func @transform_4(%arg0: i32) -> (i32, i32) {
    %c0_i32 = arith.constant 0 : i32
    %c0_i32_0 = arith.constant 0 : i32
    %c0_i32_1 = arith.constant 0 : i32
    return %c0_i32, %c0_i32_0 : i32, i32
  }
  func.func @transform_5(%arg0: i32) -> (i32, i32) {
    %c0_i32 = arith.constant 0 : i32
    %c0_i32_0 = arith.constant 0 : i32
    return %arg0, %c0_i32 : i32, i32
  }
}

</mosaic_0001>

<llo_original>
// kernel: pfn_forward.1
$region0: #{pfn_forward.1}
  #allocation0 [shape = 'u32[]', space=smem, size = 0x4, offset = 0x4, fixed_abs, tag = 'smem constant byte address 0x4 - core index']
  #allocation1 [shape = 'u32[72,128]{1,0:T(1,128)}', space=vmem, size = 0x9000, scoped, tag = 'internal scratch']
  %s0 = inlined_call_operand.vmem [shape: bf16[384,306], index: 0, kind: input, shape index: {}]
  %s1 = inlined_call_operand.vmem [shape: bf16[306,2176], index: 1, kind: input, shape index: {}]
  %s2 = inlined_call_operand.vmem [shape: f32[1,2176], index: 2, kind: input, shape index: {}]
  %s3 = inlined_call_operand.vmem [shape: bf16[2176,64], index: 3, kind: input, shape index: {}]
  %s4 = inlined_call_operand.vmem [shape: f32[1,64], index: 4, kind: input, shape index: {}]
  %s5 = inlined_call_operand.vmem [shape: bf16[384,64], index: 5, kind: output, shape index: {}]
  %s6 = sld [smem:[#allocation0]]
  $region53: #{pfn_forward.1} parent=0
    _
  %s8 = ssub.s32 1, %s6
  %s9 = scalar_select 0, %s8, %s6
  loop: start=0, step=1, limit=5
  $region2: #{pfn_forward.1} parent=0 // loop_pre_header
    _
  $region3: #{pfn_forward.1} parent=0 // loop_header
    %s11 = sphi 0, %s15
    %p12 = scmp.ge.s32.totalorder %s11, 5
    %s21 = sphi 0, %s23
    %s24 = sphi 0, %s21
    %s25 = sphi 0, %s24
    %s41 = sphi 0, %s25
    %s45 = sphi 0, %s45
    %s47 = sphi 0, %s45
    %s48 = sphi 0, %s47
    %s62 = sphi 0, %s48
    %s66 = sphi 0, %s66
    %s68 = sphi 0, %s66
    %s69 = sphi 0, %s68
    %s83 = sphi 0, %s69
    %s87 = sphi 0, %s87
    %s89 = sphi 0, %s87
    %s90 = sphi 0, %s89
    %s104 = sphi 0, %s90
    %s108 = sphi 0, %s108
    %s110 = sphi 0, %s108
    %s111 = sphi 0, %s110
    %s125 = sphi 0, %s111
    %s131 = sphi 0, %s133
    %s134 = sphi 0, %s131
    %s135 = sphi 0, %s134
    %s151 = sphi 0, %s135
  $region4: #{pfn_forward.1} parent=0 // loop_header_branch
    %14 = sbr.rel (%p12) target = $region8
  $region5: #{pfn_forward.1} parent=0 // loop_body
    %s16 = ssub.s32 %s11, 1
    %s17 = ssub.s32 %s11, 2
    %s18 = sadd.s32 %s11, 1
    %s19 = ssub.s32 %s11, %s18
    %p20 = scmp.eq.s32.totalorder %s19, 0
    %s22 = sadd.s32 %s21, 1
    %s23 = scalar_select %p20, %s21, %s22
    %p26 = pneg %p20
    %p27 = scmp.eq.s32.totalorder %s11, 2
    %p28 = por %p26, %p27
    %p29 = scmp.ne.s32.totalorder %s21, %s24
    %p30 = scmp.eq.s32.totalorder %s11, 0
    %p31 = por %p29, %p30
    %p32 = scmp.ne.s32.totalorder %s21, %s24
    %p33 = scmp.eq.s32.totalorder %s16, 2
    %p34 = por %p32, %p33
    %p35 = scmp.ne.s32.totalorder %s24, %s25
    %p36 = scmp.eq.s32.totalorder %s16, 0
    %p37 = por %p35, %p36
    %p38 = scmp.ne.s32.totalorder %s24, %s25
    %p39 = scmp.eq.s32.totalorder %s17, 2
    %p40 = por %p38, %p39
    %p42 = scmp.ne.s32.totalorder %s25, %s41
    %p43 = scmp.eq.s32.totalorder %s17, 0
    %p44 = por %p42, %p43
    %s46 = sadd.s32 %s45, 1
    %p49 = scmp.eq.s32.totalorder %s11, 2
    %p50 = scmp.ne.s32.totalorder %s45, %s47
    %p51 = scmp.eq.s32.totalorder %s11, 0
    %p52 = por %p50, %p51
    %p53 = scmp.ne.s32.totalorder %s45, %s47
    %p54 = scmp.eq.s32.totalorder %s16, 2
    %p55 = por %p53, %p54
    %p56 = scmp.ne.s32.totalorder %s47, %s48
    %p57 = scmp.eq.s32.totalorder %s16, 0
    %p58 = por %p56, %p57
    %p59 = scmp.ne.s32.totalorder %s47, %s48
    %p60 = scmp.eq.s32.totalorder %s17, 2
    %p61 = por %p59, %p60
    %p63 = scmp.ne.s32.totalorder %s48, %s62
    %p64 = scmp.eq.s32.totalorder %s17, 0
    %p65 = por %p63, %p64
    %s67 = sadd.s32 %s66, 1
    %p70 = scmp.eq.s32.totalorder %s11, 2
    %p71 = scmp.ne.s32.totalorder %s66, %s68
    %p72 = scmp.eq.s32.totalorder %s11, 0
    %p73 = por %p71, %p72
    %p74 = scmp.ne.s32.totalorder %s66, %s68
    %p75 = scmp.eq.s32.totalorder %s16, 2
    %p76 = por %p74, %p75
    %p77 = scmp.ne.s32.totalorder %s68, %s69
    %p78 = scmp.eq.s32.totalorder %s16, 0
    %p79 = por %p77, %p78
    %p80 = scmp.ne.s32.totalorder %s68, %s69
    %p81 = scmp.eq.s32.totalorder %s17, 2
    %p82 = por %p80, %p81
    %p84 = scmp.ne.s32.totalorder %s69, %s83
    %p85 = scmp.eq.s32.totalorder %s17, 0
    %p86 = por %p84, %p85
    %s88 = sadd.s32 %s87, 1
    %p91 = scmp.eq.s32.totalorder %s11, 2
    %p92 = scmp.ne.s32.totalorder %s87, %s89
    %p93 = scmp.eq.s32.totalorder %s11, 0
    %p94 = por %p92, %p93
    %p95 = scmp.ne.s32.totalorder %s87, %s89
    %p96 = scmp.eq.s32.totalorder %s16, 2
    %p97 = por %p95, %p96
    %p98 = scmp.ne.s32.totalorder %s89, %s90
    %p99 = scmp.eq.s32.totalorder %s16, 0
    %p100 = por %p98, %p99
    %p101 = scmp.ne.s32.totalorder %s89, %s90
    %p102 = scmp.eq.s32.totalorder %s17, 2
    %p103 = por %p101, %p102
    %p105 = scmp.ne.s32.totalorder %s90, %s104
    %p106 = scmp.eq.s32.totalorder %s17, 0
    %p107 = por %p105, %p106
    %s109 = sadd.s32 %s108, 1
    %p112 = scmp.eq.s32.totalorder %s11, 2
    %p113 = scmp.ne.s32.totalorder %s108, %s110
    %p114 = scmp.eq.s32.totalorder %s11, 0
    %p115 = por %p113, %p114
    %p116 = scmp.ne.s32.totalorder %s108, %s110
    %p117 = scmp.eq.s32.totalorder %s16, 2
    %p118 = por %p116, %p117
    %p119 = scmp.ne.s32.totalorder %s110, %s111
    %p120 = scmp.eq.s32.totalorder %s16, 0
    %p121 = por %p119, %p120
    %p122 = scmp.ne.s32.totalorder %s110, %s111
    %p123 = scmp.eq.s32.totalorder %s17, 2
    %p124 = por %p122, %p123
    %p126 = scmp.ne.s32.totalorder %s111, %s125
    %p127 = scmp.eq.s32.totalorder %s17, 0
    %p128 = por %p126, %p127
    %s129 = ssub.s32 %s11, %s18
    %p130 = scmp.eq.s32.totalorder %s129, 0
    %s132 = sadd.s32 %s131, 1
    %s133 = scalar_select %p130, %s131, %s132
    %p136 = pneg %p130
    %p137 = scmp.eq.s32.totalorder %s11, 2
    %p138 = por %p136, %p137
    %p139 = scmp.ne.s32.totalorder %s131, %s134
    %p140 = scmp.eq.s32.totalorder %s11, 0
    %p141 = por %p139, %p140
    %p142 = scmp.ne.s32.totalorder %s131, %s134
    %p143 = scmp.eq.s32.totalorder %s16, 2
    %p144 = por %p142, %p143
    %p145 = scmp.ne.s32.totalorder %s134, %s135
    %p146 = scmp.eq.s32.totalorder %s16, 0
    %p147 = por %p145, %p146
    %p148 = scmp.ne.s32.totalorder %s134, %s135
    %p149 = scmp.eq.s32.totalorder %s17, 2
    %p150 = por %p148, %p149
    %p152 = scmp.ne.s32.totalorder %s135, %s151
    %p153 = scmp.eq.s32.totalorder %s17, 0
    %p154 = por %p152, %p153
    %p155 = scmp.le.s32.totalorder 1, %s11
    %p156 = scmp.lt.s32.totalorder %s11, 4
    %p157 = pnand %p155, %p156
    %p158 = pneg %p157
    // Predicated region
    $region9: #{pfn_forward.1} parent=5 // pred_check
      _
    $region10: #{pfn_forward.1} parent=5 // pred_check_branch
      %160 = sbr.rel (%p157) target = $region12
    $region11: #{pfn_forward.1} parent=5 // pred_region
      %s161 = ssub.s32 %s11, 1
      // Predicated region
      $region13: #{pfn_forward.1} parent=11 // pred_check
        %p162 = pneg %p58
      $region14: #{pfn_forward.1} parent=11 // pred_check_branch
        %164 = sbr.rel (%p162) target = $region16
      $region15: #{pfn_forward.1} parent=11 // pred_region
        _
      $region16: #{pfn_forward.1} parent=11 // pred_fallthru
        _
      // Predicated region
      $region17: #{pfn_forward.1} parent=11 // pred_check
        %p165 = pneg %p79
      $region18: #{pfn_forward.1} parent=11 // pred_check_branch
        %167 = sbr.rel (%p165) target = $region20
      $region19: #{pfn_forward.1} parent=11 // pred_region
        _
      $region20: #{pfn_forward.1} parent=11 // pred_fallthru
        _
      // Predicated region
      $region21: #{pfn_forward.1} parent=11 // pred_check
        %p168 = pneg %p100
      $region22: #{pfn_forward.1} parent=11 // pred_check_branch
        %170 = sbr.rel (%p168) target = $region24
      $region23: #{pfn_forward.1} parent=11 // pred_region
        _
      $region24: #{pfn_forward.1} parent=11 // pred_fallthru
        _
      // Predicated region
      $region25: #{pfn_forward.1} parent=11 // pred_check
        %p171 = pneg %p121
      $region26: #{pfn_forward.1} parent=11 // pred_check_branch
        %173 = sbr.rel (%p171) target = $region28
      $region27: #{pfn_forward.1} parent=11 // pred_region
        _
      $region28: #{pfn_forward.1} parent=11 // pred_fallthru
        _
    $region12: #{pfn_forward.1} parent=5 // pred_fallthru
      _
    %p174 = scmp.lt.s32.totalorder %s11, 3
    // Predicated region
    $region29: #{pfn_forward.1} parent=5 // pred_check
      %p175 = pneg %p174
    $region30: #{pfn_forward.1} parent=5 // pred_check_branch
      %177 = sbr.rel (%p175) target = $region32
    $region31: #{pfn_forward.1} parent=5 // pred_region
      // Predicated region
      $region33: #{pfn_forward.1} parent=31 // pred_check
        %p178 = pneg %p31
      $region34: #{pfn_forward.1} parent=31 // pred_check_branch
        %180 = sbr.rel (%p178) target = $region36
      $region35: #{pfn_forward.1} parent=31 // pred_region
        %s181 = smul.u32 16, %s11
        %p182 = scmp.lt.s32.totalorder %s181, 47
        %s183 = scalar_select %p182, %s181, 47
        %s184 = smul.addr %s183, 3
        %s185 = smul.addr %s184, 4
        %s186 = scalar_lea.vmem %s0, %s185
        %s187 = smul.u32 16, %s11
      $region36: #{pfn_forward.1} parent=31 // pred_fallthru
        _
    $region32: #{pfn_forward.1} parent=5 // pred_fallthru
      _
    %p188 = scmp.le.s32.totalorder 1, %s11
    %p189 = scmp.lt.s32.totalorder %s11, 4
    %p190 = pnand %p188, %p189
    %p191 = pneg %p190
    // Predicated region
    $region37: #{pfn_forward.1} parent=5 // pred_check
      _
    $region38: #{pfn_forward.1} parent=5 // pred_check_branch
      %193 = sbr.rel (%p190) target = $region40
    $region39: #{pfn_forward.1} parent=5 // pred_region
      %s194 = ssub.s32 %s11, 1
      %s195 = smul.u32 16, %s16
      %p196 = scmp.lt.s32.totalorder %s195, 47
      %s197 = scalar_select %p196, %s195, 47
      %s198 = smul.addr %s197, 3
      %s199 = smul.addr %s198, 4
      %s200 = scalar_lea.vmem %s0, %s199
      %p201 = pneg %p37
      %p202 = pneg %p34
      %p203 = pneg %p58
      %p204 = pneg %p55
      %p205 = pneg %p79
      %p206 = pneg %p76
      %p207 = pneg %p100
      %p208 = pneg %p97
      %p209 = pneg %p121
      %p210 = pneg %p118
      %p211 = pneg %p147
      %p212 = pneg %p144
      %s213 = smul.u32 16, %s16
      %p214 = scmp.lt.s32.totalorder %s213, 47
      %s215 = scalar_select %p214, %s213, 47
      %s216 = smul.addr %s215, 4
      %s217 = scalar_lea.vmem %s5, %s216
      %s218 = smul.u32 16, %s16
      %p219 = scmp.lt.s32.totalorder %s218, 47
      %s220 = scalar_select %p219, %s218, 47
      %s221 = smul.addr %s220, 3
      %s222 = smul.addr %s221, 4
      %s223 = scalar_lea.vmem %s0, %s222
      %s224 = smul.u32 16, %s16
      %s225 = smul.u32 16, %s16
      %p226 = scmp.lt.s32.totalorder %s225, 47
      %s227 = scalar_select %p226, %s225, 47
      %s228 = smul.addr %s227, 4
      %s229 = scalar_lea.vmem %s5, %s228
      %s230 = smul.u32 16, %s16
      %v232 = vld [vmem:[%s223] sm:$0xff]
      %v233 = vld [vmem:[%s223 + $0x8] sm:$0xf]
      %v234 = vld [vmem:[%s223 + $0xc] sm:$0xff]
      %v235 = vld [vmem:[%s223 + $0x14] sm:$0xf]
      %v236 = vld [vmem:[%s223 + $0x18] sm:$0xff]
      %v237 = vld [vmem:[%s223 + $0x20] sm:$0xf]
      %v238 = vld [vmem:[%s223 + $0x24] sm:$0xff]
      %v239 = vld [vmem:[%s223 + $0x2c] sm:$0xf]
      %v240 = vld [vmem:[%s223 + $0x30] sm:$0xff]
      %v241 = vld [vmem:[%s223 + $0x38] sm:$0xf]
      %v242 = vld [vmem:[%s223 + $0x3c] sm:$0xff]
      %v243 = vld [vmem:[%s223 + $0x44] sm:$0xf]
      %v244 = vld [vmem:[%s223 + $0x48] sm:$0xff]
      %v245 = vld [vmem:[%s223 + $0x50] sm:$0xf]
      %v246 = vld [vmem:[%s223 + $0x54] sm:$0xff]
      %v247 = vld [vmem:[%s223 + $0x5c] sm:$0xf]
      %v248 = vld [vmem:[%s223 + $0x60] sm:$0xff]
      %v249 = vld [vmem:[%s223 + $0x68] sm:$0xf]
      %v250 = vld [vmem:[%s223 + $0x6c] sm:$0xff]
      %v251 = vld [vmem:[%s223 + $0x74] sm:$0xf]
      %v252 = vld [vmem:[%s223 + $0x78] sm:$0xff]
      %v253 = vld [vmem:[%s223 + $0x80] sm:$0xf]
      %v254 = vld [vmem:[%s223 + $0x84] sm:$0xff]
      %v255 = vld [vmem:[%s223 + $0x8c] sm:$0xf]
      %v256 = vld [vmem:[%s223 + $0x90] sm:$0xff]
      %v257 = vld [vmem:[%s223 + $0x98] sm:$0xf]
      %v258 = vld [vmem:[%s223 + $0x9c] sm:$0xff]
      %v259 = vld [vmem:[%s223 + $0xa4] sm:$0xf]
      %v260 = vld [vmem:[%s223 + $0xa8] sm:$0xff]
      %v261 = vld [vmem:[%s223 + $0xb0] sm:$0xf]
      %v262 = vld [vmem:[%s223 + $0xb4] sm:$0xff]
      %v263 = vld [vmem:[%s223 + $0xbc] sm:$0xf]
      %v264 = vld [vmem:[%s1] sm:$0xff]
      %v265 = vld [vmem:[%s1 + $0x8] sm:$0xff]
      %v266 = vld [vmem:[%s1 + $0x10] sm:$0xff]
      %v267 = vld [vmem:[%s1 + $0x18] sm:$0xff]
      %v268 = vld [vmem:[%s1 + $0x20] sm:$0xff]
      %v269 = vld [vmem:[%s1 + $0x28] sm:$0xff]
      %v270 = vld [vmem:[%s1 + $0x30] sm:$0xff]
      %v271 = vld [vmem:[%s1 + $0x38] sm:$0xff]
      %v272 = vld [vmem:[%s1 + $0x40] sm:$0xf]
      %v273 = vld [vmem:[%s1 + $0x44] sm:$0xff]
      %v274 = vld [vmem:[%s1 + $0x4c] sm:$0xff]
      %v275 = vld [vmem:[%s1 + $0x54] sm:$0xff]
      %v276 = vld [vmem:[%s1 + $0x5c] sm:$0xff]
      %v277 = vld [vmem:[%s1 + $0x64] sm:$0xff]
      %v278 = vld [vmem:[%s1 + $0x6c] sm:$0xff]
      %v279 = vld [vmem:[%s1 + $0x74] sm:$0xff]
      %v280 = vld [vmem:[%s1 + $0x7c] sm:$0xff]
      %v281 = vld [vmem:[%s1 + $0x84] sm:$0xf]
      %v282 = vld [vmem:[%s1 + $0x88] sm:$0xff]
      %v283 = vld [vmem:[%s1 + $0x90] sm:$0xff]
      %v284 = vld [vmem:[%s1 + $0x98] sm:$0xff]
      %v285 = vld [vmem:[%s1 + $0xa0] sm:$0xff]
      %v286 = vld [vmem:[%s1 + $0xa8] sm:$0xff]
      %v287 = vld [vmem:[%s1 + $0xb0] sm:$0xff]
      %v288 = vld [vmem:[%s1 + $0xb8] sm:$0xff]
      %v289 = vld [vmem:[%s1 + $0xc0] sm:$0xff]
      %v290 = vld [vmem:[%s1 + $0xc8] sm:$0xf]
      %v291 = vld [vmem:[%s1 + $0xcc] sm:$0xff]
      %v292 = vld [vmem:[%s1 + $0xd4] sm:$0xff]
      %v293 = vld [vmem:[%s1 + $0xdc] sm:$0xff]
      %v294 = vld [vmem:[%s1 + $0xe4] sm:$0xff]
      %v295 = vld [vmem:[%s1 + $0xec] sm:$0xff]
      %v296 = vld [vmem:[%s1 + $0xf4] sm:$0xff]
      %v297 = vld [vmem:[%s1 + $0xfc] sm:$0xff]
      %v298 = vld [vmem:[%s1 + $0x104] sm:$0xff]
      %v299 = vld [vmem:[%s1 + $0x10c] sm:$0xf]
      %v300 = vld [vmem:[%s1 + $0x110] sm:$0xff]
      %v301 = vld [vmem:[%s1 + $0x118] sm:$0xff]
      %v302 = vld [vmem:[%s1 + $0x120] sm:$0xff]
      %v303 = vld [vmem:[%s1 + $0x128] sm:$0xff]
      %v304 = vld [vmem:[%s1 + $0x130] sm:$0xff]
      %v305 = vld [vmem:[%s1 + $0x138] sm:$0xff]
      %v306 = vld [vmem:[%s1 + $0x140] sm:$0xff]
      %v307 = vld [vmem:[%s1 + $0x148] sm:$0xff]
      %v308 = vld [vmem:[%s1 + $0x150] sm:$0xf]
      %v309 = vld [vmem:[%s1 + $0x154] sm:$0xff]
      %v310 = vld [vmem:[%s1 + $0x15c] sm:$0xff]
      %v311 = vld [vmem:[%s1 + $0x164] sm:$0xff]
      %v312 = vld [vmem:[%s1 + $0x16c] sm:$0xff]
      %v313 = vld [vmem:[%s1 + $0x174] sm:$0xff]
      %v314 = vld [vmem:[%s1 + $0x17c] sm:$0xff]
      %v315 = vld [vmem:[%s1 + $0x184] sm:$0xff]
      %v316 = vld [vmem:[%s1 + $0x18c] sm:$0xff]
      %v317 = vld [vmem:[%s1 + $0x194] sm:$0xf]
      %v318 = vld [vmem:[%s1 + $0x198] sm:$0xff]
      %v319 = vld [vmem:[%s1 + $0x1a0] sm:$0xff]
      %v320 = vld [vmem:[%s1 + $0x1a8] sm:$0xff]
      %v321 = vld [vmem:[%s1 + $0x1b0] sm:$0xff]
      %v322 = vld [vmem:[%s1 + $0x1b8] sm:$0xff]
      %v323 = vld [vmem:[%s1 + $0x1c0] sm:$0xff]
      %v324 = vld [vmem:[%s1 + $0x1c8] sm:$0xff]
      %v325 = vld [vmem:[%s1 + $0x1d0] sm:$0xff]
      %v326 = vld [vmem:[%s1 + $0x1d8] sm:$0xf]
      %v327 = vld [vmem:[%s1 + $0x1dc] sm:$0xff]
      %v328 = vld [vmem:[%s1 + $0x1e4] sm:$0xff]
      %v329 = vld [vmem:[%s1 + $0x1ec] sm:$0xff]
      %v330 = vld [vmem:[%s1 + $0x1f4] sm:$0xff]
      %v331 = vld [vmem:[%s1 + $0x1fc] sm:$0xff]
      %v332 = vld [vmem:[%s1 + $0x204] sm:$0xff]
      %v333 = vld [vmem:[%s1 + $0x20c] sm:$0xff]
      %v334 = vld [vmem:[%s1 + $0x214] sm:$0xff]
      %v335 = vld [vmem:[%s1 + $0x21c] sm:$0xf]
      %v336 = vld [vmem:[%s1 + $0x220] sm:$0xff]
      %v337 = vld [vmem:[%s1 + $0x228] sm:$0xff]
      %v338 = vld [vmem:[%s1 + $0x230] sm:$0xff]
      %v339 = vld [vmem:[%s1 + $0x238] sm:$0xff]
      %v340 = vld [vmem:[%s1 + $0x240] sm:$0xff]
      %v341 = vld [vmem:[%s1 + $0x248] sm:$0xff]
      %v342 = vld [vmem:[%s1 + $0x250] sm:$0xff]
      %v343 = vld [vmem:[%s1 + $0x258] sm:$0xff]
      %v344 = vld [vmem:[%s1 + $0x260] sm:$0xf]
      %v345 = vld [vmem:[%s1 + $0x264] sm:$0xff]
      %v346 = vld [vmem:[%s1 + $0x26c] sm:$0xff]
      %v347 = vld [vmem:[%s1 + $0x274] sm:$0xff]
      %v348 = vld [vmem:[%s1 + $0x27c] sm:$0xff]
      %v349 = vld [vmem:[%s1 + $0x284] sm:$0xff]
      %v350 = vld [vmem:[%s1 + $0x28c] sm:$0xff]
      %v351 = vld [vmem:[%s1 + $0x294] sm:$0xff]
      %v352 = vld [vmem:[%s1 + $0x29c] sm:$0xff]
      %v353 = vld [vmem:[%s1 + $0x2a4] sm:$0xf]
      %v354 = vld [vmem:[%s1 + $0x2a8] sm:$0xff]
      %v355 = vld [vmem:[%s1 + $0x2b0] sm:$0xff]
      %v356 = vld [vmem:[%s1 + $0x2b8] sm:$0xff]
      %v357 = vld [vmem:[%s1 + $0x2c0] sm:$0xff]
      %v358 = vld [vmem:[%s1 + $0x2c8] sm:$0xff]
      %v359 = vld [vmem:[%s1 + $0x2d0] sm:$0xff]
      %v360 = vld [vmem:[%s1 + $0x2d8] sm:$0xff]
      %v361 = vld [vmem:[%s1 + $0x2e0] sm:$0xff]
      %v362 = vld [vmem:[%s1 + $0x2e8] sm:$0xf]
      %v363 = vld [vmem:[%s1 + $0x2ec] sm:$0xff]
      %v364 = vld [vmem:[%s1 + $0x2f4] sm:$0xff]
      %v365 = vld [vmem:[%s1 + $0x2fc] sm:$0xff]
      %v366 = vld [vmem:[%s1 + $0x304] sm:$0xff]
      %v367 = vld [vmem:[%s1 + $0x30c] sm:$0xff]
      %v368 = vld [vmem:[%s1 + $0x314] sm:$0xff]
      %v369 = vld [vmem:[%s1 + $0x31c] sm:$0xff]
      %v370 = vld [vmem:[%s1 + $0x324] sm:$0xff]
      %v371 = vld [vmem:[%s1 + $0x32c] sm:$0xf]
      %v372 = vld [vmem:[%s1 + $0x330] sm:$0xff]
      %v373 = vld [vmem:[%s1 + $0x338] sm:$0xff]
      %v374 = vld [vmem:[%s1 + $0x340] sm:$0xff]
      %v375 = vld [vmem:[%s1 + $0x348] sm:$0xff]
      %v376 = vld [vmem:[%s1 + $0x350] sm:$0xff]
      %v377 = vld [vmem:[%s1 + $0x358] sm:$0xff]
      %v378 = vld [vmem:[%s1 + $0x360] sm:$0xff]
      %v379 = vld [vmem:[%s1 + $0x368] sm:$0xff]
      %v380 = vld [vmem:[%s1 + $0x370] sm:$0xf]
      %v381 = vld [vmem:[%s1 + $0x374] sm:$0xff]
      %v382 = vld [vmem:[%s1 + $0x37c] sm:$0xff]
      %v383 = vld [vmem:[%s1 + $0x384] sm:$0xff]
      %v384 = vld [vmem:[%s1 + $0x38c] sm:$0xff]
      %v385 = vld [vmem:[%s1 + $0x394] sm:$0xff]
      %v386 = vld [vmem:[%s1 + $0x39c] sm:$0xff]
      %v387 = vld [vmem:[%s1 + $0x3a4] sm:$0xff]
      %v388 = vld [vmem:[%s1 + $0x3ac] sm:$0xff]
      %v389 = vld [vmem:[%s1 + $0x3b4] sm:$0xf]
      %v390 = vld [vmem:[%s1 + $0x3b8] sm:$0xff]
      %v391 = vld [vmem:[%s1 + $0x3c0] sm:$0xff]
      %v392 = vld [vmem:[%s1 + $0x3c8] sm:$0xff]
      %v393 = vld [vmem:[%s1 + $0x3d0] sm:$0xff]
      %v394 = vld [vmem:[%s1 + $0x3d8] sm:$0xff]
      %v395 = vld [vmem:[%s1 + $0x3e0] sm:$0xff]
      %v396 = vld [vmem:[%s1 + $0x3e8] sm:$0xff]
      %v397 = vld [vmem:[%s1 + $0x3f0] sm:$0xff]
      %v398 = vld [vmem:[%s1 + $0x3f8] sm:$0xf]
      %v399 = vld [vmem:[%s1 + $0x3fc] sm:$0xff]
      %v400 = vld [vmem:[%s1 + $0x404] sm:$0xff]
      %v401 = vld [vmem:[%s1 + $0x40c] sm:$0xff]
      %v402 = vld [vmem:[%s1 + $0x414] sm:$0xff]
      %v403 = vld [vmem:[%s1 + $0x41c] sm:$0xff]
      %v404 = vld [vmem:[%s1 + $0x424] sm:$0xff]
      %v405 = vld [vmem:[%s1 + $0x42c] sm:$0xff]
      %v406 = vld [vmem:[%s1 + $0x434] sm:$0xff]
      %v407 = vld [vmem:[%s1 + $0x43c] sm:$0xf]
      %v408 = vld [vmem:[%s1 + $0x440] sm:$0xff]
      %v409 = vld [vmem:[%s1 + $0x448] sm:$0xff]
      %v410 = vld [vmem:[%s1 + $0x450] sm:$0xff]
      %v411 = vld [vmem:[%s1 + $0x458] sm:$0xff]
      %v412 = vld [vmem:[%s1 + $0x460] sm:$0xff]
      %v413 = vld [vmem:[%s1 + $0x468] sm:$0xff]
      %v414 = vld [vmem:[%s1 + $0x470] sm:$0xff]
      %v415 = vld [vmem:[%s1 + $0x478] sm:$0xff]
      %v416 = vld [vmem:[%s1 + $0x480] sm:$0xf]
      %v417 = vld [vmem:[%s1 + $0x484] sm:$0xff]
      %v418 = vld [vmem:[%s1 + $0x48c] sm:$0xff]
      %v419 = vld [vmem:[%s1 + $0x494] sm:$0xff]
      %v420 = vld [vmem:[%s1 + $0x49c] sm:$0xff]
      %v421 = vld [vmem:[%s1 + $0x4a4] sm:$0xff]
      %v422 = vld [vmem:[%s1 + $0x4ac] sm:$0xff]
      %v423 = vld [vmem:[%s1 + $0x4b4] sm:$0xff]
      %v424 = vld [vmem:[%s1 + $0x4bc] sm:$0xff]
      %v425 = vld [vmem:[%s1 + $0x4c4] sm:$0xf]
      %v426 = vld [vmem:[%s1 + $0x4c8] sm:$0xff]
      %v427 = vld [vmem:[%s1 + $0x4d0] sm:$0xff]
      %v428 = vld [vmem:[%s1 + $0x4d8] sm:$0xff]
      %v429 = vld [vmem:[%s1 + $0x4e0] sm:$0xff]
      %v430 = vld [vmem:[%s1 + $0x4e8] sm:$0xff]
      %v431 = vld [vmem:[%s1 + $0x4f0] sm:$0xff]
      %v432 = vld [vmem:[%s1 + $0x4f8] sm:$0xff]
      %v433 = vld [vmem:[%s1 + $0x500] sm:$0xff]
      %v434 = vld [vmem:[%s1 + $0x508] sm:$0xf]
      %v435 = vld [vmem:[%s1 + $0x50c] sm:$0xff]
      %v436 = vld [vmem:[%s1 + $0x514] sm:$0xff]
      %v437 = vld [vmem:[%s1 + $0x51c] sm:$0xff]
      %v438 = vld [vmem:[%s1 + $0x524] sm:$0xff]
      %v439 = vld [vmem:[%s1 + $0x52c] sm:$0xff]
      %v440 = vld [vmem:[%s1 + $0x534] sm:$0xff]
      %v441 = vld [vmem:[%s1 + $0x53c] sm:$0xff]
      %v442 = vld [vmem:[%s1 + $0x544] sm:$0xff]
      %v443 = vld [vmem:[%s1 + $0x54c] sm:$0xf]
      %v444 = vld [vmem:[%s1 + $0x550] sm:$0xff]
      %v445 = vld [vmem:[%s1 + $0x558] sm:$0xff]
      %v446 = vld [vmem:[%s1 + $0x560] sm:$0xff]
      %v447 = vld [vmem:[%s1 + $0x568] sm:$0xff]
      %v448 = vld [vmem:[%s1 + $0x570] sm:$0xff]
      %v449 = vld [vmem:[%s1 + $0x578] sm:$0xff]
      %v450 = vld [vmem:[%s1 + $0x580] sm:$0xff]
      %v451 = vld [vmem:[%s1 + $0x588] sm:$0xff]
      %v452 = vld [vmem:[%s1 + $0x590] sm:$0xf]
      %v453 = vld [vmem:[%s1 + $0x594] sm:$0xff]
      %v454 = vld [vmem:[%s1 + $0x59c] sm:$0xff]
      %v455 = vld [vmem:[%s1 + $0x5a4] sm:$0xff]
      %v456 = vld [vmem:[%s1 + $0x5ac] sm:$0xff]
      %v457 = vld [vmem:[%s1 + $0x5b4] sm:$0xff]
      %v458 = vld [vmem:[%s1 + $0x5bc] sm:$0xff]
      %v459 = vld [vmem:[%s1 + $0x5c4] sm:$0xff]
      %v460 = vld [vmem:[%s1 + $0x5cc] sm:$0xff]
      %v461 = vld [vmem:[%s1 + $0x5d4] sm:$0xf]
      %v462 = vld [vmem:[%s1 + $0x5d8] sm:$0xff]
      %v463 = vld [vmem:[%s1 + $0x5e0] sm:$0xff]
      %v464 = vld [vmem:[%s1 + $0x5e8] sm:$0xff]
      %v465 = vld [vmem:[%s1 + $0x5f0] sm:$0xff]
      %v466 = vld [vmem:[%s1 + $0x5f8] sm:$0xff]
      %v467 = vld [vmem:[%s1 + $0x600] sm:$0xff]
      %v468 = vld [vmem:[%s1 + $0x608] sm:$0xff]
      %v469 = vld [vmem:[%s1 + $0x610] sm:$0xff]
      %v470 = vld [vmem:[%s1 + $0x618] sm:$0xf]
      %v471 = vld [vmem:[%s1 + $0x61c] sm:$0xff]
      %v472 = vld [vmem:[%s1 + $0x624] sm:$0xff]
      %v473 = vld [vmem:[%s1 + $0x62c] sm:$0xff]
      %v474 = vld [vmem:[%s1 + $0x634] sm:$0xff]
      %v475 = vld [vmem:[%s1 + $0x63c] sm:$0xff]
      %v476 = vld [vmem:[%s1 + $0x644] sm:$0xff]
      %v477 = vld [vmem:[%s1 + $0x64c] sm:$0xff]
      %v478 = vld [vmem:[%s1 + $0x654] sm:$0xff]
      %v479 = vld [vmem:[%s1 + $0x65c] sm:$0xf]
      %v480 = vld [vmem:[%s1 + $0x660] sm:$0xff]
      %v481 = vld [vmem:[%s1 + $0x668] sm:$0xff]
      %v482 = vld [vmem:[%s1 + $0x670] sm:$0xff]
      %v483 = vld [vmem:[%s1 + $0x678] sm:$0xff]
      %v484 = vld [vmem:[%s1 + $0x680] sm:$0xff]
      %v485 = vld [vmem:[%s1 + $0x688] sm:$0xff]
      %v486 = vld [vmem:[%s1 + $0x690] sm:$0xff]
      %v487 = vld [vmem:[%s1 + $0x698] sm:$0xff]
      %v488 = vld [vmem:[%s1 + $0x6a0] sm:$0xf]
      %v489 = vld [vmem:[%s1 + $0x6a4] sm:$0xff]
      %v490 = vld [vmem:[%s1 + $0x6ac] sm:$0xff]
      %v491 = vld [vmem:[%s1 + $0x6b4] sm:$0xff]
      %v492 = vld [vmem:[%s1 + $0x6bc] sm:$0xff]
      %v493 = vld [vmem:[%s1 + $0x6c4] sm:$0xff]
      %v494 = vld [vmem:[%s1 + $0x6cc] sm:$0xff]
      %v495 = vld [vmem:[%s1 + $0x6d4] sm:$0xff]
      %v496 = vld [vmem:[%s1 + $0x6dc] sm:$0xff]
      %v497 = vld [vmem:[%s1 + $0x6e4] sm:$0xf]
      %v498 = vld [vmem:[%s1 + $0x6e8] sm:$0xff]
      %v499 = vld [vmem:[%s1 + $0x6f0] sm:$0xff]
      %v500 = vld [vmem:[%s1 + $0x6f8] sm:$0xff]
      %v501 = vld [vmem:[%s1 + $0x700] sm:$0xff]
      %v502 = vld [vmem:[%s1 + $0x708] sm:$0xff]
      %v503 = vld [vmem:[%s1 + $0x710] sm:$0xff]
      %v504 = vld [vmem:[%s1 + $0x718] sm:$0xff]
      %v505 = vld [vmem:[%s1 + $0x720] sm:$0xff]
      %v506 = vld [vmem:[%s1 + $0x728] sm:$0xf]
      %v507 = vld [vmem:[%s1 + $0x72c] sm:$0xff]
      %v508 = vld [vmem:[%s1 + $0x734] sm:$0xff]
      %v509 = vld [vmem:[%s1 + $0x73c] sm:$0xff]
      %v510 = vld [vmem:[%s1 + $0x744] sm:$0xff]
      %v511 = vld [vmem:[%s1 + $0x74c] sm:$0xff]
      %v512 = vld [vmem:[%s1 + $0x754] sm:$0xff]
      %v513 = vld [vmem:[%s1 + $0x75c] sm:$0xff]
      %v514 = vld [vmem:[%s1 + $0x764] sm:$0xff]
      %v515 = vld [vmem:[%s1 + $0x76c] sm:$0xf]
      %v516 = vld [vmem:[%s1 + $0x770] sm:$0xff]
      %v517 = vld [vmem:[%s1 + $0x778] sm:$0xff]
      %v518 = vld [vmem:[%s1 + $0x780] sm:$0xff]
      %v519 = vld [vmem:[%s1 + $0x788] sm:$0xff]
      %v520 = vld [vmem:[%s1 + $0x790] sm:$0xff]
      %v521 = vld [vmem:[%s1 + $0x798] sm:$0xff]
      %v522 = vld [vmem:[%s1 + $0x7a0] sm:$0xff]
      %v523 = vld [vmem:[%s1 + $0x7a8] sm:$0xff]
      %v524 = vld [vmem:[%s1 + $0x7b0] sm:$0xf]
      %v525 = vld [vmem:[%s1 + $0x7b4] sm:$0xff]
      %v526 = vld [vmem:[%s1 + $0x7bc] sm:$0xff]
      %v527 = vld [vmem:[%s1 + $0x7c4] sm:$0xff]
      %v528 = vld [vmem:[%s1 + $0x7cc] sm:$0xff]
      %v529 = vld [vmem:[%s1 + $0x7d4] sm:$0xff]
      %v530 = vld [vmem:[%s1 + $0x7dc] sm:$0xff]
      %v531 = vld [vmem:[%s1 + $0x7e4] sm:$0xff]
      %v532 = vld [vmem:[%s1 + $0x7ec] sm:$0xff]
      %v533 = vld [vmem:[%s1 + $0x7f4] sm:$0xf]
      %v534 = vld [vmem:[%s1 + $0x7f8] sm:$0xff]
      %v535 = vld [vmem:[%s1 + $0x800] sm:$0xff]
      %v536 = vld [vmem:[%s1 + $0x808] sm:$0xff]
      %v537 = vld [vmem:[%s1 + $0x810] sm:$0xff]
      %v538 = vld [vmem:[%s1 + $0x818] sm:$0xff]
      %v539 = vld [vmem:[%s1 + $0x820] sm:$0xff]
      %v540 = vld [vmem:[%s1 + $0x828] sm:$0xff]
      %v541 = vld [vmem:[%s1 + $0x830] sm:$0xff]
      %v542 = vld [vmem:[%s1 + $0x838] sm:$0xf]
      %v543 = vld [vmem:[%s1 + $0x83c] sm:$0xff]
      %v544 = vld [vmem:[%s1 + $0x844] sm:$0xff]
      %v545 = vld [vmem:[%s1 + $0x84c] sm:$0xff]
      %v546 = vld [vmem:[%s1 + $0x854] sm:$0xff]
      %v547 = vld [vmem:[%s1 + $0x85c] sm:$0xff]
      %v548 = vld [vmem:[%s1 + $0x864] sm:$0xff]
      %v549 = vld [vmem:[%s1 + $0x86c] sm:$0xff]
      %v550 = vld [vmem:[%s1 + $0x874] sm:$0xff]
      %v551 = vld [vmem:[%s1 + $0x87c] sm:$0xf]
      %v552 = vld [vmem:[%s1 + $0x880] sm:$0xff]
      %v553 = vld [vmem:[%s1 + $0x888] sm:$0xff]
      %v554 = vld [vmem:[%s1 + $0x890] sm:$0xff]
      %v555 = vld [vmem:[%s1 + $0x898] sm:$0xff]
      %v556 = vld [vmem:[%s1 + $0x8a0] sm:$0xff]
      %v557 = vld [vmem:[%s1 + $0x8a8] sm:$0xff]
      %v558 = vld [vmem:[%s1 + $0x8b0] sm:$0xff]
      %v559 = vld [vmem:[%s1 + $0x8b8] sm:$0xff]
      %v560 = vld [vmem:[%s1 + $0x8c0] sm:$0xf]
      %v561 = vld [vmem:[%s1 + $0x8c4] sm:$0xff]
      %v562 = vld [vmem:[%s1 + $0x8cc] sm:$0xff]
      %v563 = vld [vmem:[%s1 + $0x8d4] sm:$0xff]
      %v564 = vld [vmem:[%s1 + $0x8dc] sm:$0xff]
      %v565 = vld [vmem:[%s1 + $0x8e4] sm:$0xff]
      %v566 = vld [vmem:[%s1 + $0x8ec] sm:$0xff]
      %v567 = vld [vmem:[%s1 + $0x8f4] sm:$0xff]
      %v568 = vld [vmem:[%s1 + $0x8fc] sm:$0xff]
      %v569 = vld [vmem:[%s1 + $0x904] sm:$0xf]
      %v570 = vld [vmem:[%s1 + $0x908] sm:$0xff]
      %v571 = vld [vmem:[%s1 + $0x910] sm:$0xff]
      %v572 = vld [vmem:[%s1 + $0x918] sm:$0xff]
      %v573 = vld [vmem:[%s1 + $0x920] sm:$0xff]
      %v574 = vld [vmem:[%s1 + $0x928] sm:$0xff]
      %v575 = vld [vmem:[%s1 + $0x930] sm:$0xff]
      %v576 = vld [vmem:[%s1 + $0x938] sm:$0xff]
      %v577 = vld [vmem:[%s1 + $0x940] sm:$0xff]
      %v578 = vld [vmem:[%s1 + $0x948] sm:$0xf]
      %v579 = vld [vmem:[%s1 + $0x94c] sm:$0xff]
      %v580 = vld [vmem:[%s1 + $0x954] sm:$0xff]
      %v581 = vld [vmem:[%s1 + $0x95c] sm:$0xff]
      %v582 = vld [vmem:[%s1 + $0x964] sm:$0xff]
      %v583 = vld [vmem:[%s1 + $0x96c] sm:$0xff]
      %v584 = vld [vmem:[%s1 + $0x974] sm:$0xff]
      %v585 = vld [vmem:[%s1 + $0x97c] sm:$0xff]
      %v586 = vld [vmem:[%s1 + $0x984] sm:$0xff]
      %v587 = vld [vmem:[%s1 + $0x98c] sm:$0xf]
      %v588 = vld [vmem:[%s1 + $0x990] sm:$0xff]
      %v589 = vld [vmem:[%s1 + $0x998] sm:$0xff]
      %v590 = vld [vmem:[%s1 + $0x9a0] sm:$0xff]
      %v591 = vld [vmem:[%s1 + $0x9a8] sm:$0xff]
      %v592 = vld [vmem:[%s1 + $0x9b0] sm:$0xff]
      %v593 = vld [vmem:[%s1 + $0x9b8] sm:$0xff]
      %v594 = vld [vmem:[%s1 + $0x9c0] sm:$0xff]
      %v595 = vld [vmem:[%s1 + $0x9c8] sm:$0xff]
      %v596 = vld [vmem:[%s1 + $0x9d0] sm:$0xf]
      %v597 = vld [vmem:[%s1 + $0x9d4] sm:$0xff]
      %v598 = vld [vmem:[%s1 + $0x9dc] sm:$0xff]
      %v599 = vld [vmem:[%s1 + $0x9e4] sm:$0xff]
      %v600 = vld [vmem:[%s1 + $0x9ec] sm:$0xff]
      %v601 = vld [vmem:[%s1 + $0x9f4] sm:$0xff]
      %v602 = vld [vmem:[%s1 + $0x9fc] sm:$0xff]
      %v603 = vld [vmem:[%s1 + $0xa04] sm:$0xff]
      %v604 = vld [vmem:[%s1 + $0xa0c] sm:$0xff]
      %v605 = vld [vmem:[%s1 + $0xa14] sm:$0xf]
      %v606 = vld [vmem:[%s1 + $0xa18] sm:$0x11]
      %v607 = vld [vmem:[%s1 + $0xa20] sm:$0x11]
      %v608 = vld [vmem:[%s1 + $0xa28] sm:$0x11]
      %v609 = vld [vmem:[%s1 + $0xa30] sm:$0x11]
      %v610 = vld [vmem:[%s1 + $0xa38] sm:$0x11]
      %v611 = vld [vmem:[%s1 + $0xa40] sm:$0x11]
      %v612 = vld [vmem:[%s1 + $0xa48] sm:$0x11]
      %v613 = vld [vmem:[%s1 + $0xa50] sm:$0x11]
      %v614 = vld [vmem:[%s1 + $0xa58] sm:$0x1]
      %v615 = vld [vmem:[%s2] sm:$0xff]
      %v616 = vld [vmem:[%s2 + $0x8] sm:$0xff]
      %v617 = vld [vmem:[%s2 + $0x10] sm:$0x1]
      %v621 = vperm.slane %v615, 0
      %v622 = vperm.slane %v615, 1
      %v623 = vperm.slane %v615, 2
      %v624 = vperm.slane %v615, 3
      %v625 = vperm.slane %v615, 4
      %v626 = vperm.slane %v615, 5
      %v627 = vperm.slane %v615, 6
      %v628 = vperm.slane %v615, 7
      %v629 = vperm.slane %v616, 0
      %v630 = vperm.slane %v616, 1
      %v631 = vperm.slane %v616, 2
      %v632 = vperm.slane %v616, 3
      %v633 = vperm.slane %v616, 4
      %v634 = vperm.slane %v616, 5
      %v635 = vperm.slane %v616, 6
      %v636 = vperm.slane %v616, 7
      %v637 = vperm.slane %v617, 0
      %v687 = vunpack.c.l.b16 %v232
      %v688 = vunpack.c.h.b16 %v232
      %v689 = vunpack.c.l.b16 %v233
      %v690 = vunpack.c.l.b16 %v234
      %v691 = vunpack.c.h.b16 %v234
      %v692 = vunpack.c.l.b16 %v235
      %v693 = vunpack.c.l.b16 %v236
      %v694 = vunpack.c.h.b16 %v236
      %v695 = vunpack.c.l.b16 %v237
      %v696 = vunpack.c.l.b16 %v238
      %v697 = vunpack.c.h.b16 %v238
      %v698 = vunpack.c.l.b16 %v239
      %v699 = vunpack.c.l.b16 %v240
      %v700 = vunpack.c.h.b16 %v240
      %v701 = vunpack.c.l.b16 %v241
      %v702 = vunpack.c.l.b16 %v242
      %v703 = vunpack.c.h.b16 %v242
      %v704 = vunpack.c.l.b16 %v243
      %v705 = vunpack.c.l.b16 %v244
      %v706 = vunpack.c.h.b16 %v244
      %v707 = vunpack.c.l.b16 %v245
      %v708 = vunpack.c.l.b16 %v246
      %v709 = vunpack.c.h.b16 %v246
      %v710 = vunpack.c.l.b16 %v247
      %v711 = vunpack.c.l.b16 %v248
      %v712 = vunpack.c.h.b16 %v248
      %v713 = vunpack.c.l.b16 %v249
      %v714 = vunpack.c.l.b16 %v250
      %v715 = vunpack.c.h.b16 %v250
      %v716 = vunpack.c.l.b16 %v251
      %v717 = vunpack.c.l.b16 %v252
      %v718 = vunpack.c.h.b16 %v252
      %v719 = vunpack.c.l.b16 %v253
      %v720 = vunpack.c.l.b16 %v254
      %v721 = vunpack.c.h.b16 %v254
      %v722 = vunpack.c.l.b16 %v255
      %v723 = vunpack.c.l.b16 %v256
      %v724 = vunpack.c.h.b16 %v256
      %v725 = vunpack.c.l.b16 %v257
      %v726 = vunpack.c.l.b16 %v258
      %v727 = vunpack.c.h.b16 %v258
      %v728 = vunpack.c.l.b16 %v259
      %v729 = vunpack.c.l.b16 %v260
      %v730 = vunpack.c.h.b16 %v260
      %v731 = vunpack.c.l.b16 %v261
      %v732 = vunpack.c.l.b16 %v262
      %v733 = vunpack.c.h.b16 %v262
      %v734 = vunpack.c.l.b16 %v263
      %v735 = vpack.c.b16 %v690, %v687
      %v736 = vpack.c.b16 %v691, %v688
      %v737 = vpack.c.b16 %v692, %v689
      %v738 = vpack.c.b16 %v696, %v693
      %v739 = vpack.c.b16 %v697, %v694
      %v740 = vpack.c.b16 %v698, %v695
      %v741 = vpack.c.b16 %v702, %v699
      %v742 = vpack.c.b16 %v703, %v700
      %v743 = vpack.c.b16 %v704, %v701
      %v744 = vpack.c.b16 %v708, %v705
      %v745 = vpack.c.b16 %v709, %v706
      %v746 = vpack.c.b16 %v710, %v707
      %v747 = vpack.c.b16 %v714, %v711
      %v748 = vpack.c.b16 %v715, %v712
      %v749 = vpack.c.b16 %v716, %v713
      %v750 = vpack.c.b16 %v720, %v717
      %v751 = vpack.c.b16 %v721, %v718
      %v752 = vpack.c.b16 %v722, %v719
      %v753 = vpack.c.b16 %v726, %v723
      %v754 = vpack.c.b16 %v727, %v724
      %v755 = vpack.c.b16 %v728, %v725
      %v756 = vpack.c.b16 %v732, %v729
      %v757 = vpack.c.b16 %v733, %v730
      %v758 = vpack.c.b16 %v734, %v731
      %v1126 = vunpack.c.l.b16 %v264
      %v1127 = vunpack.c.h.b16 %v264
      %v1128 = vunpack.c.l.b16 %v265
      %v1129 = vunpack.c.h.b16 %v265
      %v1130 = vunpack.c.l.b16 %v266
      %v1131 = vunpack.c.h.b16 %v266
      %v1132 = vunpack.c.l.b16 %v267
      %v1133 = vunpack.c.h.b16 %v267
      %v1134 = vunpack.c.l.b16 %v268
      %v1135 = vunpack.c.h.b16 %v268
      %v1136 = vunpack.c.l.b16 %v269
      %v1137 = vunpack.c.h.b16 %v269
      %v1138 = vunpack.c.l.b16 %v270
      %v1139 = vunpack.c.h.b16 %v270
      %v1140 = vunpack.c.l.b16 %v271
      %v1141 = vunpack.c.h.b16 %v271
      %v1142 = vunpack.c.l.b16 %v272
      %v1143 = vunpack.c.l.b16 %v273
      %v1144 = vunpack.c.h.b16 %v273
      %v1145 = vunpack.c.l.b16 %v274
      %v1146 = vunpack.c.h.b16 %v274
      %v1147 = vunpack.c.l.b16 %v275
      %v1148 = vunpack.c.h.b16 %v275
      %v1149 = vunpack.c.l.b16 %v276
      %v1150 = vunpack.c.h.b16 %v276
      %v1151 = vunpack.c.l.b16 %v277
      %v1152 = vunpack.c.h.b16 %v277
      %v1153 = vunpack.c.l.b16 %v278
      %v1154 = vunpack.c.h.b16 %v278
      %v1155 = vunpack.c.l.b16 %v279
      %v1156 = vunpack.c.h.b16 %v279
      %v1157 = vunpack.c.l.b16 %v280
      %v1158 = vunpack.c.h.b16 %v280
      %v1159 = vunpack.c.l.b16 %v281
      %v1160 = vunpack.c.l.b16 %v282
      %v1161 = vunpack.c.h.b16 %v282
      %v1162 = vunpack.c.l.b16 %v283
      %v1163 = vunpack.c.h.b16 %v283
      %v1164 = vunpack.c.l.b16 %v284
      %v1165 = vunpack.c.h.b16 %v284
      %v1166 = vunpack.c.l.b16 %v285
      %v1167 = vunpack.c.h.b16 %v285
      %v1168 = vunpack.c.l.b16 %v286
      %v1169 = vunpack.c.h.b16 %v286
      %v1170 = vunpack.c.l.b16 %v287
      %v1171 = vunpack.c.h.b16 %v287
      %v1172 = vunpack.c.l.b16 %v288
      %v1173 = vunpack.c.h.b16 %v288
      %v1174 = vunpack.c.l.b16 %v289
      %v1175 = vunpack.c.h.b16 %v289
      %v1176 = vunpack.c.l.b16 %v290
      %v1177 = vunpack.c.l.b16 %v291
      %v1178 = vunpack.c.h.b16 %v291
      %v1179 = vunpack.c.l.b16 %v292
      %v1180 = vunpack.c.h.b16 %v292
      %v1181 = vunpack.c.l.b16 %v293
      %v1182 = vunpack.c.h.b16 %v293
      %v1183 = vunpack.c.l.b16 %v294
      %v1184 = vunpack.c.h.b16 %v294
      %v1185 = vunpack.c.l.b16 %v295
      %v1186 = vunpack.c.h.b16 %v295
      %v1187 = vunpack.c.l.b16 %v296
      %v1188 = vunpack.c.h.b16 %v296
      %v1189 = vunpack.c.l.b16 %v297
      %v1190 = vunpack.c.h.b16 %v297
      %v1191 = vunpack.c.l.b16 %v298
      %v1192 = vunpack.c.h.b16 %v298
      %v1193 = vunpack.c.l.b16 %v299
      %v1194 = vunpack.c.l.b16 %v300
      %v1195 = vunpack.c.h.b16 %v300
      %v1196 = vunpack.c.l.b16 %v301
      %v1197 = vunpack.c.h.b16 %v301
      %v1198 = vunpack.c.l.b16 %v302
      %v1199 = vunpack.c.h.b16 %v302
      %v1200 = vunpack.c.l.b16 %v303
      %v1201 = vunpack.c.h.b16 %v303
      %v1202 = vunpack.c.l.b16 %v304
      %v1203 = vunpack.c.h.b16 %v304
      %v1204 = vunpack.c.l.b16 %v305
      %v1205 = vunpack.c.h.b16 %v305
      %v1206 = vunpack.c.l.b16 %v306
      %v1207 = vunpack.c.h.b16 %v306
      %v1208 = vunpack.c.l.b16 %v307
      %v1209 = vunpack.c.h.b16 %v307
      %v1210 = vunpack.c.l.b16 %v308
      %v1211 = vunpack.c.l.b16 %v309
      %v1212 = vunpack.c.h.b16 %v309
      %v1213 = vunpack.c.l.b16 %v310
      %v1214 = vunpack.c.h.b16 %v310
      %v1215 = vunpack.c.l.b16 %v311
      %v1216 = vunpack.c.h.b16 %v311
      %v1217 = vunpack.c.l.b16 %v312
      %v1218 = vunpack.c.h.b16 %v312
      %v1219 = vunpack.c.l.b16 %v313
      %v1220 = vunpack.c.h.b16 %v313
      %v1221 = vunpack.c.l.b16 %v314
      %v1222 = vunpack.c.h.b16 %v314
      %v1223 = vunpack.c.l.b16 %v315
      %v1224 = vunpack.c.h.b16 %v315
      %v1225 = vunpack.c.l.b16 %v316
      %v1226 = vunpack.c.h.b16 %v316
      %v1227 = vunpack.c.l.b16 %v317
      %v1228 = vunpack.c.l.b16 %v318
      %v1229 = vunpack.c.h.b16 %v318
      %v1230 = vunpack.c.l.b16 %v319
      %v1231 = vunpack.c.h.b16 %v319
      %v1232 = vunpack.c.l.b16 %v320
      %v1233 = vunpack.c.h.b16 %v320
      %v1234 = vunpack.c.l.b16 %v321
      %v1235 = vunpack.c.h.b16 %v321
      %v1236 = vunpack.c.l.b16 %v322
      %v1237 = vunpack.c.h.b16 %v322
      %v1238 = vunpack.c.l.b16 %v323
      %v1239 = vunpack.c.h.b16 %v323
      %v1240 = vunpack.c.l.b16 %v324
      %v1241 = vunpack.c.h.b16 %v324
      %v1242 = vunpack.c.l.b16 %v325
      %v1243 = vunpack.c.h.b16 %v325
      %v1244 = vunpack.c.l.b16 %v326
      %v1245 = vunpack.c.l.b16 %v327
      %v1246 = vunpack.c.h.b16 %v327
      %v1247 = vunpack.c.l.b16 %v328
      %v1248 = vunpack.c.h.b16 %v328
      %v1249 = vunpack.c.l.b16 %v329
      %v1250 = vunpack.c.h.b16 %v329
      %v1251 = vunpack.c.l.b16 %v330
      %v1252 = vunpack.c.h.b16 %v330
      %v1253 = vunpack.c.l.b16 %v331
      %v1254 = vunpack.c.h.b16 %v331
      %v1255 = vunpack.c.l.b16 %v332
      %v1256 = vunpack.c.h.b16 %v332
      %v1257 = vunpack.c.l.b16 %v333
      %v1258 = vunpack.c.h.b16 %v333
      %v1259 = vunpack.c.l.b16 %v334
      %v1260 = vunpack.c.h.b16 %v334
      %v1261 = vunpack.c.l.b16 %v335
      %v1262 = vunpack.c.l.b16 %v336
      %v1263 = vunpack.c.h.b16 %v336
      %v1264 = vunpack.c.l.b16 %v337
      %v1265 = vunpack.c.h.b16 %v337
      %v1266 = vunpack.c.l.b16 %v338
      %v1267 = vunpack.c.h.b16 %v338
      %v1268 = vunpack.c.l.b16 %v339
      %v1269 = vunpack.c.h.b16 %v339
      %v1270 = vunpack.c.l.b16 %v340
      %v1271 = vunpack.c.h.b16 %v340
      %v1272 = vunpack.c.l.b16 %v341
      %v1273 = vunpack.c.h.b16 %v341
      %v1274 = vunpack.c.l.b16 %v342
      %v1275 = vunpack.c.h.b16 %v342
      %v1276 = vunpack.c.l.b16 %v343
      %v1277 = vunpack.c.h.b16 %v343
      %v1278 = vunpack.c.l.b16 %v344
      %v1279 = vunpack.c.l.b16 %v345
      %v1280 = vunpack.c.h.b16 %v345
      %v1281 = vunpack.c.l.b16 %v346
      %v1282 = vunpack.c.h.b16 %v346
      %v1283 = vunpack.c.l.b16 %v347
      %v1284 = vunpack.c.h.b16 %v347
      %v1285 = vunpack.c.l.b16 %v348
      %v1286 = vunpack.c.h.b16 %v348
      %v1287 = vunpack.c.l.b16 %v349
      %v1288 = vunpack.c.h.b16 %v349
      %v1289 = vunpack.c.l.b16 %v350
      %v1290 = vunpack.c.h.b16 %v350
      %v1291 = vunpack.c.l.b16 %v351
      %v1292 = vunpack.c.h.b16 %v351
      %v1293 = vunpack.c.l.b16 %v352
      %v1294 = vunpack.c.h.b16 %v352
      %v1295 = vunpack.c.l.b16 %v353
      %v1296 = vunpack.c.l.b16 %v354
      %v1297 = vunpack.c.h.b16 %v354
      %v1298 = vunpack.c.l.b16 %v355
      %v1299 = vunpack.c.h.b16 %v355
      %v1300 = vunpack.c.l.b16 %v356
      %v1301 = vunpack.c.h.b16 %v356
      %v1302 = vunpack.c.l.b16 %v357
      %v1303 = vunpack.c.h.b16 %v357
      %v1304 = vunpack.c.l.b16 %v358
      %v1305 = vunpack.c.h.b16 %v358
      %v1306 = vunpack.c.l.b16 %v359
      %v1307 = vunpack.c.h.b16 %v359
      %v1308 = vunpack.c.l.b16 %v360
      %v1309 = vunpack.c.h.b16 %v360
      %v1310 = vunpack.c.l.b16 %v361
      %v1311 = vunpack.c.h.b16 %v361
      %v1312 = vunpack.c.l.b16 %v362
      %v1313 = vunpack.c.l.b16 %v363
      %v1314 = vunpack.c.h.b16 %v363
      %v1315 = vunpack.c.l.b16 %v364
      %v1316 = vunpack.c.h.b16 %v364
      %v1317 = vunpack.c.l.b16 %v365
      %v1318 = vunpack.c.h.b16 %v365
      %v1319 = vunpack.c.l.b16 %v366
      %v1320 = vunpack.c.h.b16 %v366
      %v1321 = vunpack.c.l.b16 %v367
      %v1322 = vunpack.c.h.b16 %v367
      %v1323 = vunpack.c.l.b16 %v368
      %v1324 = vunpack.c.h.b16 %v368
      %v1325 = vunpack.c.l.b16 %v369
      %v1326 = vunpack.c.h.b16 %v369
      %v1327 = vunpack.c.l.b16 %v370
      %v1328 = vunpack.c.h.b16 %v370
      %v1329 = vunpack.c.l.b16 %v371
      %v1330 = vunpack.c.l.b16 %v372
      %v1331 = vunpack.c.h.b16 %v372
      %v1332 = vunpack.c.l.b16 %v373
      %v1333 = vunpack.c.h.b16 %v373
      %v1334 = vunpack.c.l.b16 %v374
      %v1335 = vunpack.c.h.b16 %v374
      %v1336 = vunpack.c.l.b16 %v375
      %v1337 = vunpack.c.h.b16 %v375
      %v1338 = vunpack.c.l.b16 %v376
      %v1339 = vunpack.c.h.b16 %v376
      %v1340 = vunpack.c.l.b16 %v377
      %v1341 = vunpack.c.h.b16 %v377
      %v1342 = vunpack.c.l.b16 %v378
      %v1343 = vunpack.c.h.b16 %v378
      %v1344 = vunpack.c.l.b16 %v379
      %v1345 = vunpack.c.h.b16 %v379
      %v1346 = vunpack.c.l.b16 %v380
      %v1347 = vunpack.c.l.b16 %v381
      %v1348 = vunpack.c.h.b16 %v381
      %v1349 = vunpack.c.l.b16 %v382
      %v1350 = vunpack.c.h.b16 %v382
      %v1351 = vunpack.c.l.b16 %v383
      %v1352 = vunpack.c.h.b16 %v383
      %v1353 = vunpack.c.l.b16 %v384
      %v1354 = vunpack.c.h.b16 %v384
      %v1355 = vunpack.c.l.b16 %v385
      %v1356 = vunpack.c.h.b16 %v385
      %v1357 = vunpack.c.l.b16 %v386
      %v1358 = vunpack.c.h.b16 %v386
      %v1359 = vunpack.c.l.b16 %v387
      %v1360 = vunpack.c.h.b16 %v387
      %v1361 = vunpack.c.l.b16 %v388
      %v1362 = vunpack.c.h.b16 %v388
      %v1363 = vunpack.c.l.b16 %v389
      %v1364 = vunpack.c.l.b16 %v390
      %v1365 = vunpack.c.h.b16 %v390
      %v1366 = vunpack.c.l.b16 %v391
      %v1367 = vunpack.c.h.b16 %v391
      %v1368 = vunpack.c.l.b16 %v392
      %v1369 = vunpack.c.h.b16 %v392
      %v1370 = vunpack.c.l.b16 %v393
      %v1371 = vunpack.c.h.b16 %v393
      %v1372 = vunpack.c.l.b16 %v394
      %v1373 = vunpack.c.h.b16 %v394
      %v1374 = vunpack.c.l.b16 %v395
      %v1375 = vunpack.c.h.b16 %v395
      %v1376 = vunpack.c.l.b16 %v396
      %v1377 = vunpack.c.h.b16 %v396
      %v1378 = vunpack.c.l.b16 %v397
      %v1379 = vunpack.c.h.b16 %v397
      %v1380 = vunpack.c.l.b16 %v398
      %v1381 = vunpack.c.l.b16 %v399
      %v1382 = vunpack.c.h.b16 %v399
      %v1383 = vunpack.c.l.b16 %v400
      %v1384 = vunpack.c.h.b16 %v400
      %v1385 = vunpack.c.l.b16 %v401
      %v1386 = vunpack.c.h.b16 %v401
      %v1387 = vunpack.c.l.b16 %v402
      %v1388 = vunpack.c.h.b16 %v402
      %v1389 = vunpack.c.l.b16 %v403
      %v1390 = vunpack.c.h.b16 %v403
      %v1391 = vunpack.c.l.b16 %v404
      %v1392 = vunpack.c.h.b16 %v404
      %v1393 = vunpack.c.l.b16 %v405
      %v1394 = vunpack.c.h.b16 %v405
      %v1395 = vunpack.c.l.b16 %v406
      %v1396 = vunpack.c.h.b16 %v406
      %v1397 = vunpack.c.l.b16 %v407
      %v1398 = vunpack.c.l.b16 %v408
      %v1399 = vunpack.c.h.b16 %v408
      %v1400 = vunpack.c.l.b16 %v409
      %v1401 = vunpack.c.h.b16 %v409
      %v1402 = vunpack.c.l.b16 %v410
      %v1403 = vunpack.c.h.b16 %v410
      %v1404 = vunpack.c.l.b16 %v411
      %v1405 = vunpack.c.h.b16 %v411
      %v1406 = vunpack.c.l.b16 %v412
      %v1407 = vunpack.c.h.b16 %v412
      %v1408 = vunpack.c.l.b16 %v413
      %v1409 = vunpack.c.h.b16 %v413
      %v1410 = vunpack.c.l.b16 %v414
      %v1411 = vunpack.c.h.b16 %v414
      %v1412 = vunpack.c.l.b16 %v415
      %v1413 = vunpack.c.h.b16 %v415
      %v1414 = vunpack.c.l.b16 %v416
      %v1415 = vunpack.c.l.b16 %v417
      %v1416 = vunpack.c.h.b16 %v417
      %v1417 = vunpack.c.l.b16 %v418
      %v1418 = vunpack.c.h.b16 %v418
      %v1419 = vunpack.c.l.b16 %v419
      %v1420 = vunpack.c.h.b16 %v419
      %v1421 = vunpack.c.l.b16 %v420
      %v1422 = vunpack.c.h.b16 %v420
      %v1423 = vunpack.c.l.b16 %v421
      %v1424 = vunpack.c.h.b16 %v421
      %v1425 = vunpack.c.l.b16 %v422
      %v1426 = vunpack.c.h.b16 %v422
      %v1427 = vunpack.c.l.b16 %v423
      %v1428 = vunpack.c.h.b16 %v423
      %v1429 = vunpack.c.l.b16 %v424
      %v1430 = vunpack.c.h.b16 %v424
      %v1431 = vunpack.c.l.b16 %v425
      %v1432 = vunpack.c.l.b16 %v426
      %v1433 = vunpack.c.h.b16 %v426
      %v1434 = vunpack.c.l.b16 %v427
      %v1435 = vunpack.c.h.b16 %v427
      %v1436 = vunpack.c.l.b16 %v428
      %v1437 = vunpack.c.h.b16 %v428
      %v1438 = vunpack.c.l.b16 %v429
      %v1439 = vunpack.c.h.b16 %v429
      %v1440 = vunpack.c.l.b16 %v430
      %v1441 = vunpack.c.h.b16 %v430
      %v1442 = vunpack.c.l.b16 %v431
      %v1443 = vunpack.c.h.b16 %v431
      %v1444 = vunpack.c.l.b16 %v432
      %v1445 = vunpack.c.h.b16 %v432
      %v1446 = vunpack.c.l.b16 %v433
      %v1447 = vunpack.c.h.b16 %v433
      %v1448 = vunpack.c.l.b16 %v434
      %v1449 = vunpack.c.l.b16 %v435
      %v1450 = vunpack.c.h.b16 %v435
      %v1451 = vunpack.c.l.b16 %v436
      %v1452 = vunpack.c.h.b16 %v436
      %v1453 = vunpack.c.l.b16 %v437
      %v1454 = vunpack.c.h.b16 %v437
      %v1455 = vunpack.c.l.b16 %v438
      %v1456 = vunpack.c.h.b16 %v438
      %v1457 = vunpack.c.l.b16 %v439
      %v1458 = vunpack.c.h.b16 %v439
      %v1459 = vunpack.c.l.b16 %v440
      %v1460 = vunpack.c.h.b16 %v440
      %v1461 = vunpack.c.l.b16 %v441
      %v1462 = vunpack.c.h.b16 %v441
      %v1463 = vunpack.c.l.b16 %v442
      %v1464 = vunpack.c.h.b16 %v442
      %v1465 = vunpack.c.l.b16 %v443
      %v1466 = vunpack.c.l.b16 %v444
      %v1467 = vunpack.c.h.b16 %v444
      %v1468 = vunpack.c.l.b16 %v445
      %v1469 = vunpack.c.h.b16 %v445
      %v1470 = vunpack.c.l.b16 %v446
      %v1471 = vunpack.c.h.b16 %v446
      %v1472 = vunpack.c.l.b16 %v447
      %v1473 = vunpack.c.h.b16 %v447
      %v1474 = vunpack.c.l.b16 %v448
      %v1475 = vunpack.c.h.b16 %v448
      %v1476 = vunpack.c.l.b16 %v449
      %v1477 = vunpack.c.h.b16 %v449
      %v1478 = vunpack.c.l.b16 %v450
      %v1479 = vunpack.c.h.b16 %v450
      %v1480 = vunpack.c.l.b16 %v451
      %v1481 = vunpack.c.h.b16 %v451
      %v1482 = vunpack.c.l.b16 %v452
      %v1483 = vunpack.c.l.b16 %v453
      %v1484 = vunpack.c.h.b16 %v453
      %v1485 = vunpack.c.l.b16 %v454
      %v1486 = vunpack.c.h.b16 %v454
      %v1487 = vunpack.c.l.b16 %v455
      %v1488 = vunpack.c.h.b16 %v455
      %v1489 = vunpack.c.l.b16 %v456
      %v1490 = vunpack.c.h.b16 %v456
      %v1491 = vunpack.c.l.b16 %v457
      %v1492 = vunpack.c.h.b16 %v457
      %v1493 = vunpack.c.l.b16 %v458
      %v1494 = vunpack.c.h.b16 %v458
      %v1495 = vunpack.c.l.b16 %v459
      %v1496 = vunpack.c.h.b16 %v459
      %v1497 = vunpack.c.l.b16 %v460
      %v1498 = vunpack.c.h.b16 %v460
      %v1499 = vunpack.c.l.b16 %v461
      %v1500 = vunpack.c.l.b16 %v462
      %v1501 = vunpack.c.h.b16 %v462
      %v1502 = vunpack.c.l.b16 %v463
      %v1503 = vunpack.c.h.b16 %v463
      %v1504 = vunpack.c.l.b16 %v464
      %v1505 = vunpack.c.h.b16 %v464
      %v1506 = vunpack.c.l.b16 %v465
      %v1507 = vunpack.c.h.b16 %v465
      %v1508 = vunpack.c.l.b16 %v466
      %v1509 = vunpack.c.h.b16 %v466
      %v1510 = vunpack.c.l.b16 %v467
      %v1511 = vunpack.c.h.b16 %v467
      %v1512 = vunpack.c.l.b16 %v468
      %v1513 = vunpack.c.h.b16 %v468
      %v1514 = vunpack.c.l.b16 %v469
      %v1515 = vunpack.c.h.b16 %v469
      %v1516 = vunpack.c.l.b16 %v470
      %v1517 = vunpack.c.l.b16 %v471
      %v1518 = vunpack.c.h.b16 %v471
      %v1519 = vunpack.c.l.b16 %v472
      %v1520 = vunpack.c.h.b16 %v472
      %v1521 = vunpack.c.l.b16 %v473
      %v1522 = vunpack.c.h.b16 %v473
      %v1523 = vunpack.c.l.b16 %v474
      %v1524 = vunpack.c.h.b16 %v474
      %v1525 = vunpack.c.l.b16 %v475
      %v1526 = vunpack.c.h.b16 %v475
      %v1527 = vunpack.c.l.b16 %v476
      %v1528 = vunpack.c.h.b16 %v476
      %v1529 = vunpack.c.l.b16 %v477
      %v1530 = vunpack.c.h.b16 %v477
      %v1531 = vunpack.c.l.b16 %v478
      %v1532 = vunpack.c.h.b16 %v478
      %v1533 = vunpack.c.l.b16 %v479
      %v1534 = vunpack.c.l.b16 %v480
      %v1535 = vunpack.c.h.b16 %v480
      %v1536 = vunpack.c.l.b16 %v481
      %v1537 = vunpack.c.h.b16 %v481
      %v1538 = vunpack.c.l.b16 %v482
      %v1539 = vunpack.c.h.b16 %v482
      %v1540 = vunpack.c.l.b16 %v483
      %v1541 = vunpack.c.h.b16 %v483
      %v1542 = vunpack.c.l.b16 %v484
      %v1543 = vunpack.c.h.b16 %v484
      %v1544 = vunpack.c.l.b16 %v485
      %v1545 = vunpack.c.h.b16 %v485
      %v1546 = vunpack.c.l.b16 %v486
      %v1547 = vunpack.c.h.b16 %v486
      %v1548 = vunpack.c.l.b16 %v487
      %v1549 = vunpack.c.h.b16 %v487
      %v1550 = vunpack.c.l.b16 %v488
      %v1551 = vunpack.c.l.b16 %v489
      %v1552 = vunpack.c.h.b16 %v489
      %v1553 = vunpack.c.l.b16 %v490
      %v1554 = vunpack.c.h.b16 %v490
      %v1555 = vunpack.c.l.b16 %v491
      %v1556 = vunpack.c.h.b16 %v491
      %v1557 = vunpack.c.l.b16 %v492
      %v1558 = vunpack.c.h.b16 %v492
      %v1559 = vunpack.c.l.b16 %v493
      %v1560 = vunpack.c.h.b16 %v493
      %v1561 = vunpack.c.l.b16 %v494
      %v1562 = vunpack.c.h.b16 %v494
      %v1563 = vunpack.c.l.b16 %v495
      %v1564 = vunpack.c.h.b16 %v495
      %v1565 = vunpack.c.l.b16 %v496
      %v1566 = vunpack.c.h.b16 %v496
      %v1567 = vunpack.c.l.b16 %v497
      %v1568 = vunpack.c.l.b16 %v498
      %v1569 = vunpack.c.h.b16 %v498
      %v1570 = vunpack.c.l.b16 %v499
      %v1571 = vunpack.c.h.b16 %v499
      %v1572 = vunpack.c.l.b16 %v500
      %v1573 = vunpack.c.h.b16 %v500
      %v1574 = vunpack.c.l.b16 %v501
      %v1575 = vunpack.c.h.b16 %v501
      %v1576 = vunpack.c.l.b16 %v502
      %v1577 = vunpack.c.h.b16 %v502
      %v1578 = vunpack.c.l.b16 %v503
      %v1579 = vunpack.c.h.b16 %v503
      %v1580 = vunpack.c.l.b16 %v504
      %v1581 = vunpack.c.h.b16 %v504
      %v1582 = vunpack.c.l.b16 %v505
      %v1583 = vunpack.c.h.b16 %v505
      %v1584 = vunpack.c.l.b16 %v506
      %v1585 = vunpack.c.l.b16 %v507
      %v1586 = vunpack.c.h.b16 %v507
      %v1587 = vunpack.c.l.b16 %v508
      %v1588 = vunpack.c.h.b16 %v508
      %v1589 = vunpack.c.l.b16 %v509
      %v1590 = vunpack.c.h.b16 %v509
      %v1591 = vunpack.c.l.b16 %v510
      %v1592 = vunpack.c.h.b16 %v510
      %v1593 = vunpack.c.l.b16 %v511
      %v1594 = vunpack.c.h.b16 %v511
      %v1595 = vunpack.c.l.b16 %v512
      %v1596 = vunpack.c.h.b16 %v512
      %v1597 = vunpack.c.l.b16 %v513
      %v1598 = vunpack.c.h.b16 %v513
      %v1599 = vunpack.c.l.b16 %v514
      %v1600 = vunpack.c.h.b16 %v514
      %v1601 = vunpack.c.l.b16 %v515
      %v1602 = vunpack.c.l.b16 %v516
      %v1603 = vunpack.c.h.b16 %v516
      %v1604 = vunpack.c.l.b16 %v517
      %v1605 = vunpack.c.h.b16 %v517
      %v1606 = vunpack.c.l.b16 %v518
      %v1607 = vunpack.c.h.b16 %v518
      %v1608 = vunpack.c.l.b16 %v519
      %v1609 = vunpack.c.h.b16 %v519
      %v1610 = vunpack.c.l.b16 %v520
      %v1611 = vunpack.c.h.b16 %v520
      %v1612 = vunpack.c.l.b16 %v521
      %v1613 = vunpack.c.h.b16 %v521
      %v1614 = vunpack.c.l.b16 %v522
      %v1615 = vunpack.c.h.b16 %v522
      %v1616 = vunpack.c.l.b16 %v523
      %v1617 = vunpack.c.h.b16 %v523
      %v1618 = vunpack.c.l.b16 %v524
      %v1619 = vunpack.c.l.b16 %v525
      %v1620 = vunpack.c.h.b16 %v525
      %v1621 = vunpack.c.l.b16 %v526
      %v1622 = vunpack.c.h.b16 %v526
      %v1623 = vunpack.c.l.b16 %v527
      %v1624 = vunpack.c.h.b16 %v527
      %v1625 = vunpack.c.l.b16 %v528
      %v1626 = vunpack.c.h.b16 %v528
      %v1627 = vunpack.c.l.b16 %v529
      %v1628 = vunpack.c.h.b16 %v529
      %v1629 = vunpack.c.l.b16 %v530
      %v1630 = vunpack.c.h.b16 %v530
      %v1631 = vunpack.c.l.b16 %v531
      %v1632 = vunpack.c.h.b16 %v531
      %v1633 = vunpack.c.l.b16 %v532
      %v1634 = vunpack.c.h.b16 %v532
      %v1635 = vunpack.c.l.b16 %v533
      %v1636 = vunpack.c.l.b16 %v534
      %v1637 = vunpack.c.h.b16 %v534
      %v1638 = vunpack.c.l.b16 %v535
      %v1639 = vunpack.c.h.b16 %v535
      %v1640 = vunpack.c.l.b16 %v536
      %v1641 = vunpack.c.h.b16 %v536
      %v1642 = vunpack.c.l.b16 %v537
      %v1643 = vunpack.c.h.b16 %v537
      %v1644 = vunpack.c.l.b16 %v538
      %v1645 = vunpack.c.h.b16 %v538
      %v1646 = vunpack.c.l.b16 %v539
      %v1647 = vunpack.c.h.b16 %v539
      %v1648 = vunpack.c.l.b16 %v540
      %v1649 = vunpack.c.h.b16 %v540
      %v1650 = vunpack.c.l.b16 %v541
      %v1651 = vunpack.c.h.b16 %v541
      %v1652 = vunpack.c.l.b16 %v542
      %v1653 = vunpack.c.l.b16 %v543
      %v1654 = vunpack.c.h.b16 %v543
      %v1655 = vunpack.c.l.b16 %v544
      %v1656 = vunpack.c.h.b16 %v544
      %v1657 = vunpack.c.l.b16 %v545
      %v1658 = vunpack.c.h.b16 %v545
      %v1659 = vunpack.c.l.b16 %v546
      %v1660 = vunpack.c.h.b16 %v546
      %v1661 = vunpack.c.l.b16 %v547
      %v1662 = vunpack.c.h.b16 %v547
      %v1663 = vunpack.c.l.b16 %v548
      %v1664 = vunpack.c.h.b16 %v548
      %v1665 = vunpack.c.l.b16 %v549
      %v1666 = vunpack.c.h.b16 %v549
      %v1667 = vunpack.c.l.b16 %v550
      %v1668 = vunpack.c.h.b16 %v550
      %v1669 = vunpack.c.l.b16 %v551
      %v1670 = vunpack.c.l.b16 %v552
      %v1671 = vunpack.c.h.b16 %v552
      %v1672 = vunpack.c.l.b16 %v553
      %v1673 = vunpack.c.h.b16 %v553
      %v1674 = vunpack.c.l.b16 %v554
      %v1675 = vunpack.c.h.b16 %v554
      %v1676 = vunpack.c.l.b16 %v555
      %v1677 = vunpack.c.h.b16 %v555
      %v1678 = vunpack.c.l.b16 %v556
      %v1679 = vunpack.c.h.b16 %v556
      %v1680 = vunpack.c.l.b16 %v557
      %v1681 = vunpack.c.h.b16 %v557
      %v1682 = vunpack.c.l.b16 %v558
      %v1683 = vunpack.c.h.b16 %v558
      %v1684 = vunpack.c.l.b16 %v559
      %v1685 = vunpack.c.h.b16 %v559
      %v1686 = vunpack.c.l.b16 %v560
      %v1687 = vunpack.c.l.b16 %v561
      %v1688 = vunpack.c.h.b16 %v561
      %v1689 = vunpack.c.l.b16 %v562
      %v1690 = vunpack.c.h.b16 %v562
      %v1691 = vunpack.c.l.b16 %v563
      %v1692 = vunpack.c.h.b16 %v563
      %v1693 = vunpack.c.l.b16 %v564
      %v1694 = vunpack.c.h.b16 %v564
      %v1695 = vunpack.c.l.b16 %v565
      %v1696 = vunpack.c.h.b16 %v565
      %v1697 = vunpack.c.l.b16 %v566
      %v1698 = vunpack.c.h.b16 %v566
      %v1699 = vunpack.c.l.b16 %v567
      %v1700 = vunpack.c.h.b16 %v567
      %v1701 = vunpack.c.l.b16 %v568
      %v1702 = vunpack.c.h.b16 %v568
      %v1703 = vunpack.c.l.b16 %v569
      %v1704 = vunpack.c.l.b16 %v570
      %v1705 = vunpack.c.h.b16 %v570
      %v1706 = vunpack.c.l.b16 %v571
      %v1707 = vunpack.c.h.b16 %v571
      %v1708 = vunpack.c.l.b16 %v572
      %v1709 = vunpack.c.h.b16 %v572
      %v1710 = vunpack.c.l.b16 %v573
      %v1711 = vunpack.c.h.b16 %v573
      %v1712 = vunpack.c.l.b16 %v574
      %v1713 = vunpack.c.h.b16 %v574
      %v1714 = vunpack.c.l.b16 %v575
      %v1715 = vunpack.c.h.b16 %v575
      %v1716 = vunpack.c.l.b16 %v576
      %v1717 = vunpack.c.h.b16 %v576
      %v1718 = vunpack.c.l.b16 %v577
      %v1719 = vunpack.c.h.b16 %v577
      %v1720 = vunpack.c.l.b16 %v578
      %v1721 = vunpack.c.l.b16 %v579
      %v1722 = vunpack.c.h.b16 %v579
      %v1723 = vunpack.c.l.b16 %v580
      %v1724 = vunpack.c.h.b16 %v580
      %v1725 = vunpack.c.l.b16 %v581
      %v1726 = vunpack.c.h.b16 %v581
      %v1727 = vunpack.c.l.b16 %v582
      %v1728 = vunpack.c.h.b16 %v582
      %v1729 = vunpack.c.l.b16 %v583
      %v1730 = vunpack.c.h.b16 %v583
      %v1731 = vunpack.c.l.b16 %v584
      %v1732 = vunpack.c.h.b16 %v584
      %v1733 = vunpack.c.l.b16 %v585
      %v1734 = vunpack.c.h.b16 %v585
      %v1735 = vunpack.c.l.b16 %v586
      %v1736 = vunpack.c.h.b16 %v586
      %v1737 = vunpack.c.l.b16 %v587
      %v1738 = vunpack.c.l.b16 %v588
      %v1739 = vunpack.c.h.b16 %v588
      %v1740 = vunpack.c.l.b16 %v589
      %v1741 = vunpack.c.h.b16 %v589
      %v1742 = vunpack.c.l.b16 %v590
      %v1743 = vunpack.c.h.b16 %v590
      %v1744 = vunpack.c.l.b16 %v591
      %v1745 = vunpack.c.h.b16 %v591
      %v1746 = vunpack.c.l.b16 %v592
      %v1747 = vunpack.c.h.b16 %v592
      %v1748 = vunpack.c.l.b16 %v593
      %v1749 = vunpack.c.h.b16 %v593
      %v1750 = vunpack.c.l.b16 %v594
      %v1751 = vunpack.c.h.b16 %v594
      %v1752 = vunpack.c.l.b16 %v595
      %v1753 = vunpack.c.h.b16 %v595
      %v1754 = vunpack.c.l.b16 %v596
      %v1755 = vunpack.c.l.b16 %v597
      %v1756 = vunpack.c.h.b16 %v597
      %v1757 = vunpack.c.l.b16 %v598
      %v1758 = vunpack.c.h.b16 %v598
      %v1759 = vunpack.c.l.b16 %v599
      %v1760 = vunpack.c.h.b16 %v599
      %v1761 = vunpack.c.l.b16 %v600
      %v1762 = vunpack.c.h.b16 %v600
      %v1763 = vunpack.c.l.b16 %v601
      %v1764 = vunpack.c.h.b16 %v601
      %v1765 = vunpack.c.l.b16 %v602
      %v1766 = vunpack.c.h.b16 %v602
      %v1767 = vunpack.c.l.b16 %v603
      %v1768 = vunpack.c.h.b16 %v603
      %v1769 = vunpack.c.l.b16 %v604
      %v1770 = vunpack.c.h.b16 %v604
      %v1771 = vunpack.c.l.b16 %v605
      %v1772 = vunpack.c.l.b16 %v606
      %v1773 = vunpack.c.h.b16 %v606
      %v1774 = vunpack.c.l.b16 %v607
      %v1775 = vunpack.c.h.b16 %v607
      %v1776 = vunpack.c.l.b16 %v608
      %v1777 = vunpack.c.h.b16 %v608
      %v1778 = vunpack.c.l.b16 %v609
      %v1779 = vunpack.c.h.b16 %v609
      %v1780 = vunpack.c.l.b16 %v610
      %v1781 = vunpack.c.h.b16 %v610
      %v1782 = vunpack.c.l.b16 %v611
      %v1783 = vunpack.c.h.b16 %v611
      %v1784 = vunpack.c.l.b16 %v612
      %v1785 = vunpack.c.h.b16 %v612
      %v1786 = vunpack.c.l.b16 %v613
      %v1787 = vunpack.c.h.b16 %v613
      %v1788 = vunpack.c.l.b16 %v614
      %v1789 = vpack.c.b16 %v1143, %v1126
      %v1790 = vpack.c.b16 %v1144, %v1127
      %v1791 = vpack.c.b16 %v1145, %v1128
      %v1792 = vpack.c.b16 %v1146, %v1129
      %v1793 = vpack.c.b16 %v1147, %v1130
      %v1794 = vpack.c.b16 %v1148, %v1131
      %v1795 = vpack.c.b16 %v1149, %v1132
      %v1796 = vpack.c.b16 %v1150, %v1133
      %v1797 = vpack.c.b16 %v1151, %v1134
      %v1798 = vpack.c.b16 %v1152, %v1135
      %v1799 = vpack.c.b16 %v1153, %v1136
      %v1800 = vpack.c.b16 %v1154, %v1137
      %v1801 = vpack.c.b16 %v1155, %v1138
      %v1802 = vpack.c.b16 %v1156, %v1139
      %v1803 = vpack.c.b16 %v1157, %v1140
      %v1804 = vpack.c.b16 %v1158, %v1141
      %v1805 = vpack.c.b16 %v1159, %v1142
      %v1806 = vpack.c.b16 %v1177, %v1160
      %v1807 = vpack.c.b16 %v1178, %v1161
      %v1808 = vpack.c.b16 %v1179, %v1162
      %v1809 = vpack.c.b16 %v1180, %v1163
      %v1810 = vpack.c.b16 %v1181, %v1164
      %v1811 = vpack.c.b16 %v1182, %v1165
      %v1812 = vpack.c.b16 %v1183, %v1166
      %v1813 = vpack.c.b16 %v1184, %v1167
      %v1814 = vpack.c.b16 %v1185, %v1168
      %v1815 = vpack.c.b16 %v1186, %v1169
      %v1816 = vpack.c.b16 %v1187, %v1170
      %v1817 = vpack.c.b16 %v1188, %v1171
      %v1818 = vpack.c.b16 %v1189, %v1172
      %v1819 = vpack.c.b16 %v1190, %v1173
      %v1820 = vpack.c.b16 %v1191, %v1174
      %v1821 = vpack.c.b16 %v1192, %v1175
      %v1822 = vpack.c.b16 %v1193, %v1176
      %v1823 = vpack.c.b16 %v1211, %v1194
      %v1824 = vpack.c.b16 %v1212, %v1195
      %v1825 = vpack.c.b16 %v1213, %v1196
      %v1826 = vpack.c.b16 %v1214, %v1197
      %v1827 = vpack.c.b16 %v1215, %v1198
      %v1828 = vpack.c.b16 %v1216, %v1199
      %v1829 = vpack.c.b16 %v1217, %v1200
      %v1830 = vpack.c.b16 %v1218, %v1201
      %v1831 = vpack.c.b16 %v1219, %v1202
      %v1832 = vpack.c.b16 %v1220, %v1203
      %v1833 = vpack.c.b16 %v1221, %v1204
      %v1834 = vpack.c.b16 %v1222, %v1205
      %v1835 = vpack.c.b16 %v1223, %v1206
      %v1836 = vpack.c.b16 %v1224, %v1207
      %v1837 = vpack.c.b16 %v1225, %v1208
      %v1838 = vpack.c.b16 %v1226, %v1209
      %v1839 = vpack.c.b16 %v1227, %v1210
      %v1840 = vpack.c.b16 %v1245, %v1228
      %v1841 = vpack.c.b16 %v1246, %v1229
      %v1842 = vpack.c.b16 %v1247, %v1230
      %v1843 = vpack.c.b16 %v1248, %v1231
      %v1844 = vpack.c.b16 %v1249, %v1232
      %v1845 = vpack.c.b16 %v1250, %v1233
      %v1846 = vpack.c.b16 %v1251, %v1234
      %v1847 = vpack.c.b16 %v1252, %v1235
      %v1848 = vpack.c.b16 %v1253, %v1236
      %v1849 = vpack.c.b16 %v1254, %v1237
      %v1850 = vpack.c.b16 %v1255, %v1238
      %v1851 = vpack.c.b16 %v1256, %v1239
      %v1852 = vpack.c.b16 %v1257, %v1240
      %v1853 = vpack.c.b16 %v1258, %v1241
      %v1854 = vpack.c.b16 %v1259, %v1242
      %v1855 = vpack.c.b16 %v1260, %v1243
      %v1856 = vpack.c.b16 %v1261, %v1244
      %v1857 = vpack.c.b16 %v1279, %v1262
      %v1858 = vpack.c.b16 %v1280, %v1263
      %v1859 = vpack.c.b16 %v1281, %v1264
      %v1860 = vpack.c.b16 %v1282, %v1265
      %v1861 = vpack.c.b16 %v1283, %v1266
      %v1862 = vpack.c.b16 %v1284, %v1267
      %v1863 = vpack.c.b16 %v1285, %v1268
      %v1864 = vpack.c.b16 %v1286, %v1269
      %v1865 = vpack.c.b16 %v1287, %v1270
      %v1866 = vpack.c.b16 %v1288, %v1271
      %v1867 = vpack.c.b16 %v1289, %v1272
      %v1868 = vpack.c.b16 %v1290, %v1273
      %v1869 = vpack.c.b16 %v1291, %v1274
      %v1870 = vpack.c.b16 %v1292, %v1275
      %v1871 = vpack.c.b16 %v1293, %v1276
      %v1872 = vpack.c.b16 %v1294, %v1277
      %v1873 = vpack.c.b16 %v1295, %v1278
      %v1874 = vpack.c.b16 %v1313, %v1296
      %v1875 = vpack.c.b16 %v1314, %v1297
      %v1876 = vpack.c.b16 %v1315, %v1298
      %v1877 = vpack.c.b16 %v1316, %v1299
      %v1878 = vpack.c.b16 %v1317, %v1300
      %v1879 = vpack.c.b16 %v1318, %v1301
      %v1880 = vpack.c.b16 %v1319, %v1302
      %v1881 = vpack.c.b16 %v1320, %v1303
      %v1882 = vpack.c.b16 %v1321, %v1304
      %v1883 = vpack.c.b16 %v1322, %v1305
      %v1884 = vpack.c.b16 %v1323, %v1306
      %v1885 = vpack.c.b16 %v1324, %v1307
      %v1886 = vpack.c.b16 %v1325, %v1308
      %v1887 = vpack.c.b16 %v1326, %v1309
      %v1888 = vpack.c.b16 %v1327, %v1310
      %v1889 = vpack.c.b16 %v1328, %v1311
      %v1890 = vpack.c.b16 %v1329, %v1312
      %v1891 = vpack.c.b16 %v1347, %v1330
      %v1892 = vpack.c.b16 %v1348, %v1331
      %v1893 = vpack.c.b16 %v1349, %v1332
      %v1894 = vpack.c.b16 %v1350, %v1333
      %v1895 = vpack.c.b16 %v1351, %v1334
      %v1896 = vpack.c.b16 %v1352, %v1335
      %v1897 = vpack.c.b16 %v1353, %v1336
      %v1898 = vpack.c.b16 %v1354, %v1337
      %v1899 = vpack.c.b16 %v1355, %v1338
      %v1900 = vpack.c.b16 %v1356, %v1339
      %v1901 = vpack.c.b16 %v1357, %v1340
      %v1902 = vpack.c.b16 %v1358, %v1341
      %v1903 = vpack.c.b16 %v1359, %v1342
      %v1904 = vpack.c.b16 %v1360, %v1343
      %v1905 = vpack.c.b16 %v1361, %v1344
      %v1906 = vpack.c.b16 %v1362, %v1345
      %v1907 = vpack.c.b16 %v1363, %v1346
      %v1908 = vpack.c.b16 %v1381, %v1364
      %v1909 = vpack.c.b16 %v1382, %v1365
      %v1910 = vpack.c.b16 %v1383, %v1366
      %v1911 = vpack.c.b16 %v1384, %v1367
      %v1912 = vpack.c.b16 %v1385, %v1368
      %v1913 = vpack.c.b16 %v1386, %v1369
      %v1914 = vpack.c.b16 %v1387, %v1370
      %v1915 = vpack.c.b16 %v1388, %v1371
      %v1916 = vpack.c.b16 %v1389, %v1372
      %v1917 = vpack.c.b16 %v1390, %v1373
      %v1918 = vpack.c.b16 %v1391, %v1374
      %v1919 = vpack.c.b16 %v1392, %v1375
      %v1920 = vpack.c.b16 %v1393, %v1376
      %v1921 = vpack.c.b16 %v1394, %v1377
      %v1922 = vpack.c.b16 %v1395, %v1378
      %v1923 = vpack.c.b16 %v1396, %v1379
      %v1924 = vpack.c.b16 %v1397, %v1380
      %v1925 = vpack.c.b16 %v1415, %v1398
      %v1926 = vpack.c.b16 %v1416, %v1399
      %v1927 = vpack.c.b16 %v1417, %v1400
      %v1928 = vpack.c.b16 %v1418, %v1401
      %v1929 = vpack.c.b16 %v1419, %v1402
      %v1930 = vpack.c.b16 %v1420, %v1403
      %v1931 = vpack.c.b16 %v1421, %v1404
      %v1932 = vpack.c.b16 %v1422, %v1405
      %v1933 = vpack.c.b16 %v1423, %v1406
      %v1934 = vpack.c.b16 %v1424, %v1407
      %v1935 = vpack.c.b16 %v1425, %v1408
      %v1936 = vpack.c.b16 %v1426, %v1409
      %v1937 = vpack.c.b16 %v1427, %v1410
      %v1938 = vpack.c.b16 %v1428, %v1411
      %v1939 = vpack.c.b16 %v1429, %v1412
      %v1940 = vpack.c.b16 %v1430, %v1413
      %v1941 = vpack.c.b16 %v1431, %v1414
      %v1942 = vpack.c.b16 %v1449, %v1432
      %v1943 = vpack.c.b16 %v1450, %v1433
      %v1944 = vpack.c.b16 %v1451, %v1434
      %v1945 = vpack.c.b16 %v1452, %v1435
      %v1946 = vpack.c.b16 %v1453, %v1436
      %v1947 = vpack.c.b16 %v1454, %v1437
      %v1948 = vpack.c.b16 %v1455, %v1438
      %v1949 = vpack.c.b16 %v1456, %v1439
      %v1950 = vpack.c.b16 %v1457, %v1440
      %v1951 = vpack.c.b16 %v1458, %v1441
      %v1952 = vpack.c.b16 %v1459, %v1442
      %v1953 = vpack.c.b16 %v1460, %v1443
      %v1954 = vpack.c.b16 %v1461, %v1444
      %v1955 = vpack.c.b16 %v1462, %v1445
      %v1956 = vpack.c.b16 %v1463, %v1446
      %v1957 = vpack.c.b16 %v1464, %v1447
      %v1958 = vpack.c.b16 %v1465, %v1448
      %v1959 = vpack.c.b16 %v1483, %v1466
      %v1960 = vpack.c.b16 %v1484, %v1467
      %v1961 = vpack.c.b16 %v1485, %v1468
      %v1962 = vpack.c.b16 %v1486, %v1469
      %v1963 = vpack.c.b16 %v1487, %v1470
      %v1964 = vpack.c.b16 %v1488, %v1471
      %v1965 = vpack.c.b16 %v1489, %v1472
      %v1966 = vpack.c.b16 %v1490, %v1473
      %v1967 = vpack.c.b16 %v1491, %v1474
      %v1968 = vpack.c.b16 %v1492, %v1475
      %v1969 = vpack.c.b16 %v1493, %v1476
      %v1970 = vpack.c.b16 %v1494, %v1477
      %v1971 = vpack.c.b16 %v1495, %v1478
      %v1972 = vpack.c.b16 %v1496, %v1479
      %v1973 = vpack.c.b16 %v1497, %v1480
      %v1974 = vpack.c.b16 %v1498, %v1481
      %v1975 = vpack.c.b16 %v1499, %v1482
      %v1976 = vpack.c.b16 %v1517, %v1500
      %v1977 = vpack.c.b16 %v1518, %v1501
      %v1978 = vpack.c.b16 %v1519, %v1502
      %v1979 = vpack.c.b16 %v1520, %v1503
      %v1980 = vpack.c.b16 %v1521, %v1504
      %v1981 = vpack.c.b16 %v1522, %v1505
      %v1982 = vpack.c.b16 %v1523, %v1506
      %v1983 = vpack.c.b16 %v1524, %v1507
      %v1984 = vpack.c.b16 %v1525, %v1508
      %v1985 = vpack.c.b16 %v1526, %v1509
      %v1986 = vpack.c.b16 %v1527, %v1510
      %v1987 = vpack.c.b16 %v1528, %v1511
      %v1988 = vpack.c.b16 %v1529, %v1512
      %v1989 = vpack.c.b16 %v1530, %v1513
      %v1990 = vpack.c.b16 %v1531, %v1514
      %v1991 = vpack.c.b16 %v1532, %v1515
      %v1992 = vpack.c.b16 %v1533, %v1516
      %v1993 = vpack.c.b16 %v1551, %v1534
      %v1994 = vpack.c.b16 %v1552, %v1535
      %v1995 = vpack.c.b16 %v1553, %v1536
      %v1996 = vpack.c.b16 %v1554, %v1537
      %v1997 = vpack.c.b16 %v1555, %v1538
      %v1998 = vpack.c.b16 %v1556, %v1539
      %v1999 = vpack.c.b16 %v1557, %v1540
      %v2000 = vpack.c.b16 %v1558, %v1541
      %v2001 = vpack.c.b16 %v1559, %v1542
      %v2002 = vpack.c.b16 %v1560, %v1543
      %v2003 = vpack.c.b16 %v1561, %v1544
      %v2004 = vpack.c.b16 %v1562, %v1545
      %v2005 = vpack.c.b16 %v1563, %v1546
      %v2006 = vpack.c.b16 %v1564, %v1547
      %v2007 = vpack.c.b16 %v1565, %v1548
      %v2008 = vpack.c.b16 %v1566, %v1549
      %v2009 = vpack.c.b16 %v1567, %v1550
      %v2010 = vpack.c.b16 %v1585, %v1568
      %v2011 = vpack.c.b16 %v1586, %v1569
      %v2012 = vpack.c.b16 %v1587, %v1570
      %v2013 = vpack.c.b16 %v1588, %v1571
      %v2014 = vpack.c.b16 %v1589, %v1572
      %v2015 = vpack.c.b16 %v1590, %v1573
      %v2016 = vpack.c.b16 %v1591, %v1574
      %v2017 = vpack.c.b16 %v1592, %v1575
      %v2018 = vpack.c.b16 %v1593, %v1576
      %v2019 = vpack.c.b16 %v1594, %v1577
      %v2020 = vpack.c.b16 %v1595, %v1578
      %v2021 = vpack.c.b16 %v1596, %v1579
      %v2022 = vpack.c.b16 %v1597, %v1580
      %v2023 = vpack.c.b16 %v1598, %v1581
      %v2024 = vpack.c.b16 %v1599, %v1582
      %v2025 = vpack.c.b16 %v1600, %v1583
      %v2026 = vpack.c.b16 %v1601, %v1584
      %v2027 = vpack.c.b16 %v1619, %v1602
      %v2028 = vpack.c.b16 %v1620, %v1603
      %v2029 = vpack.c.b16 %v1621, %v1604
      %v2030 = vpack.c.b16 %v1622, %v1605
      %v2031 = vpack.c.b16 %v1623, %v1606
      %v2032 = vpack.c.b16 %v1624, %v1607
      %v2033 = vpack.c.b16 %v1625, %v1608
      %v2034 = vpack.c.b16 %v1626, %v1609
      %v2035 = vpack.c.b16 %v1627, %v1610
      %v2036 = vpack.c.b16 %v1628, %v1611
      %v2037 = vpack.c.b16 %v1629, %v1612
      %v2038 = vpack.c.b16 %v1630, %v1613
      %v2039 = vpack.c.b16 %v1631, %v1614
      %v2040 = vpack.c.b16 %v1632, %v1615
      %v2041 = vpack.c.b16 %v1633, %v1616
      %v2042 = vpack.c.b16 %v1634, %v1617
      %v2043 = vpack.c.b16 %v1635, %v1618
      %v2044 = vpack.c.b16 %v1653, %v1636
      %v2045 = vpack.c.b16 %v1654, %v1637
      %v2046 = vpack.c.b16 %v1655, %v1638
      %v2047 = vpack.c.b16 %v1656, %v1639
      %v2048 = vpack.c.b16 %v1657, %v1640
      %v2049 = vpack.c.b16 %v1658, %v1641
      %v2050 = vpack.c.b16 %v1659, %v1642
      %v2051 = vpack.c.b16 %v1660, %v1643
      %v2052 = vpack.c.b16 %v1661, %v1644
      %v2053 = vpack.c.b16 %v1662, %v1645
      %v2054 = vpack.c.b16 %v1663, %v1646
      %v2055 = vpack.c.b16 %v1664, %v1647
      %v2056 = vpack.c.b16 %v1665, %v1648
      %v2057 = vpack.c.b16 %v1666, %v1649
      %v2058 = vpack.c.b16 %v1667, %v1650
      %v2059 = vpack.c.b16 %v1668, %v1651
      %v2060 = vpack.c.b16 %v1669, %v1652
      %v2061 = vpack.c.b16 %v1687, %v1670
      %v2062 = vpack.c.b16 %v1688, %v1671
      %v2063 = vpack.c.b16 %v1689, %v1672
      %v2064 = vpack.c.b16 %v1690, %v1673
      %v2065 = vpack.c.b16 %v1691, %v1674
      %v2066 = vpack.c.b16 %v1692, %v1675
      %v2067 = vpack.c.b16 %v1693, %v1676
      %v2068 = vpack.c.b16 %v1694, %v1677
      %v2069 = vpack.c.b16 %v1695, %v1678
      %v2070 = vpack.c.b16 %v1696, %v1679
      %v2071 = vpack.c.b16 %v1697, %v1680
      %v2072 = vpack.c.b16 %v1698, %v1681
      %v2073 = vpack.c.b16 %v1699, %v1682
      %v2074 = vpack.c.b16 %v1700, %v1683
      %v2075 = vpack.c.b16 %v1701, %v1684
      %v2076 = vpack.c.b16 %v1702, %v1685
      %v2077 = vpack.c.b16 %v1703, %v1686
      %v2078 = vpack.c.b16 %v1721, %v1704
      %v2079 = vpack.c.b16 %v1722, %v1705
      %v2080 = vpack.c.b16 %v1723, %v1706
      %v2081 = vpack.c.b16 %v1724, %v1707
      %v2082 = vpack.c.b16 %v1725, %v1708
      %v2083 = vpack.c.b16 %v1726, %v1709
      %v2084 = vpack.c.b16 %v1727, %v1710
      %v2085 = vpack.c.b16 %v1728, %v1711
      %v2086 = vpack.c.b16 %v1729, %v1712
      %v2087 = vpack.c.b16 %v1730, %v1713
      %v2088 = vpack.c.b16 %v1731, %v1714
      %v2089 = vpack.c.b16 %v1732, %v1715
      %v2090 = vpack.c.b16 %v1733, %v1716
      %v2091 = vpack.c.b16 %v1734, %v1717
      %v2092 = vpack.c.b16 %v1735, %v1718
      %v2093 = vpack.c.b16 %v1736, %v1719
      %v2094 = vpack.c.b16 %v1737, %v1720
      %v2095 = vpack.c.b16 %v1755, %v1738
      %v2096 = vpack.c.b16 %v1756, %v1739
      %v2097 = vpack.c.b16 %v1757, %v1740
      %v2098 = vpack.c.b16 %v1758, %v1741
      %v2099 = vpack.c.b16 %v1759, %v1742
      %v2100 = vpack.c.b16 %v1760, %v1743
      %v2101 = vpack.c.b16 %v1761, %v1744
      %v2102 = vpack.c.b16 %v1762, %v1745
      %v2103 = vpack.c.b16 %v1763, %v1746
      %v2104 = vpack.c.b16 %v1764, %v1747
      %v2105 = vpack.c.b16 %v1765, %v1748
      %v2106 = vpack.c.b16 %v1766, %v1749
      %v2107 = vpack.c.b16 %v1767, %v1750
      %v2108 = vpack.c.b16 %v1768, %v1751
      %v2109 = vpack.c.b16 %v1769, %v1752
      %v2110 = vpack.c.b16 %v1770, %v1753
      %v2111 = vpack.c.b16 %v1771, %v1754
      %v2112 = vpack.c.b16 %v1772, %v1772
      %v2113 = vpack.c.b16 %v1773, %v1773
      %v2114 = vpack.c.b16 %v1774, %v1774
      %v2115 = vpack.c.b16 %v1775, %v1775
      %v2116 = vpack.c.b16 %v1776, %v1776
      %v2117 = vpack.c.b16 %v1777, %v1777
      %v2118 = vpack.c.b16 %v1778, %v1778
      %v2119 = vpack.c.b16 %v1779, %v1779
      %v2120 = vpack.c.b16 %v1780, %v1780
      %v2121 = vpack.c.b16 %v1781, %v1781
      %v2122 = vpack.c.b16 %v1782, %v1782
      %v2123 = vpack.c.b16 %v1783, %v1783
      %v2124 = vpack.c.b16 %v1784, %v1784
      %v2125 = vpack.c.b16 %v1785, %v1785
      %v2126 = vpack.c.b16 %v1786, %v1786
      %v2127 = vpack.c.b16 %v1787, %v1787
      %v2128 = vpack.c.b16 %v1788, %v1788
      %vm2452 = vcmask 408576
      %v2454 = vsel %vm2452, %v737, 0
      %v2457 = vsel %vm2452, %v740, 0
      %v2460 = vsel %vm2452, %v743, 0
      %v2463 = vsel %vm2452, %v746, 0
      %v2466 = vsel %vm2452, %v749, 0
      %v2469 = vsel %vm2452, %v752, 0
      %v2472 = vsel %vm2452, %v755, 0
      %v2475 = vsel %vm2452, %v758, 0
      %vm2477 = vcmask 1040384
      %v2479 = vsel %vm2477, %v2112, 0
      %v2482 = vsel %vm2477, %v2113, 0
      %v2485 = vsel %vm2477, %v2114, 0
      %v2488 = vsel %vm2477, %v2115, 0
      %v2491 = vsel %vm2477, %v2116, 0
      %v2494 = vsel %vm2477, %v2117, 0
      %v2497 = vsel %vm2477, %v2118, 0
      %v2500 = vsel %vm2477, %v2119, 0
      %v2503 = vsel %vm2477, %v2120, 0
      %v2506 = vsel %vm2477, %v2121, 0
      %v2509 = vsel %vm2477, %v2122, 0
      %v2512 = vsel %vm2477, %v2123, 0
      %v2515 = vsel %vm2477, %v2124, 0
      %v2518 = vsel %vm2477, %v2125, 0
      %v2521 = vsel %vm2477, %v2126, 0
      %v2524 = vsel %vm2477, %v2127, 0
      %v2527 = vsel %vm2477, %v2128, 0
      %2529 = vmatpush.bf16.msra.mxu0 %v1908
      %2530 = vmatpush.bf16.msra.mxu0 %v1891
      %2531 = vmatpush.bf16.msra.mxu0 %v1874
      %2532 = vmatpush.bf16.msra.mxu0 %v1857
      %2533 = vmatpush.bf16.msra.mxu0 %v1840
      %2534 = vmatpush.bf16.msra.mxu0 %v1823
      %2535 = vmatpush.bf16.msra.mxu0 %v1806
      %2536 = vmatpush.bf16.msra.mxu0 %v1789
      %2537 = vmatmul.bf16.gmra.mxu0 %v735
      %v2538 = vpop.f32.mrf.mxu0
      %v2539 = vadd.f32 %v621, %v2538
      %v2540 = vpop.f32.mrf.mxu0
      %v2541 = vadd.f32 %v621, %v2540
      %2542 = vmatmul.bf16.gmra.mxu0 %v738
      %v2543 = vpop.f32.mrf.mxu0
      %v2544 = vadd.f32 %v621, %v2543
      %v2545 = vpop.f32.mrf.mxu0
      %v2546 = vadd.f32 %v621, %v2545
      %2547 = vmatmul.bf16.gmra.mxu0 %v741
      %v2548 = vpop.f32.mrf.mxu0
      %v2549 = vadd.f32 %v621, %v2548
      %v2550 = vpop.f32.mrf.mxu0
      %v2551 = vadd.f32 %v621, %v2550
      %2552 = vmatmul.bf16.gmra.mxu0 %v744
      %v2553 = vpop.f32.mrf.mxu0
      %v2554 = vadd.f32 %v621, %v2553
      %v2555 = vpop.f32.mrf.mxu0
      %v2556 = vadd.f32 %v621, %v2555
      %2557 = vmatmul.bf16.gmra.mxu0 %v747
      %v2558 = vpop.f32.mrf.mxu0
      %v2559 = vadd.f32 %v621, %v2558
      %v2560 = vpop.f32.mrf.mxu0
      %v2561 = vadd.f32 %v621, %v2560
      %2562 = vmatmul.bf16.gmra.mxu0 %v750
      %v2563 = vpop.f32.mrf.mxu0
      %v2564 = vadd.f32 %v621, %v2563
      %v2565 = vpop.f32.mrf.mxu0
      %v2566 = vadd.f32 %v621, %v2565
      %2567 = vmatmul.bf16.gmra.mxu0 %v753
      %v2568 = vpop.f32.mrf.mxu0
      %v2569 = vadd.f32 %v621, %v2568
      %v2570 = vpop.f32.mrf.mxu0
      %v2571 = vadd.f32 %v621, %v2570
      %2572 = vmatmul.bf16.gmra.mxu0 %v756
      %v2573 = vpop.f32.mrf.mxu0
      %v2574 = vadd.f32 %v621, %v2573
      %v2575 = vpop.f32.mrf.mxu0
      %v2576 = vadd.f32 %v621, %v2575
      %2577 = vdwg.mxu0
      %2578 = vmatpush.bf16.msra.mxu0 %v2044
      %2579 = vmatpush.bf16.msra.mxu0 %v2027
      %2580 = vmatpush.bf16.msra.mxu0 %v2010
      %2581 = vmatpush.bf16.msra.mxu0 %v1993
      %2582 = vmatpush.bf16.msra.mxu0 %v1976
      %2583 = vmatpush.bf16.msra.mxu0 %v1959
      %2584 = vmatpush.bf16.msra.mxu0 %v1942
      %2585 = vmatpush.bf16.msra.mxu0 %v1925
      %2586 = vmatmul.bf16.gmra.mxu0 %v736
      %v2587 = vpop.f32.mrf.mxu0
      %v2588 = vadd.f32 %v2539, %v2587
      %v2589 = vpop.f32.mrf.mxu0
      %v2590 = vadd.f32 %v2541, %v2589
      %2591 = vmatmul.bf16.gmra.mxu0 %v739
      %v2592 = vpop.f32.mrf.mxu0
      %v2593 = vadd.f32 %v2544, %v2592
      %v2594 = vpop.f32.mrf.mxu0
      %v2595 = vadd.f32 %v2546, %v2594
      %2596 = vmatmul.bf16.gmra.mxu0 %v742
      %v2597 = vpop.f32.mrf.mxu0
      %v2598 = vadd.f32 %v2549, %v2597
      %v2599 = vpop.f32.mrf.mxu0
      %v2600 = vadd.f32 %v2551, %v2599
      %2601 = vmatmul.bf16.gmra.mxu0 %v745
      %v2602 = vpop.f32.mrf.mxu0
      %v2603 = vadd.f32 %v2554, %v2602
      %v2604 = vpop.f32.mrf.mxu0
      %v2605 = vadd.f32 %v2556, %v2604
      %2606 = vmatmul.bf16.gmra.mxu0 %v748
      %v2607 = vpop.f32.mrf.mxu0
      %v2608 = vadd.f32 %v2559, %v2607
      %v2609 = vpop.f32.mrf.mxu0
      %v2610 = vadd.f32 %v2561, %v2609
      %2611 = vmatmul.bf16.gmra.mxu0 %v751
      %v2612 = vpop.f32.mrf.mxu0
      %v2613 = vadd.f32 %v2564, %v2612
      %v2614 = vpop.f32.mrf.mxu0
      %v2615 = vadd.f32 %v2566, %v2614
      %2616 = vmatmul.bf16.gmra.mxu0 %v754
      %v2617 = vpop.f32.mrf.mxu0
      %v2618 = vadd.f32 %v2569, %v2617
      %v2619 = vpop.f32.mrf.mxu0
      %v2620 = vadd.f32 %v2571, %v2619
      %2621 = vmatmul.bf16.gmra.mxu0 %v757
      %v2622 = vpop.f32.mrf.mxu0
      %v2623 = vadd.f32 %v2574, %v2622
      %v2624 = vpop.f32.mrf.mxu0
      %v2625 = vadd.f32 %v2576, %v2624
      %2626 = vdwg.mxu0
      %2627 = vmatpush.bf16.msra.mxu0 0
      %2628 = vmatpush.bf16.msra.mxu0 0
      %2629 = vmatpush.bf16.msra.mxu0 0
      %2630 = vmatpush.bf16.msra.mxu0 0
      %2631 = vmatpush.bf16.msra.mxu0 %v2479
      %2632 = vmatpush.bf16.msra.mxu0 %v2095
      %2633 = vmatpush.bf16.msra.mxu0 %v2078
      %2634 = vmatpush.bf16.msra.mxu0 %v2061
      %2635 = vmatmul.bf16.gmra.mxu0 %v2454
      %v2636 = vpop.f32.mrf.mxu0
      %v2637 = vadd.f32 %v2588, %v2636
      %v2638 = vpop.f32.mrf.mxu0
      %v2639 = vadd.f32 %v2590, %v2638
      %2640 = vmatmul.bf16.gmra.mxu0 %v2457
      %v2641 = vpop.f32.mrf.mxu0
      %v2642 = vadd.f32 %v2593, %v2641
      %v2643 = vpop.f32.mrf.mxu0
      %v2644 = vadd.f32 %v2595, %v2643
      %2645 = vmatmul.bf16.gmra.mxu0 %v2460
      %v2646 = vpop.f32.mrf.mxu0
      %v2647 = vadd.f32 %v2598, %v2646
      %v2648 = vpop.f32.mrf.mxu0
      %v2649 = vadd.f32 %v2600, %v2648
      %2650 = vmatmul.bf16.gmra.mxu0 %v2463
      %v2651 = vpop.f32.mrf.mxu0
      %v2652 = vadd.f32 %v2603, %v2651
      %v2653 = vpop.f32.mrf.mxu0
      %v2654 = vadd.f32 %v2605, %v2653
      %2655 = vmatmul.bf16.gmra.mxu0 %v2466
      %v2656 = vpop.f32.mrf.mxu0
      %v2657 = vadd.f32 %v2608, %v2656
      %v2658 = vpop.f32.mrf.mxu0
      %v2659 = vadd.f32 %v2610, %v2658
      %2660 = vmatmul.bf16.gmra.mxu0 %v2469
      %v2661 = vpop.f32.mrf.mxu0
      %v2662 = vadd.f32 %v2613, %v2661
      %v2663 = vpop.f32.mrf.mxu0
      %v2664 = vadd.f32 %v2615, %v2663
      %2665 = vmatmul.bf16.gmra.mxu0 %v2472
      %v2666 = vpop.f32.mrf.mxu0
      %v2667 = vadd.f32 %v2618, %v2666
      %v2668 = vpop.f32.mrf.mxu0
      %v2669 = vadd.f32 %v2620, %v2668
      %2670 = vmatmul.bf16.gmra.mxu0 %v2475
      %v2671 = vpop.f32.mrf.mxu0
      %v2672 = vadd.f32 %v2623, %v2671
      %v2673 = vpop.f32.mrf.mxu0
      %v2674 = vadd.f32 %v2625, %v2673
      %2675 = vdwg.mxu0
      %2676 = vmatpush.bf16.msra.mxu0 %v1909
      %2677 = vmatpush.bf16.msra.mxu0 %v1892
      %2678 = vmatpush.bf16.msra.mxu0 %v1875
      %2679 = vmatpush.bf16.msra.mxu0 %v1858
      %2680 = vmatpush.bf16.msra.mxu0 %v1841
      %2681 = vmatpush.bf16.msra.mxu0 %v1824
      %2682 = vmatpush.bf16.msra.mxu0 %v1807
      %2683 = vmatpush.bf16.msra.mxu0 %v1790
      %2684 = vmatmul.bf16.gmra.mxu0 %v735
      %v2685 = vpop.f32.mrf.mxu0
      %v2686 = vadd.f32 %v622, %v2685
      %v2687 = vpop.f32.mrf.mxu0
      %v2688 = vadd.f32 %v622, %v2687
      %2689 = vmatmul.bf16.gmra.mxu0 %v738
      %v2690 = vpop.f32.mrf.mxu0
      %v2691 = vadd.f32 %v622, %v2690
      %v2692 = vpop.f32.mrf.mxu0
      %v2693 = vadd.f32 %v622, %v2692
      %2694 = vmatmul.bf16.gmra.mxu0 %v741
      %v2695 = vpop.f32.mrf.mxu0
      %v2696 = vadd.f32 %v622, %v2695
      %v2697 = vpop.f32.mrf.mxu0
      %v2698 = vadd.f32 %v622, %v2697
      %2699 = vmatmul.bf16.gmra.mxu0 %v744
      %v2700 = vpop.f32.mrf.mxu0
      %v2701 = vadd.f32 %v622, %v2700
      %v2702 = vpop.f32.mrf.mxu0
      %v2703 = vadd.f32 %v622, %v2702
      %2704 = vmatmul.bf16.gmra.mxu0 %v747
      %v2705 = vpop.f32.mrf.mxu0
      %v2706 = vadd.f32 %v622, %v2705
      %v2707 = vpop.f32.mrf.mxu0
      %v2708 = vadd.f32 %v622, %v2707
      %2709 = vmatmul.bf16.gmra.mxu0 %v750
      %v2710 = vpop.f32.mrf.mxu0
      %v2711 = vadd.f32 %v622, %v2710
      %v2712 = vpop.f32.mrf.mxu0
      %v2713 = vadd.f32 %v622, %v2712
      %2714 = vmatmul.bf16.gmra.mxu0 %v753
      %v2715 = vpop.f32.mrf.mxu0
      %v2716 = vadd.f32 %v622, %v2715
      %v2717 = vpop.f32.mrf.mxu0
      %v2718 = vadd.f32 %v622, %v2717
      %2719 = vmatmul.bf16.gmra.mxu0 %v756
      %v2720 = vpop.f32.mrf.mxu0
      %v2721 = vadd.f32 %v622, %v2720
      %v2722 = vpop.f32.mrf.mxu0
      %v2723 = vadd.f32 %v622, %v2722
      %2724 = vdwg.mxu0
      %2725 = vmatpush.bf16.msra.mxu0 %v2045
      %2726 = vmatpush.bf16.msra.mxu0 %v2028
      %2727 = vmatpush.bf16.msra.mxu0 %v2011
      %2728 = vmatpush.bf16.msra.mxu0 %v1994
      %2729 = vmatpush.bf16.msra.mxu0 %v1977
      %2730 = vmatpush.bf16.msra.mxu0 %v1960
      %2731 = vmatpush.bf16.msra.mxu0 %v1943
      %2732 = vmatpush.bf16.msra.mxu0 %v1926
      %2733 = vmatmul.bf16.gmra.mxu0 %v736
      %v2734 = vpop.f32.mrf.mxu0
      %v2735 = vadd.f32 %v2686, %v2734
      %v2736 = vpop.f32.mrf.mxu0
      %v2737 = vadd.f32 %v2688, %v2736
      %2738 = vmatmul.bf16.gmra.mxu0 %v739
      %v2739 = vpop.f32.mrf.mxu0
      %v2740 = vadd.f32 %v2691, %v2739
      %v2741 = vpop.f32.mrf.mxu0
      %v2742 = vadd.f32 %v2693, %v2741
      %2743 = vmatmul.bf16.gmra.mxu0 %v742
      %v2744 = vpop.f32.mrf.mxu0
      %v2745 = vadd.f32 %v2696, %v2744
      %v2746 = vpop.f32.mrf.mxu0
      %v2747 = vadd.f32 %v2698, %v2746
      %2748 = vmatmul.bf16.gmra.mxu0 %v745
      %v2749 = vpop.f32.mrf.mxu0
      %v2750 = vadd.f32 %v2701, %v2749
      %v2751 = vpop.f32.mrf.mxu0
      %v2752 = vadd.f32 %v2703, %v2751
      %2753 = vmatmul.bf16.gmra.mxu0 %v748
      %v2754 = vpop.f32.mrf.mxu0
      %v2755 = vadd.f32 %v2706, %v2754
      %v2756 = vpop.f32.mrf.mxu0
      %v2757 = vadd.f32 %v2708, %v2756
      %2758 = vmatmul.bf16.gmra.mxu0 %v751
      %v2759 = vpop.f32.mrf.mxu0
      %v2760 = vadd.f32 %v2711, %v2759
      %v2761 = vpop.f32.mrf.mxu0
      %v2762 = vadd.f32 %v2713, %v2761
      %2763 = vmatmul.bf16.gmra.mxu0 %v754
      %v2764 = vpop.f32.mrf.mxu0
      %v2765 = vadd.f32 %v2716, %v2764
      %v2766 = vpop.f32.mrf.mxu0
      %v2767 = vadd.f32 %v2718, %v2766
      %2768 = vmatmul.bf16.gmra.mxu0 %v757
      %v2769 = vpop.f32.mrf.mxu0
      %v2770 = vadd.f32 %v2721, %v2769
      %v2771 = vpop.f32.mrf.mxu0
      %v2772 = vadd.f32 %v2723, %v2771
      %2773 = vdwg.mxu0
      %2774 = vmatpush.bf16.msra.mxu0 0
      %2775 = vmatpush.bf16.msra.mxu0 0
      %2776 = vmatpush.bf16.msra.mxu0 0
      %2777 = vmatpush.bf16.msra.mxu0 0
      %2778 = vmatpush.bf16.msra.mxu0 %v2482
      %2779 = vmatpush.bf16.msra.mxu0 %v2096
      %2780 = vmatpush.bf16.msra.mxu0 %v2079
      %2781 = vmatpush.bf16.msra.mxu0 %v2062
      %2782 = vmatmul.bf16.gmra.mxu0 %v2454
      %v2783 = vpop.f32.mrf.mxu0
      %v2784 = vadd.f32 %v2735, %v2783
      %v2785 = vpop.f32.mrf.mxu0
      %v2786 = vadd.f32 %v2737, %v2785
      %2787 = vmatmul.bf16.gmra.mxu0 %v2457
      %v2788 = vpop.f32.mrf.mxu0
      %v2789 = vadd.f32 %v2740, %v2788
      %v2790 = vpop.f32.mrf.mxu0
      %v2791 = vadd.f32 %v2742, %v2790
      %2792 = vmatmul.bf16.gmra.mxu0 %v2460
      %v2793 = vpop.f32.mrf.mxu0
      %v2794 = vadd.f32 %v2745, %v2793
      %v2795 = vpop.f32.mrf.mxu0
      %v2796 = vadd.f32 %v2747, %v2795
      %2797 = vmatmul.bf16.gmra.mxu0 %v2463
      %v2798 = vpop.f32.mrf.mxu0
      %v2799 = vadd.f32 %v2750, %v2798
      %v2800 = vpop.f32.mrf.mxu0
      %v2801 = vadd.f32 %v2752, %v2800
      %2802 = vmatmul.bf16.gmra.mxu0 %v2466
      %v2803 = vpop.f32.mrf.mxu0
      %v2804 = vadd.f32 %v2755, %v2803
      %v2805 = vpop.f32.mrf.mxu0
      %v2806 = vadd.f32 %v2757, %v2805
      %2807 = vmatmul.bf16.gmra.mxu0 %v2469
      %v2808 = vpop.f32.mrf.mxu0
      %v2809 = vadd.f32 %v2760, %v2808
      %v2810 = vpop.f32.mrf.mxu0
      %v2811 = vadd.f32 %v2762, %v2810
      %2812 = vmatmul.bf16.gmra.mxu0 %v2472
      %v2813 = vpop.f32.mrf.mxu0
      %v2814 = vadd.f32 %v2765, %v2813
      %v2815 = vpop.f32.mrf.mxu0
      %v2816 = vadd.f32 %v2767, %v2815
      %2817 = vmatmul.bf16.gmra.mxu0 %v2475
      %v2818 = vpop.f32.mrf.mxu0
      %v2819 = vadd.f32 %v2770, %v2818
      %v2820 = vpop.f32.mrf.mxu0
      %v2821 = vadd.f32 %v2772, %v2820
      %2822 = vdwg.mxu0
      %2823 = vmatpush.bf16.msra.mxu0 %v1910
      %2824 = vmatpush.bf16.msra.mxu0 %v1893
      %2825 = vmatpush.bf16.msra.mxu0 %v1876
      %2826 = vmatpush.bf16.msra.mxu0 %v1859
      %2827 = vmatpush.bf16.msra.mxu0 %v1842
      %2828 = vmatpush.bf16.msra.mxu0 %v1825
      %2829 = vmatpush.bf16.msra.mxu0 %v1808
      %2830 = vmatpush.bf16.msra.mxu0 %v1791
      %2831 = vmatmul.bf16.gmra.mxu0 %v735
      %v2832 = vpop.f32.mrf.mxu0
      %v2833 = vadd.f32 %v623, %v2832
      %v2834 = vpop.f32.mrf.mxu0
      %v2835 = vadd.f32 %v623, %v2834
      %2836 = vmatmul.bf16.gmra.mxu0 %v738
      %v2837 = vpop.f32.mrf.mxu0
      %v2838 = vadd.f32 %v623, %v2837
      %v2839 = vpop.f32.mrf.mxu0
      %v2840 = vadd.f32 %v623, %v2839
      %2841 = vmatmul.bf16.gmra.mxu0 %v741
      %v2842 = vpop.f32.mrf.mxu0
      %v2843 = vadd.f32 %v623, %v2842
      %v2844 = vpop.f32.mrf.mxu0
      %v2845 = vadd.f32 %v623, %v2844
      %2846 = vmatmul.bf16.gmra.mxu0 %v744
      %v2847 = vpop.f32.mrf.mxu0
      %v2848 = vadd.f32 %v623, %v2847
      %v2849 = vpop.f32.mrf.mxu0
      %v2850 = vadd.f32 %v623, %v2849
      %2851 = vmatmul.bf16.gmra.mxu0 %v747
      %v2852 = vpop.f32.mrf.mxu0
      %v2853 = vadd.f32 %v623, %v2852
      %v2854 = vpop.f32.mrf.mxu0
      %v2855 = vadd.f32 %v623, %v2854
      %2856 = vmatmul.bf16.gmra.mxu0 %v750
      %v2857 = vpop.f32.mrf.mxu0
      %v2858 = vadd.f32 %v623, %v2857
      %v2859 = vpop.f32.mrf.mxu0
      %v2860 = vadd.f32 %v623, %v2859
      %2861 = vmatmul.bf16.gmra.mxu0 %v753
      %v2862 = vpop.f32.mrf.mxu0
      %v2863 = vadd.f32 %v623, %v2862
      %v2864 = vpop.f32.mrf.mxu0
      %v2865 = vadd.f32 %v623, %v2864
      %2866 = vmatmul.bf16.gmra.mxu0 %v756
      %v2867 = vpop.f32.mrf.mxu0
      %v2868 = vadd.f32 %v623, %v2867
      %v2869 = vpop.f32.mrf.mxu0
      %v2870 = vadd.f32 %v623, %v2869
      %2871 = vdwg.mxu0
      %2872 = vmatpush.bf16.msra.mxu0 %v2046
      %2873 = vmatpush.bf16.msra.mxu0 %v2029
      %2874 = vmatpush.bf16.msra.mxu0 %v2012
      %2875 = vmatpush.bf16.msra.mxu0 %v1995
      %2876 = vmatpush.bf16.msra.mxu0 %v1978
      %2877 = vmatpush.bf16.msra.mxu0 %v1961
      %2878 = vmatpush.bf16.msra.mxu0 %v1944
      %2879 = vmatpush.bf16.msra.mxu0 %v1927
      %2880 = vmatmul.bf16.gmra.mxu0 %v736
      %v2881 = vpop.f32.mrf.mxu0
      %v2882 = vadd.f32 %v2833, %v2881
      %v2883 = vpop.f32.mrf.mxu0
      %v2884 = vadd.f32 %v2835, %v2883
      %2885 = vmatmul.bf16.gmra.mxu0 %v739
      %v2886 = vpop.f32.mrf.mxu0
      %v2887 = vadd.f32 %v2838, %v2886
      %v2888 = vpop.f32.mrf.mxu0
      %v2889 = vadd.f32 %v2840, %v2888
      %2890 = vmatmul.bf16.gmra.mxu0 %v742
      %v2891 = vpop.f32.mrf.mxu0
      %v2892 = vadd.f32 %v2843, %v2891
      %v2893 = vpop.f32.mrf.mxu0
      %v2894 = vadd.f32 %v2845, %v2893
      %2895 = vmatmul.bf16.gmra.mxu0 %v745
      %v2896 = vpop.f32.mrf.mxu0
      %v2897 = vadd.f32 %v2848, %v2896
      %v2898 = vpop.f32.mrf.mxu0
      %v2899 = vadd.f32 %v2850, %v2898
      %2900 = vmatmul.bf16.gmra.mxu0 %v748
      %v2901 = vpop.f32.mrf.mxu0
      %v2902 = vadd.f32 %v2853, %v2901
      %v2903 = vpop.f32.mrf.mxu0
      %v2904 = vadd.f32 %v2855, %v2903
      %2905 = vmatmul.bf16.gmra.mxu0 %v751
      %v2906 = vpop.f32.mrf.mxu0
      %v2907 = vadd.f32 %v2858, %v2906
      %v2908 = vpop.f32.mrf.mxu0
      %v2909 = vadd.f32 %v2860, %v2908
      %2910 = vmatmul.bf16.gmra.mxu0 %v754
      %v2911 = vpop.f32.mrf.mxu0
      %v2912 = vadd.f32 %v2863, %v2911
      %v2913 = vpop.f32.mrf.mxu0
      %v2914 = vadd.f32 %v2865, %v2913
      %2915 = vmatmul.bf16.gmra.mxu0 %v757
      %v2916 = vpop.f32.mrf.mxu0
      %v2917 = vadd.f32 %v2868, %v2916
      %v2918 = vpop.f32.mrf.mxu0
      %v2919 = vadd.f32 %v2870, %v2918
      %2920 = vdwg.mxu0
      %2921 = vmatpush.bf16.msra.mxu0 0
      %2922 = vmatpush.bf16.msra.mxu0 0
      %2923 = vmatpush.bf16.msra.mxu0 0
      %2924 = vmatpush.bf16.msra.mxu0 0
      %2925 = vmatpush.bf16.msra.mxu0 %v2485
      %2926 = vmatpush.bf16.msra.mxu0 %v2097
      %2927 = vmatpush.bf16.msra.mxu0 %v2080
      %2928 = vmatpush.bf16.msra.mxu0 %v2063
      %2929 = vmatmul.bf16.gmra.mxu0 %v2454
      %v2930 = vpop.f32.mrf.mxu0
      %v2931 = vadd.f32 %v2882, %v2930
      %v2932 = vpop.f32.mrf.mxu0
      %v2933 = vadd.f32 %v2884, %v2932
      %2934 = vmatmul.bf16.gmra.mxu0 %v2457
      %v2935 = vpop.f32.mrf.mxu0
      %v2936 = vadd.f32 %v2887, %v2935
      %v2937 = vpop.f32.mrf.mxu0
      %v2938 = vadd.f32 %v2889, %v2937
      %2939 = vmatmul.bf16.gmra.mxu0 %v2460
      %v2940 = vpop.f32.mrf.mxu0
      %v2941 = vadd.f32 %v2892, %v2940
      %v2942 = vpop.f32.mrf.mxu0
      %v2943 = vadd.f32 %v2894, %v2942
      %2944 = vmatmul.bf16.gmra.mxu0 %v2463
      %v2945 = vpop.f32.mrf.mxu0
      %v2946 = vadd.f32 %v2897, %v2945
      %v2947 = vpop.f32.mrf.mxu0
      %v2948 = vadd.f32 %v2899, %v2947
      %2949 = vmatmul.bf16.gmra.mxu0 %v2466
      %v2950 = vpop.f32.mrf.mxu0
      %v2951 = vadd.f32 %v2902, %v2950
      %v2952 = vpop.f32.mrf.mxu0
      %v2953 = vadd.f32 %v2904, %v2952
      %2954 = vmatmul.bf16.gmra.mxu0 %v2469
      %v2955 = vpop.f32.mrf.mxu0
      %v2956 = vadd.f32 %v2907, %v2955
      %v2957 = vpop.f32.mrf.mxu0
      %v2958 = vadd.f32 %v2909, %v2957
      %2959 = vmatmul.bf16.gmra.mxu0 %v2472
      %v2960 = vpop.f32.mrf.mxu0
      %v2961 = vadd.f32 %v2912, %v2960
      %v2962 = vpop.f32.mrf.mxu0
      %v2963 = vadd.f32 %v2914, %v2962
      %2964 = vmatmul.bf16.gmra.mxu0 %v2475
      %v2965 = vpop.f32.mrf.mxu0
      %v2966 = vadd.f32 %v2917, %v2965
      %v2967 = vpop.f32.mrf.mxu0
      %v2968 = vadd.f32 %v2919, %v2967
      %2969 = vdwg.mxu0
      %2970 = vmatpush.bf16.msra.mxu0 %v1911
      %2971 = vmatpush.bf16.msra.mxu0 %v1894
      %2972 = vmatpush.bf16.msra.mxu0 %v1877
      %2973 = vmatpush.bf16.msra.mxu0 %v1860
      %2974 = vmatpush.bf16.msra.mxu0 %v1843
      %2975 = vmatpush.bf16.msra.mxu0 %v1826
      %2976 = vmatpush.bf16.msra.mxu0 %v1809
      %2977 = vmatpush.bf16.msra.mxu0 %v1792
      %2978 = vmatmul.bf16.gmra.mxu0 %v735
      %v2979 = vpop.f32.mrf.mxu0
      %v2980 = vadd.f32 %v624, %v2979
      %v2981 = vpop.f32.mrf.mxu0
      %v2982 = vadd.f32 %v624, %v2981
      %2983 = vmatmul.bf16.gmra.mxu0 %v738
      %v2984 = vpop.f32.mrf.mxu0
      %v2985 = vadd.f32 %v624, %v2984
      %v2986 = vpop.f32.mrf.mxu0
      %v2987 = vadd.f32 %v624, %v2986
      %2988 = vmatmul.bf16.gmra.mxu0 %v741
      %v2989 = vpop.f32.mrf.mxu0
      %v2990 = vadd.f32 %v624, %v2989
      %v2991 = vpop.f32.mrf.mxu0
      %v2992 = vadd.f32 %v624, %v2991
      %2993 = vmatmul.bf16.gmra.mxu0 %v744
      %v2994 = vpop.f32.mrf.mxu0
      %v2995 = vadd.f32 %v624, %v2994
      %v2996 = vpop.f32.mrf.mxu0
      %v2997 = vadd.f32 %v624, %v2996
      %2998 = vmatmul.bf16.gmra.mxu0 %v747
      %v2999 = vpop.f32.mrf.mxu0
      %v3000 = vadd.f32 %v624, %v2999
      %v3001 = vpop.f32.mrf.mxu0
      %v3002 = vadd.f32 %v624, %v3001
      %3003 = vmatmul.bf16.gmra.mxu0 %v750
      %v3004 = vpop.f32.mrf.mxu0
      %v3005 = vadd.f32 %v624, %v3004
      %v3006 = vpop.f32.mrf.mxu0
      %v3007 = vadd.f32 %v624, %v3006
      %3008 = vmatmul.bf16.gmra.mxu0 %v753
      %v3009 = vpop.f32.mrf.mxu0
      %v3010 = vadd.f32 %v624, %v3009
      %v3011 = vpop.f32.mrf.mxu0
      %v3012 = vadd.f32 %v624, %v3011
      %3013 = vmatmul.bf16.gmra.mxu0 %v756
      %v3014 = vpop.f32.mrf.mxu0
      %v3015 = vadd.f32 %v624, %v3014
      %v3016 = vpop.f32.mrf.mxu0
      %v3017 = vadd.f32 %v624, %v3016
      %3018 = vdwg.mxu0
      %3019 = vmatpush.bf16.msra.mxu0 %v2047
      %3020 = vmatpush.bf16.msra.mxu0 %v2030
      %3021 = vmatpush.bf16.msra.mxu0 %v2013
      %3022 = vmatpush.bf16.msra.mxu0 %v1996
      %3023 = vmatpush.bf16.msra.mxu0 %v1979
      %3024 = vmatpush.bf16.msra.mxu0 %v1962
      %3025 = vmatpush.bf16.msra.mxu0 %v1945
      %3026 = vmatpush.bf16.msra.mxu0 %v1928
      %3027 = vmatmul.bf16.gmra.mxu0 %v736
      %v3028 = vpop.f32.mrf.mxu0
      %v3029 = vadd.f32 %v2980, %v3028
      %v3030 = vpop.f32.mrf.mxu0
      %v3031 = vadd.f32 %v2982, %v3030
      %3032 = vmatmul.bf16.gmra.mxu0 %v739
      %v3033 = vpop.f32.mrf.mxu0
      %v3034 = vadd.f32 %v2985, %v3033
      %v3035 = vpop.f32.mrf.mxu0
      %v3036 = vadd.f32 %v2987, %v3035
      %3037 = vmatmul.bf16.gmra.mxu0 %v742
      %v3038 = vpop.f32.mrf.mxu0
      %v3039 = vadd.f32 %v2990, %v3038
      %v3040 = vpop.f32.mrf.mxu0
      %v3041 = vadd.f32 %v2992, %v3040
      %3042 = vmatmul.bf16.gmra.mxu0 %v745
      %v3043 = vpop.f32.mrf.mxu0
      %v3044 = vadd.f32 %v2995, %v3043
      %v3045 = vpop.f32.mrf.mxu0
      %v3046 = vadd.f32 %v2997, %v3045
      %3047 = vmatmul.bf16.gmra.mxu0 %v748
      %v3048 = vpop.f32.mrf.mxu0
      %v3049 = vadd.f32 %v3000, %v3048
      %v3050 = vpop.f32.mrf.mxu0
      %v3051 = vadd.f32 %v3002, %v3050
      %3052 = vmatmul.bf16.gmra.mxu0 %v751
      %v3053 = vpop.f32.mrf.mxu0
      %v3054 = vadd.f32 %v3005, %v3053
      %v3055 = vpop.f32.mrf.mxu0
      %v3056 = vadd.f32 %v3007, %v3055
      %3057 = vmatmul.bf16.gmra.mxu0 %v754
      %v3058 = vpop.f32.mrf.mxu0
      %v3059 = vadd.f32 %v3010, %v3058
      %v3060 = vpop.f32.mrf.mxu0
      %v3061 = vadd.f32 %v3012, %v3060
      %3062 = vmatmul.bf16.gmra.mxu0 %v757
      %v3063 = vpop.f32.mrf.mxu0
      %v3064 = vadd.f32 %v3015, %v3063
      %v3065 = vpop.f32.mrf.mxu0
      %v3066 = vadd.f32 %v3017, %v3065
      %3067 = vdwg.mxu0
      %3068 = vmatpush.bf16.msra.mxu0 0
      %3069 = vmatpush.bf16.msra.mxu0 0
      %3070 = vmatpush.bf16.msra.mxu0 0
      %3071 = vmatpush.bf16.msra.mxu0 0
      %3072 = vmatpush.bf16.msra.mxu0 %v2488
      %3073 = vmatpush.bf16.msra.mxu0 %v2098
      %3074 = vmatpush.bf16.msra.mxu0 %v2081
      %3075 = vmatpush.bf16.msra.mxu0 %v2064
      %3076 = vmatmul.bf16.gmra.mxu0 %v2454
      %v3077 = vpop.f32.mrf.mxu0
      %v3078 = vadd.f32 %v3029, %v3077
      %v3079 = vpop.f32.mrf.mxu0
      %v3080 = vadd.f32 %v3031, %v3079
      %3081 = vmatmul.bf16.gmra.mxu0 %v2457
      %v3082 = vpop.f32.mrf.mxu0
      %v3083 = vadd.f32 %v3034, %v3082
      %v3084 = vpop.f32.mrf.mxu0
      %v3085 = vadd.f32 %v3036, %v3084
      %3086 = vmatmul.bf16.gmra.mxu0 %v2460
      %v3087 = vpop.f32.mrf.mxu0
      %v3088 = vadd.f32 %v3039, %v3087
      %v3089 = vpop.f32.mrf.mxu0
      %v3090 = vadd.f32 %v3041, %v3089
      %3091 = vmatmul.bf16.gmra.mxu0 %v2463
      %v3092 = vpop.f32.mrf.mxu0
      %v3093 = vadd.f32 %v3044, %v3092
      %v3094 = vpop.f32.mrf.mxu0
      %v3095 = vadd.f32 %v3046, %v3094
      %3096 = vmatmul.bf16.gmra.mxu0 %v2466
      %v3097 = vpop.f32.mrf.mxu0
      %v3098 = vadd.f32 %v3049, %v3097
      %v3099 = vpop.f32.mrf.mxu0
      %v3100 = vadd.f32 %v3051, %v3099
      %3101 = vmatmul.bf16.gmra.mxu0 %v2469
      %v3102 = vpop.f32.mrf.mxu0
      %v3103 = vadd.f32 %v3054, %v3102
      %v3104 = vpop.f32.mrf.mxu0
      %v3105 = vadd.f32 %v3056, %v3104
      %3106 = vmatmul.bf16.gmra.mxu0 %v2472
      %v3107 = vpop.f32.mrf.mxu0
      %v3108 = vadd.f32 %v3059, %v3107
      %v3109 = vpop.f32.mrf.mxu0
      %v3110 = vadd.f32 %v3061, %v3109
      %3111 = vmatmul.bf16.gmra.mxu0 %v2475
      %v3112 = vpop.f32.mrf.mxu0
      %v3113 = vadd.f32 %v3064, %v3112
      %v3114 = vpop.f32.mrf.mxu0
      %v3115 = vadd.f32 %v3066, %v3114
      %3116 = vdwg.mxu0
      %3117 = vmatpush.bf16.msra.mxu0 %v1912
      %3118 = vmatpush.bf16.msra.mxu0 %v1895
      %3119 = vmatpush.bf16.msra.mxu0 %v1878
      %3120 = vmatpush.bf16.msra.mxu0 %v1861
      %3121 = vmatpush.bf16.msra.mxu0 %v1844
      %3122 = vmatpush.bf16.msra.mxu0 %v1827
      %3123 = vmatpush.bf16.msra.mxu0 %v1810
      %3124 = vmatpush.bf16.msra.mxu0 %v1793
      %3125 = vmatmul.bf16.gmra.mxu0 %v735
      %v3126 = vpop.f32.mrf.mxu0
      %v3127 = vadd.f32 %v625, %v3126
      %v3128 = vpop.f32.mrf.mxu0
      %v3129 = vadd.f32 %v625, %v3128
      %3130 = vmatmul.bf16.gmra.mxu0 %v738
      %v3131 = vpop.f32.mrf.mxu0
      %v3132 = vadd.f32 %v625, %v3131
      %v3133 = vpop.f32.mrf.mxu0
      %v3134 = vadd.f32 %v625, %v3133
      %3135 = vmatmul.bf16.gmra.mxu0 %v741
      %v3136 = vpop.f32.mrf.mxu0
      %v3137 = vadd.f32 %v625, %v3136
      %v3138 = vpop.f32.mrf.mxu0
      %v3139 = vadd.f32 %v625, %v3138
      %3140 = vmatmul.bf16.gmra.mxu0 %v744
      %v3141 = vpop.f32.mrf.mxu0
      %v3142 = vadd.f32 %v625, %v3141
      %v3143 = vpop.f32.mrf.mxu0
      %v3144 = vadd.f32 %v625, %v3143
      %3145 = vmatmul.bf16.gmra.mxu0 %v747
      %v3146 = vpop.f32.mrf.mxu0
      %v3147 = vadd.f32 %v625, %v3146
      %v3148 = vpop.f32.mrf.mxu0
      %v3149 = vadd.f32 %v625, %v3148
      %3150 = vmatmul.bf16.gmra.mxu0 %v750
      %v3151 = vpop.f32.mrf.mxu0
      %v3152 = vadd.f32 %v625, %v3151
      %v3153 = vpop.f32.mrf.mxu0
      %v3154 = vadd.f32 %v625, %v3153
      %3155 = vmatmul.bf16.gmra.mxu0 %v753
      %v3156 = vpop.f32.mrf.mxu0
      %v3157 = vadd.f32 %v625, %v3156
      %v3158 = vpop.f32.mrf.mxu0
      %v3159 = vadd.f32 %v625, %v3158
      %3160 = vmatmul.bf16.gmra.mxu0 %v756
      %v3161 = vpop.f32.mrf.mxu0
      %v3162 = vadd.f32 %v625, %v3161
      %v3163 = vpop.f32.mrf.mxu0
      %v3164 = vadd.f32 %v625, %v3163
      %3165 = vdwg.mxu0
      %3166 = vmatpush.bf16.msra.mxu0 %v2048
      %3167 = vmatpush.bf16.msra.mxu0 %v2031
      %3168 = vmatpush.bf16.msra.mxu0 %v2014
      %3169 = vmatpush.bf16.msra.mxu0 %v1997
      %3170 = vmatpush.bf16.msra.mxu0 %v1980
      %3171 = vmatpush.bf16.msra.mxu0 %v1963
      %3172 = vmatpush.bf16.msra.mxu0 %v1946
      %3173 = vmatpush.bf16.msra.mxu0 %v1929
      %3174 = vmatmul.bf16.gmra.mxu0 %v736
      %v3175 = vpop.f32.mrf.mxu0
      %v3176 = vadd.f32 %v3127, %v3175
      %v3177 = vpop.f32.mrf.mxu0
      %v3178 = vadd.f32 %v3129, %v3177
      %3179 = vmatmul.bf16.gmra.mxu0 %v739
      %v3180 = vpop.f32.mrf.mxu0
      %v3181 = vadd.f32 %v3132, %v3180
      %v3182 = vpop.f32.mrf.mxu0
      %v3183 = vadd.f32 %v3134, %v3182
      %3184 = vmatmul.bf16.gmra.mxu0 %v742
      %v3185 = vpop.f32.mrf.mxu0
      %v3186 = vadd.f32 %v3137, %v3185
      %v3187 = vpop.f32.mrf.mxu0
      %v3188 = vadd.f32 %v3139, %v3187
      %3189 = vmatmul.bf16.gmra.mxu0 %v745
      %v3190 = vpop.f32.mrf.mxu0
      %v3191 = vadd.f32 %v3142, %v3190
      %v3192 = vpop.f32.mrf.mxu0
      %v3193 = vadd.f32 %v3144, %v3192
      %3194 = vmatmul.bf16.gmra.mxu0 %v748
      %v3195 = vpop.f32.mrf.mxu0
      %v3196 = vadd.f32 %v3147, %v3195
      %v3197 = vpop.f32.mrf.mxu0
      %v3198 = vadd.f32 %v3149, %v3197
      %3199 = vmatmul.bf16.gmra.mxu0 %v751
      %v3200 = vpop.f32.mrf.mxu0
      %v3201 = vadd.f32 %v3152, %v3200
      %v3202 = vpop.f32.mrf.mxu0
      %v3203 = vadd.f32 %v3154, %v3202
      %3204 = vmatmul.bf16.gmra.mxu0 %v754
      %v3205 = vpop.f32.mrf.mxu0
      %v3206 = vadd.f32 %v3157, %v3205
      %v3207 = vpop.f32.mrf.mxu0
      %v3208 = vadd.f32 %v3159, %v3207
      %3209 = vmatmul.bf16.gmra.mxu0 %v757
      %v3210 = vpop.f32.mrf.mxu0
      %v3211 = vadd.f32 %v3162, %v3210
      %v3212 = vpop.f32.mrf.mxu0
      %v3213 = vadd.f32 %v3164, %v3212
      %3214 = vdwg.mxu0
      %3215 = vmatpush.bf16.msra.mxu0 0
      %3216 = vmatpush.bf16.msra.mxu0 0
      %3217 = vmatpush.bf16.msra.mxu0 0
      %3218 = vmatpush.bf16.msra.mxu0 0
      %3219 = vmatpush.bf16.msra.mxu0 %v2491
      %3220 = vmatpush.bf16.msra.mxu0 %v2099
      %3221 = vmatpush.bf16.msra.mxu0 %v2082
      %3222 = vmatpush.bf16.msra.mxu0 %v2065
      %3223 = vmatmul.bf16.gmra.mxu0 %v2454
      %v3224 = vpop.f32.mrf.mxu0
      %v3225 = vadd.f32 %v3176, %v3224
      %v3226 = vpop.f32.mrf.mxu0
      %v3227 = vadd.f32 %v3178, %v3226
      %3228 = vmatmul.bf16.gmra.mxu0 %v2457
      %v3229 = vpop.f32.mrf.mxu0
      %v3230 = vadd.f32 %v3181, %v3229
      %v3231 = vpop.f32.mrf.mxu0
      %v3232 = vadd.f32 %v3183, %v3231
      %3233 = vmatmul.bf16.gmra.mxu0 %v2460
      %v3234 = vpop.f32.mrf.mxu0
      %v3235 = vadd.f32 %v3186, %v3234
      %v3236 = vpop.f32.mrf.mxu0
      %v3237 = vadd.f32 %v3188, %v3236
      %3238 = vmatmul.bf16.gmra.mxu0 %v2463
      %v3239 = vpop.f32.mrf.mxu0
      %v3240 = vadd.f32 %v3191, %v3239
      %v3241 = vpop.f32.mrf.mxu0
      %v3242 = vadd.f32 %v3193, %v3241
      %3243 = vmatmul.bf16.gmra.mxu0 %v2466
      %v3244 = vpop.f32.mrf.mxu0
      %v3245 = vadd.f32 %v3196, %v3244
      %v3246 = vpop.f32.mrf.mxu0
      %v3247 = vadd.f32 %v3198, %v3246
      %3248 = vmatmul.bf16.gmra.mxu0 %v2469
      %v3249 = vpop.f32.mrf.mxu0
      %v3250 = vadd.f32 %v3201, %v3249
      %v3251 = vpop.f32.mrf.mxu0
      %v3252 = vadd.f32 %v3203, %v3251
      %3253 = vmatmul.bf16.gmra.mxu0 %v2472
      %v3254 = vpop.f32.mrf.mxu0
      %v3255 = vadd.f32 %v3206, %v3254
      %v3256 = vpop.f32.mrf.mxu0
      %v3257 = vadd.f32 %v3208, %v3256
      %3258 = vmatmul.bf16.gmra.mxu0 %v2475
      %v3259 = vpop.f32.mrf.mxu0
      %v3260 = vadd.f32 %v3211, %v3259
      %v3261 = vpop.f32.mrf.mxu0
      %v3262 = vadd.f32 %v3213, %v3261
      %3263 = vdwg.mxu0
      %3264 = vmatpush.bf16.msra.mxu0 %v1913
      %3265 = vmatpush.bf16.msra.mxu0 %v1896
      %3266 = vmatpush.bf16.msra.mxu0 %v1879
      %3267 = vmatpush.bf16.msra.mxu0 %v1862
      %3268 = vmatpush.bf16.msra.mxu0 %v1845
      %3269 = vmatpush.bf16.msra.mxu0 %v1828
      %3270 = vmatpush.bf16.msra.mxu0 %v1811
      %3271 = vmatpush.bf16.msra.mxu0 %v1794
      %3272 = vmatmul.bf16.gmra.mxu0 %v735
      %v3273 = vpop.f32.mrf.mxu0
      %v3274 = vadd.f32 %v626, %v3273
      %v3275 = vpop.f32.mrf.mxu0
      %v3276 = vadd.f32 %v626, %v3275
      %3277 = vmatmul.bf16.gmra.mxu0 %v738
      %v3278 = vpop.f32.mrf.mxu0
      %v3279 = vadd.f32 %v626, %v3278
      %v3280 = vpop.f32.mrf.mxu0
      %v3281 = vadd.f32 %v626, %v3280
      %3282 = vmatmul.bf16.gmra.mxu0 %v741
      %v3283 = vpop.f32.mrf.mxu0
      %v3284 = vadd.f32 %v626, %v3283
      %v3285 = vpop.f32.mrf.mxu0
      %v3286 = vadd.f32 %v626, %v3285
      %3287 = vmatmul.bf16.gmra.mxu0 %v744
      %v3288 = vpop.f32.mrf.mxu0
      %v3289 = vadd.f32 %v626, %v3288
      %v3290 = vpop.f32.mrf.mxu0
      %v3291 = vadd.f32 %v626, %v3290
      %3292 = vmatmul.bf16.gmra.mxu0 %v747
      %v3293 = vpop.f32.mrf.mxu0
      %v3294 = vadd.f32 %v626, %v3293
      %v3295 = vpop.f32.mrf.mxu0
      %v3296 = vadd.f32 %v626, %v3295
      %3297 = vmatmul.bf16.gmra.mxu0 %v750
      %v3298 = vpop.f32.mrf.mxu0
      %v3299 = vadd.f32 %v626, %v3298
      %v3300 = vpop.f32.mrf.mxu0
      %v3301 = vadd.f32 %v626, %v3300
      %3302 = vmatmul.bf16.gmra.mxu0 %v753
      %v3303 = vpop.f32.mrf.mxu0
      %v3304 = vadd.f32 %v626, %v3303
      %v3305 = vpop.f32.mrf.mxu0
      %v3306 = vadd.f32 %v626, %v3305
      %3307 = vmatmul.bf16.gmra.mxu0 %v756
      %v3308 = vpop.f32.mrf.mxu0
      %v3309 = vadd.f32 %v626, %v3308
      %v3310 = vpop.f32.mrf.mxu0
      %v3311 = vadd.f32 %v626, %v3310
      %3312 = vdwg.mxu0
      %3313 = vmatpush.bf16.msra.mxu0 %v2049
      %3314 = vmatpush.bf16.msra.mxu0 %v2032
      %3315 = vmatpush.bf16.msra.mxu0 %v2015
      %3316 = vmatpush.bf16.msra.mxu0 %v1998
      %3317 = vmatpush.bf16.msra.mxu0 %v1981
      %3318 = vmatpush.bf16.msra.mxu0 %v1964
      %3319 = vmatpush.bf16.msra.mxu0 %v1947
      %3320 = vmatpush.bf16.msra.mxu0 %v1930
      %3321 = vmatmul.bf16.gmra.mxu0 %v736
      %v3322 = vpop.f32.mrf.mxu0
      %v3323 = vadd.f32 %v3274, %v3322
      %v3324 = vpop.f32.mrf.mxu0
      %v3325 = vadd.f32 %v3276, %v3324
      %3326 = vmatmul.bf16.gmra.mxu0 %v739
      %v3327 = vpop.f32.mrf.mxu0
      %v3328 = vadd.f32 %v3279, %v3327
      %v3329 = vpop.f32.mrf.mxu0
      %v3330 = vadd.f32 %v3281, %v3329
      %3331 = vmatmul.bf16.gmra.mxu0 %v742
      %v3332 = vpop.f32.mrf.mxu0
      %v3333 = vadd.f32 %v3284, %v3332
      %v3334 = vpop.f32.mrf.mxu0
      %v3335 = vadd.f32 %v3286, %v3334
      %3336 = vmatmul.bf16.gmra.mxu0 %v745
      %v3337 = vpop.f32.mrf.mxu0
      %v3338 = vadd.f32 %v3289, %v3337
      %v3339 = vpop.f32.mrf.mxu0
      %v3340 = vadd.f32 %v3291, %v3339
      %3341 = vmatmul.bf16.gmra.mxu0 %v748
      %v3342 = vpop.f32.mrf.mxu0
      %v3343 = vadd.f32 %v3294, %v3342
      %v3344 = vpop.f32.mrf.mxu0
      %v3345 = vadd.f32 %v3296, %v3344
      %3346 = vmatmul.bf16.gmra.mxu0 %v751
      %v3347 = vpop.f32.mrf.mxu0
      %v3348 = vadd.f32 %v3299, %v3347
      %v3349 = vpop.f32.mrf.mxu0
      %v3350 = vadd.f32 %v3301, %v3349
      %3351 = vmatmul.bf16.gmra.mxu0 %v754
      %v3352 = vpop.f32.mrf.mxu0
      %v3353 = vadd.f32 %v3304, %v3352
      %v3354 = vpop.f32.mrf.mxu0
      %v3355 = vadd.f32 %v3306, %v3354
      %3356 = vmatmul.bf16.gmra.mxu0 %v757
      %v3357 = vpop.f32.mrf.mxu0
      %v3358 = vadd.f32 %v3309, %v3357
      %v3359 = vpop.f32.mrf.mxu0
      %v3360 = vadd.f32 %v3311, %v3359
      %3361 = vdwg.mxu0
      %3362 = vmatpush.bf16.msra.mxu0 0
      %3363 = vmatpush.bf16.msra.mxu0 0
      %3364 = vmatpush.bf16.msra.mxu0 0
      %3365 = vmatpush.bf16.msra.mxu0 0
      %3366 = vmatpush.bf16.msra.mxu0 %v2494
      %3367 = vmatpush.bf16.msra.mxu0 %v2100
      %3368 = vmatpush.bf16.msra.mxu0 %v2083
      %3369 = vmatpush.bf16.msra.mxu0 %v2066
      %3370 = vmatmul.bf16.gmra.mxu0 %v2454
      %v3371 = vpop.f32.mrf.mxu0
      %v3372 = vadd.f32 %v3323, %v3371
      %v3373 = vpop.f32.mrf.mxu0
      %v3374 = vadd.f32 %v3325, %v3373
      %3375 = vmatmul.bf16.gmra.mxu0 %v2457
      %v3376 = vpop.f32.mrf.mxu0
      %v3377 = vadd.f32 %v3328, %v3376
      %v3378 = vpop.f32.mrf.mxu0
      %v3379 = vadd.f32 %v3330, %v3378
      %3380 = vmatmul.bf16.gmra.mxu0 %v2460
      %v3381 = vpop.f32.mrf.mxu0
      %v3382 = vadd.f32 %v3333, %v3381
      %v3383 = vpop.f32.mrf.mxu0
      %v3384 = vadd.f32 %v3335, %v3383
      %3385 = vmatmul.bf16.gmra.mxu0 %v2463
      %v3386 = vpop.f32.mrf.mxu0
      %v3387 = vadd.f32 %v3338, %v3386
      %v3388 = vpop.f32.mrf.mxu0
      %v3389 = vadd.f32 %v3340, %v3388
      %3390 = vmatmul.bf16.gmra.mxu0 %v2466
      %v3391 = vpop.f32.mrf.mxu0
      %v3392 = vadd.f32 %v3343, %v3391
      %v3393 = vpop.f32.mrf.mxu0
      %v3394 = vadd.f32 %v3345, %v3393
      %3395 = vmatmul.bf16.gmra.mxu0 %v2469
      %v3396 = vpop.f32.mrf.mxu0
      %v3397 = vadd.f32 %v3348, %v3396
      %v3398 = vpop.f32.mrf.mxu0
      %v3399 = vadd.f32 %v3350, %v3398
      %3400 = vmatmul.bf16.gmra.mxu0 %v2472
      %v3401 = vpop.f32.mrf.mxu0
      %v3402 = vadd.f32 %v3353, %v3401
      %v3403 = vpop.f32.mrf.mxu0
      %v3404 = vadd.f32 %v3355, %v3403
      %3405 = vmatmul.bf16.gmra.mxu0 %v2475
      %v3406 = vpop.f32.mrf.mxu0
      %v3407 = vadd.f32 %v3358, %v3406
      %v3408 = vpop.f32.mrf.mxu0
      %v3409 = vadd.f32 %v3360, %v3408
      %3410 = vdwg.mxu0
      %3411 = vmatpush.bf16.msra.mxu0 %v1914
      %3412 = vmatpush.bf16.msra.mxu0 %v1897
      %3413 = vmatpush.bf16.msra.mxu0 %v1880
      %3414 = vmatpush.bf16.msra.mxu0 %v1863
      %3415 = vmatpush.bf16.msra.mxu0 %v1846
      %3416 = vmatpush.bf16.msra.mxu0 %v1829
      %3417 = vmatpush.bf16.msra.mxu0 %v1812
      %3418 = vmatpush.bf16.msra.mxu0 %v1795
      %3419 = vmatmul.bf16.gmra.mxu0 %v735
      %v3420 = vpop.f32.mrf.mxu0
      %v3421 = vadd.f32 %v627, %v3420
      %v3422 = vpop.f32.mrf.mxu0
      %v3423 = vadd.f32 %v627, %v3422
      %3424 = vmatmul.bf16.gmra.mxu0 %v738
      %v3425 = vpop.f32.mrf.mxu0
      %v3426 = vadd.f32 %v627, %v3425
      %v3427 = vpop.f32.mrf.mxu0
      %v3428 = vadd.f32 %v627, %v3427
      %3429 = vmatmul.bf16.gmra.mxu0 %v741
      %v3430 = vpop.f32.mrf.mxu0
      %v3431 = vadd.f32 %v627, %v3430
      %v3432 = vpop.f32.mrf.mxu0
      %v3433 = vadd.f32 %v627, %v3432
      %3434 = vmatmul.bf16.gmra.mxu0 %v744
      %v3435 = vpop.f32.mrf.mxu0
      %v3436 = vadd.f32 %v627, %v3435
      %v3437 = vpop.f32.mrf.mxu0
      %v3438 = vadd.f32 %v627, %v3437
      %3439 = vmatmul.bf16.gmra.mxu0 %v747
      %v3440 = vpop.f32.mrf.mxu0
      %v3441 = vadd.f32 %v627, %v3440
      %v3442 = vpop.f32.mrf.mxu0
      %v3443 = vadd.f32 %v627, %v3442
      %3444 = vmatmul.bf16.gmra.mxu0 %v750
      %v3445 = vpop.f32.mrf.mxu0
      %v3446 = vadd.f32 %v627, %v3445
      %v3447 = vpop.f32.mrf.mxu0
      %v3448 = vadd.f32 %v627, %v3447
      %3449 = vmatmul.bf16.gmra.mxu0 %v753
      %v3450 = vpop.f32.mrf.mxu0
      %v3451 = vadd.f32 %v627, %v3450
      %v3452 = vpop.f32.mrf.mxu0
      %v3453 = vadd.f32 %v627, %v3452
      %3454 = vmatmul.bf16.gmra.mxu0 %v756
      %v3455 = vpop.f32.mrf.mxu0
      %v3456 = vadd.f32 %v627, %v3455
      %v3457 = vpop.f32.mrf.mxu0
      %v3458 = vadd.f32 %v627, %v3457
      %3459 = vdwg.mxu0
      %3460 = vmatpush.bf16.msra.mxu0 %v2050
      %3461 = vmatpush.bf16.msra.mxu0 %v2033
      %3462 = vmatpush.bf16.msra.mxu0 %v2016
      %3463 = vmatpush.bf16.msra.mxu0 %v1999
      %3464 = vmatpush.bf16.msra.mxu0 %v1982
      %3465 = vmatpush.bf16.msra.mxu0 %v1965
      %3466 = vmatpush.bf16.msra.mxu0 %v1948
      %3467 = vmatpush.bf16.msra.mxu0 %v1931
      %3468 = vmatmul.bf16.gmra.mxu0 %v736
      %v3469 = vpop.f32.mrf.mxu0
      %v3470 = vadd.f32 %v3421, %v3469
      %v3471 = vpop.f32.mrf.mxu0
      %v3472 = vadd.f32 %v3423, %v3471
      %3473 = vmatmul.bf16.gmra.mxu0 %v739
      %v3474 = vpop.f32.mrf.mxu0
      %v3475 = vadd.f32 %v3426, %v3474
      %v3476 = vpop.f32.mrf.mxu0
      %v3477 = vadd.f32 %v3428, %v3476
      %3478 = vmatmul.bf16.gmra.mxu0 %v742
      %v3479 = vpop.f32.mrf.mxu0
      %v3480 = vadd.f32 %v3431, %v3479
      %v3481 = vpop.f32.mrf.mxu0
      %v3482 = vadd.f32 %v3433, %v3481
      %3483 = vmatmul.bf16.gmra.mxu0 %v745
      %v3484 = vpop.f32.mrf.mxu0
      %v3485 = vadd.f32 %v3436, %v3484
      %v3486 = vpop.f32.mrf.mxu0
      %v3487 = vadd.f32 %v3438, %v3486
      %3488 = vmatmul.bf16.gmra.mxu0 %v748
      %v3489 = vpop.f32.mrf.mxu0
      %v3490 = vadd.f32 %v3441, %v3489
      %v3491 = vpop.f32.mrf.mxu0
      %v3492 = vadd.f32 %v3443, %v3491
      %3493 = vmatmul.bf16.gmra.mxu0 %v751
      %v3494 = vpop.f32.mrf.mxu0
      %v3495 = vadd.f32 %v3446, %v3494
      %v3496 = vpop.f32.mrf.mxu0
      %v3497 = vadd.f32 %v3448, %v3496
      %3498 = vmatmul.bf16.gmra.mxu0 %v754
      %v3499 = vpop.f32.mrf.mxu0
      %v3500 = vadd.f32 %v3451, %v3499
      %v3501 = vpop.f32.mrf.mxu0
      %v3502 = vadd.f32 %v3453, %v3501
      %3503 = vmatmul.bf16.gmra.mxu0 %v757
      %v3504 = vpop.f32.mrf.mxu0
      %v3505 = vadd.f32 %v3456, %v3504
      %v3506 = vpop.f32.mrf.mxu0
      %v3507 = vadd.f32 %v3458, %v3506
      %3508 = vdwg.mxu0
      %3509 = vmatpush.bf16.msra.mxu0 0
      %3510 = vmatpush.bf16.msra.mxu0 0
      %3511 = vmatpush.bf16.msra.mxu0 0
      %3512 = vmatpush.bf16.msra.mxu0 0
      %3513 = vmatpush.bf16.msra.mxu0 %v2497
      %3514 = vmatpush.bf16.msra.mxu0 %v2101
      %3515 = vmatpush.bf16.msra.mxu0 %v2084
      %3516 = vmatpush.bf16.msra.mxu0 %v2067
      %3517 = vmatmul.bf16.gmra.mxu0 %v2454
      %v3518 = vpop.f32.mrf.mxu0
      %v3519 = vadd.f32 %v3470, %v3518
      %v3520 = vpop.f32.mrf.mxu0
      %v3521 = vadd.f32 %v3472, %v3520
      %3522 = vmatmul.bf16.gmra.mxu0 %v2457
      %v3523 = vpop.f32.mrf.mxu0
      %v3524 = vadd.f32 %v3475, %v3523
      %v3525 = vpop.f32.mrf.mxu0
      %v3526 = vadd.f32 %v3477, %v3525
      %3527 = vmatmul.bf16.gmra.mxu0 %v2460
      %v3528 = vpop.f32.mrf.mxu0
      %v3529 = vadd.f32 %v3480, %v3528
      %v3530 = vpop.f32.mrf.mxu0
      %v3531 = vadd.f32 %v3482, %v3530
      %3532 = vmatmul.bf16.gmra.mxu0 %v2463
      %v3533 = vpop.f32.mrf.mxu0
      %v3534 = vadd.f32 %v3485, %v3533
      %v3535 = vpop.f32.mrf.mxu0
      %v3536 = vadd.f32 %v3487, %v3535
      %3537 = vmatmul.bf16.gmra.mxu0 %v2466
      %v3538 = vpop.f32.mrf.mxu0
      %v3539 = vadd.f32 %v3490, %v3538
      %v3540 = vpop.f32.mrf.mxu0
      %v3541 = vadd.f32 %v3492, %v3540
      %3542 = vmatmul.bf16.gmra.mxu0 %v2469
      %v3543 = vpop.f32.mrf.mxu0
      %v3544 = vadd.f32 %v3495, %v3543
      %v3545 = vpop.f32.mrf.mxu0
      %v3546 = vadd.f32 %v3497, %v3545
      %3547 = vmatmul.bf16.gmra.mxu0 %v2472
      %v3548 = vpop.f32.mrf.mxu0
      %v3549 = vadd.f32 %v3500, %v3548
      %v3550 = vpop.f32.mrf.mxu0
      %v3551 = vadd.f32 %v3502, %v3550
      %3552 = vmatmul.bf16.gmra.mxu0 %v2475
      %v3553 = vpop.f32.mrf.mxu0
      %v3554 = vadd.f32 %v3505, %v3553
      %v3555 = vpop.f32.mrf.mxu0
      %v3556 = vadd.f32 %v3507, %v3555
      %3557 = vdwg.mxu0
      %3558 = vmatpush.bf16.msra.mxu0 %v1915
      %3559 = vmatpush.bf16.msra.mxu0 %v1898
      %3560 = vmatpush.bf16.msra.mxu0 %v1881
      %3561 = vmatpush.bf16.msra.mxu0 %v1864
      %3562 = vmatpush.bf16.msra.mxu0 %v1847
      %3563 = vmatpush.bf16.msra.mxu0 %v1830
      %3564 = vmatpush.bf16.msra.mxu0 %v1813
      %3565 = vmatpush.bf16.msra.mxu0 %v1796
      %3566 = vmatmul.bf16.gmra.mxu0 %v735
      %v3567 = vpop.f32.mrf.mxu0
      %v3568 = vadd.f32 %v628, %v3567
      %v3569 = vpop.f32.mrf.mxu0
      %v3570 = vadd.f32 %v628, %v3569
      %3571 = vmatmul.bf16.gmra.mxu0 %v738
      %v3572 = vpop.f32.mrf.mxu0
      %v3573 = vadd.f32 %v628, %v3572
      %v3574 = vpop.f32.mrf.mxu0
      %v3575 = vadd.f32 %v628, %v3574
      %3576 = vmatmul.bf16.gmra.mxu0 %v741
      %v3577 = vpop.f32.mrf.mxu0
      %v3578 = vadd.f32 %v628, %v3577
      %v3579 = vpop.f32.mrf.mxu0
      %v3580 = vadd.f32 %v628, %v3579
      %3581 = vmatmul.bf16.gmra.mxu0 %v744
      %v3582 = vpop.f32.mrf.mxu0
      %v3583 = vadd.f32 %v628, %v3582
      %v3584 = vpop.f32.mrf.mxu0
      %v3585 = vadd.f32 %v628, %v3584
      %3586 = vmatmul.bf16.gmra.mxu0 %v747
      %v3587 = vpop.f32.mrf.mxu0
      %v3588 = vadd.f32 %v628, %v3587
      %v3589 = vpop.f32.mrf.mxu0
      %v3590 = vadd.f32 %v628, %v3589
      %3591 = vmatmul.bf16.gmra.mxu0 %v750
      %v3592 = vpop.f32.mrf.mxu0
      %v3593 = vadd.f32 %v628, %v3592
      %v3594 = vpop.f32.mrf.mxu0
      %v3595 = vadd.f32 %v628, %v3594
      %3596 = vmatmul.bf16.gmra.mxu0 %v753
      %v3597 = vpop.f32.mrf.mxu0
      %v3598 = vadd.f32 %v628, %v3597
      %v3599 = vpop.f32.mrf.mxu0
      %v3600 = vadd.f32 %v628, %v3599
      %3601 = vmatmul.bf16.gmra.mxu0 %v756
      %v3602 = vpop.f32.mrf.mxu0
      %v3603 = vadd.f32 %v628, %v3602
      %v3604 = vpop.f32.mrf.mxu0
      %v3605 = vadd.f32 %v628, %v3604
      %3606 = vdwg.mxu0
      %3607 = vmatpush.bf16.msra.mxu0 %v2051
      %3608 = vmatpush.bf16.msra.mxu0 %v2034
      %3609 = vmatpush.bf16.msra.mxu0 %v2017
      %3610 = vmatpush.bf16.msra.mxu0 %v2000
      %3611 = vmatpush.bf16.msra.mxu0 %v1983
      %3612 = vmatpush.bf16.msra.mxu0 %v1966
      %3613 = vmatpush.bf16.msra.mxu0 %v1949
      %3614 = vmatpush.bf16.msra.mxu0 %v1932
      %3615 = vmatmul.bf16.gmra.mxu0 %v736
      %v3616 = vpop.f32.mrf.mxu0
      %v3617 = vadd.f32 %v3568, %v3616
      %v3618 = vpop.f32.mrf.mxu0
      %v3619 = vadd.f32 %v3570, %v3618
      %3620 = vmatmul.bf16.gmra.mxu0 %v739
      %v3621 = vpop.f32.mrf.mxu0
      %v3622 = vadd.f32 %v3573, %v3621
      %v3623 = vpop.f32.mrf.mxu0
      %v3624 = vadd.f32 %v3575, %v3623
      %3625 = vmatmul.bf16.gmra.mxu0 %v742
      %v3626 = vpop.f32.mrf.mxu0
      %v3627 = vadd.f32 %v3578, %v3626
      %v3628 = vpop.f32.mrf.mxu0
      %v3629 = vadd.f32 %v3580, %v3628
      %3630 = vmatmul.bf16.gmra.mxu0 %v745
      %v3631 = vpop.f32.mrf.mxu0
      %v3632 = vadd.f32 %v3583, %v3631
      %v3633 = vpop.f32.mrf.mxu0
      %v3634 = vadd.f32 %v3585, %v3633
      %3635 = vmatmul.bf16.gmra.mxu0 %v748
      %v3636 = vpop.f32.mrf.mxu0
      %v3637 = vadd.f32 %v3588, %v3636
      %v3638 = vpop.f32.mrf.mxu0
      %v3639 = vadd.f32 %v3590, %v3638
      %3640 = vmatmul.bf16.gmra.mxu0 %v751
      %v3641 = vpop.f32.mrf.mxu0
      %v3642 = vadd.f32 %v3593, %v3641
      %v3643 = vpop.f32.mrf.mxu0
      %v3644 = vadd.f32 %v3595, %v3643
      %3645 = vmatmul.bf16.gmra.mxu0 %v754
      %v3646 = vpop.f32.mrf.mxu0
      %v3647 = vadd.f32 %v3598, %v3646
      %v3648 = vpop.f32.mrf.mxu0
      %v3649 = vadd.f32 %v3600, %v3648
      %3650 = vmatmul.bf16.gmra.mxu0 %v757
      %v3651 = vpop.f32.mrf.mxu0
      %v3652 = vadd.f32 %v3603, %v3651
      %v3653 = vpop.f32.mrf.mxu0
      %v3654 = vadd.f32 %v3605, %v3653
      %3655 = vdwg.mxu0
      %3656 = vmatpush.bf16.msra.mxu0 0
      %3657 = vmatpush.bf16.msra.mxu0 0
      %3658 = vmatpush.bf16.msra.mxu0 0
      %3659 = vmatpush.bf16.msra.mxu0 0
      %3660 = vmatpush.bf16.msra.mxu0 %v2500
      %3661 = vmatpush.bf16.msra.mxu0 %v2102
      %3662 = vmatpush.bf16.msra.mxu0 %v2085
      %3663 = vmatpush.bf16.msra.mxu0 %v2068
      %3664 = vmatmul.bf16.gmra.mxu0 %v2454
      %v3665 = vpop.f32.mrf.mxu0
      %v3666 = vadd.f32 %v3617, %v3665
      %v3667 = vpop.f32.mrf.mxu0
      %v3668 = vadd.f32 %v3619, %v3667
      %3669 = vmatmul.bf16.gmra.mxu0 %v2457
      %v3670 = vpop.f32.mrf.mxu0
      %v3671 = vadd.f32 %v3622, %v3670
      %v3672 = vpop.f32.mrf.mxu0
      %v3673 = vadd.f32 %v3624, %v3672
      %3674 = vmatmul.bf16.gmra.mxu0 %v2460
      %v3675 = vpop.f32.mrf.mxu0
      %v3676 = vadd.f32 %v3627, %v3675
      %v3677 = vpop.f32.mrf.mxu0
      %v3678 = vadd.f32 %v3629, %v3677
      %3679 = vmatmul.bf16.gmra.mxu0 %v2463
      %v3680 = vpop.f32.mrf.mxu0
      %v3681 = vadd.f32 %v3632, %v3680
      %v3682 = vpop.f32.mrf.mxu0
      %v3683 = vadd.f32 %v3634, %v3682
      %3684 = vmatmul.bf16.gmra.mxu0 %v2466
      %v3685 = vpop.f32.mrf.mxu0
      %v3686 = vadd.f32 %v3637, %v3685
      %v3687 = vpop.f32.mrf.mxu0
      %v3688 = vadd.f32 %v3639, %v3687
      %3689 = vmatmul.bf16.gmra.mxu0 %v2469
      %v3690 = vpop.f32.mrf.mxu0
      %v3691 = vadd.f32 %v3642, %v3690
      %v3692 = vpop.f32.mrf.mxu0
      %v3693 = vadd.f32 %v3644, %v3692
      %3694 = vmatmul.bf16.gmra.mxu0 %v2472
      %v3695 = vpop.f32.mrf.mxu0
      %v3696 = vadd.f32 %v3647, %v3695
      %v3697 = vpop.f32.mrf.mxu0
      %v3698 = vadd.f32 %v3649, %v3697
      %3699 = vmatmul.bf16.gmra.mxu0 %v2475
      %v3700 = vpop.f32.mrf.mxu0
      %v3701 = vadd.f32 %v3652, %v3700
      %v3702 = vpop.f32.mrf.mxu0
      %v3703 = vadd.f32 %v3654, %v3702
      %3704 = vdwg.mxu0
      %3705 = vmatpush.bf16.msra.mxu0 %v1916
      %3706 = vmatpush.bf16.msra.mxu0 %v1899
      %3707 = vmatpush.bf16.msra.mxu0 %v1882
      %3708 = vmatpush.bf16.msra.mxu0 %v1865
      %3709 = vmatpush.bf16.msra.mxu0 %v1848
      %3710 = vmatpush.bf16.msra.mxu0 %v1831
      %3711 = vmatpush.bf16.msra.mxu0 %v1814
      %3712 = vmatpush.bf16.msra.mxu0 %v1797
      %3713 = vmatmul.bf16.gmra.mxu0 %v735
      %v3714 = vpop.f32.mrf.mxu0
      %v3715 = vadd.f32 %v629, %v3714
      %v3716 = vpop.f32.mrf.mxu0
      %v3717 = vadd.f32 %v629, %v3716
      %3718 = vmatmul.bf16.gmra.mxu0 %v738
      %v3719 = vpop.f32.mrf.mxu0
      %v3720 = vadd.f32 %v629, %v3719
      %v3721 = vpop.f32.mrf.mxu0
      %v3722 = vadd.f32 %v629, %v3721
      %3723 = vmatmul.bf16.gmra.mxu0 %v741
      %v3724 = vpop.f32.mrf.mxu0
      %v3725 = vadd.f32 %v629, %v3724
      %v3726 = vpop.f32.mrf.mxu0
      %v3727 = vadd.f32 %v629, %v3726
      %3728 = vmatmul.bf16.gmra.mxu0 %v744
      %v3729 = vpop.f32.mrf.mxu0
      %v3730 = vadd.f32 %v629, %v3729
      %v3731 = vpop.f32.mrf.mxu0
      %v3732 = vadd.f32 %v629, %v3731
      %3733 = vmatmul.bf16.gmra.mxu0 %v747
      %v3734 = vpop.f32.mrf.mxu0
      %v3735 = vadd.f32 %v629, %v3734
      %v3736 = vpop.f32.mrf.mxu0
      %v3737 = vadd.f32 %v629, %v3736
      %3738 = vmatmul.bf16.gmra.mxu0 %v750
      %v3739 = vpop.f32.mrf.mxu0
      %v3740 = vadd.f32 %v629, %v3739
      %v3741 = vpop.f32.mrf.mxu0
      %v3742 = vadd.f32 %v629, %v3741
      %3743 = vmatmul.bf16.gmra.mxu0 %v753
      %v3744 = vpop.f32.mrf.mxu0
      %v3745 = vadd.f32 %v629, %v3744
      %v3746 = vpop.f32.mrf.mxu0
      %v3747 = vadd.f32 %v629, %v3746
      %3748 = vmatmul.bf16.gmra.mxu0 %v756
      %v3749 = vpop.f32.mrf.mxu0
      %v3750 = vadd.f32 %v629, %v3749
      %v3751 = vpop.f32.mrf.mxu0
      %v3752 = vadd.f32 %v629, %v3751
      %3753 = vdwg.mxu0
      %3754 = vmatpush.bf16.msra.mxu0 %v2052
      %3755 = vmatpush.bf16.msra.mxu0 %v2035
      %3756 = vmatpush.bf16.msra.mxu0 %v2018
      %3757 = vmatpush.bf16.msra.mxu0 %v2001
      %3758 = vmatpush.bf16.msra.mxu0 %v1984
      %3759 = vmatpush.bf16.msra.mxu0 %v1967
      %3760 = vmatpush.bf16.msra.mxu0 %v1950
      %3761 = vmatpush.bf16.msra.mxu0 %v1933
      %3762 = vmatmul.bf16.gmra.mxu0 %v736
      %v3763 = vpop.f32.mrf.mxu0
      %v3764 = vadd.f32 %v3715, %v3763
      %v3765 = vpop.f32.mrf.mxu0
      %v3766 = vadd.f32 %v3717, %v3765
      %3767 = vmatmul.bf16.gmra.mxu0 %v739
      %v3768 = vpop.f32.mrf.mxu0
      %v3769 = vadd.f32 %v3720, %v3768
      %v3770 = vpop.f32.mrf.mxu0
      %v3771 = vadd.f32 %v3722, %v3770
      %3772 = vmatmul.bf16.gmra.mxu0 %v742
      %v3773 = vpop.f32.mrf.mxu0
      %v3774 = vadd.f32 %v3725, %v3773
      %v3775 = vpop.f32.mrf.mxu0
      %v3776 = vadd.f32 %v3727, %v3775
      %3777 = vmatmul.bf16.gmra.mxu0 %v745
      %v3778 = vpop.f32.mrf.mxu0
      %v3779 = vadd.f32 %v3730, %v3778
      %v3780 = vpop.f32.mrf.mxu0
      %v3781 = vadd.f32 %v3732, %v3780
      %3782 = vmatmul.bf16.gmra.mxu0 %v748
      %v3783 = vpop.f32.mrf.mxu0
      %v3784 = vadd.f32 %v3735, %v3783
      %v3785 = vpop.f32.mrf.mxu0
      %v3786 = vadd.f32 %v3737, %v3785
      %3787 = vmatmul.bf16.gmra.mxu0 %v751
      %v3788 = vpop.f32.mrf.mxu0
      %v3789 = vadd.f32 %v3740, %v3788
      %v3790 = vpop.f32.mrf.mxu0
      %v3791 = vadd.f32 %v3742, %v3790
      %3792 = vmatmul.bf16.gmra.mxu0 %v754
      %v3793 = vpop.f32.mrf.mxu0
      %v3794 = vadd.f32 %v3745, %v3793
      %v3795 = vpop.f32.mrf.mxu0
      %v3796 = vadd.f32 %v3747, %v3795
      %3797 = vmatmul.bf16.gmra.mxu0 %v757
      %v3798 = vpop.f32.mrf.mxu0
      %v3799 = vadd.f32 %v3750, %v3798
      %v3800 = vpop.f32.mrf.mxu0
      %v3801 = vadd.f32 %v3752, %v3800
      %3802 = vdwg.mxu0
      %3803 = vmatpush.bf16.msra.mxu0 0
      %3804 = vmatpush.bf16.msra.mxu0 0
      %3805 = vmatpush.bf16.msra.mxu0 0
      %3806 = vmatpush.bf16.msra.mxu0 0
      %3807 = vmatpush.bf16.msra.mxu0 %v2503
      %3808 = vmatpush.bf16.msra.mxu0 %v2103
      %3809 = vmatpush.bf16.msra.mxu0 %v2086
      %3810 = vmatpush.bf16.msra.mxu0 %v2069
      %3811 = vmatmul.bf16.gmra.mxu0 %v2454
      %v3812 = vpop.f32.mrf.mxu0
      %v3813 = vadd.f32 %v3764, %v3812
      %v3814 = vpop.f32.mrf.mxu0
      %v3815 = vadd.f32 %v3766, %v3814
      %3816 = vmatmul.bf16.gmra.mxu0 %v2457
      %v3817 = vpop.f32.mrf.mxu0
      %v3818 = vadd.f32 %v3769, %v3817
      %v3819 = vpop.f32.mrf.mxu0
      %v3820 = vadd.f32 %v3771, %v3819
      %3821 = vmatmul.bf16.gmra.mxu0 %v2460
      %v3822 = vpop.f32.mrf.mxu0
      %v3823 = vadd.f32 %v3774, %v3822
      %v3824 = vpop.f32.mrf.mxu0
      %v3825 = vadd.f32 %v3776, %v3824
      %3826 = vmatmul.bf16.gmra.mxu0 %v2463
      %v3827 = vpop.f32.mrf.mxu0
      %v3828 = vadd.f32 %v3779, %v3827
      %v3829 = vpop.f32.mrf.mxu0
      %v3830 = vadd.f32 %v3781, %v3829
      %3831 = vmatmul.bf16.gmra.mxu0 %v2466
      %v3832 = vpop.f32.mrf.mxu0
      %v3833 = vadd.f32 %v3784, %v3832
      %v3834 = vpop.f32.mrf.mxu0
      %v3835 = vadd.f32 %v3786, %v3834
      %3836 = vmatmul.bf16.gmra.mxu0 %v2469
      %v3837 = vpop.f32.mrf.mxu0
      %v3838 = vadd.f32 %v3789, %v3837
      %v3839 = vpop.f32.mrf.mxu0
      %v3840 = vadd.f32 %v3791, %v3839
      %3841 = vmatmul.bf16.gmra.mxu0 %v2472
      %v3842 = vpop.f32.mrf.mxu0
      %v3843 = vadd.f32 %v3794, %v3842
      %v3844 = vpop.f32.mrf.mxu0
      %v3845 = vadd.f32 %v3796, %v3844
      %3846 = vmatmul.bf16.gmra.mxu0 %v2475
      %v3847 = vpop.f32.mrf.mxu0
      %v3848 = vadd.f32 %v3799, %v3847
      %v3849 = vpop.f32.mrf.mxu0
      %v3850 = vadd.f32 %v3801, %v3849
      %3851 = vdwg.mxu0
      %3852 = vmatpush.bf16.msra.mxu0 %v1917
      %3853 = vmatpush.bf16.msra.mxu0 %v1900
      %3854 = vmatpush.bf16.msra.mxu0 %v1883
      %3855 = vmatpush.bf16.msra.mxu0 %v1866
      %3856 = vmatpush.bf16.msra.mxu0 %v1849
      %3857 = vmatpush.bf16.msra.mxu0 %v1832
      %3858 = vmatpush.bf16.msra.mxu0 %v1815
      %3859 = vmatpush.bf16.msra.mxu0 %v1798
      %3860 = vmatmul.bf16.gmra.mxu0 %v735
      %v3861 = vpop.f32.mrf.mxu0
      %v3862 = vadd.f32 %v630, %v3861
      %v3863 = vpop.f32.mrf.mxu0
      %v3864 = vadd.f32 %v630, %v3863
      %3865 = vmatmul.bf16.gmra.mxu0 %v738
      %v3866 = vpop.f32.mrf.mxu0
      %v3867 = vadd.f32 %v630, %v3866
      %v3868 = vpop.f32.mrf.mxu0
      %v3869 = vadd.f32 %v630, %v3868
      %3870 = vmatmul.bf16.gmra.mxu0 %v741
      %v3871 = vpop.f32.mrf.mxu0
      %v3872 = vadd.f32 %v630, %v3871
      %v3873 = vpop.f32.mrf.mxu0
      %v3874 = vadd.f32 %v630, %v3873
      %3875 = vmatmul.bf16.gmra.mxu0 %v744
      %v3876 = vpop.f32.mrf.mxu0
      %v3877 = vadd.f32 %v630, %v3876
      %v3878 = vpop.f32.mrf.mxu0
      %v3879 = vadd.f32 %v630, %v3878
      %3880 = vmatmul.bf16.gmra.mxu0 %v747
      %v3881 = vpop.f32.mrf.mxu0
      %v3882 = vadd.f32 %v630, %v3881
      %v3883 = vpop.f32.mrf.mxu0
      %v3884 = vadd.f32 %v630, %v3883
      %3885 = vmatmul.bf16.gmra.mxu0 %v750
      %v3886 = vpop.f32.mrf.mxu0
      %v3887 = vadd.f32 %v630, %v3886
      %v3888 = vpop.f32.mrf.mxu0
      %v3889 = vadd.f32 %v630, %v3888
      %3890 = vmatmul.bf16.gmra.mxu0 %v753
      %v3891 = vpop.f32.mrf.mxu0
      %v3892 = vadd.f32 %v630, %v3891
      %v3893 = vpop.f32.mrf.mxu0
      %v3894 = vadd.f32 %v630, %v3893
      %3895 = vmatmul.bf16.gmra.mxu0 %v756
      %v3896 = vpop.f32.mrf.mxu0
      %v3897 = vadd.f32 %v630, %v3896
      %v3898 = vpop.f32.mrf.mxu0
      %v3899 = vadd.f32 %v630, %v3898
      %3900 = vdwg.mxu0
      %3901 = vmatpush.bf16.msra.mxu0 %v2053
      %3902 = vmatpush.bf16.msra.mxu0 %v2036
      %3903 = vmatpush.bf16.msra.mxu0 %v2019
      %3904 = vmatpush.bf16.msra.mxu0 %v2002
      %3905 = vmatpush.bf16.msra.mxu0 %v1985
      %3906 = vmatpush.bf16.msra.mxu0 %v1968
      %3907 = vmatpush.bf16.msra.mxu0 %v1951
      %3908 = vmatpush.bf16.msra.mxu0 %v1934
      %3909 = vmatmul.bf16.gmra.mxu0 %v736
      %v3910 = vpop.f32.mrf.mxu0
      %v3911 = vadd.f32 %v3862, %v3910
      %v3912 = vpop.f32.mrf.mxu0
      %v3913 = vadd.f32 %v3864, %v3912
      %3914 = vmatmul.bf16.gmra.mxu0 %v739
      %v3915 = vpop.f32.mrf.mxu0
      %v3916 = vadd.f32 %v3867, %v3915
      %v3917 = vpop.f32.mrf.mxu0
      %v3918 = vadd.f32 %v3869, %v3917
      %3919 = vmatmul.bf16.gmra.mxu0 %v742
      %v3920 = vpop.f32.mrf.mxu0
      %v3921 = vadd.f32 %v3872, %v3920
      %v3922 = vpop.f32.mrf.mxu0
      %v3923 = vadd.f32 %v3874, %v3922
      %3924 = vmatmul.bf16.gmra.mxu0 %v745
      %v3925 = vpop.f32.mrf.mxu0
      %v3926 = vadd.f32 %v3877, %v3925
      %v3927 = vpop.f32.mrf.mxu0
      %v3928 = vadd.f32 %v3879, %v3927
      %3929 = vmatmul.bf16.gmra.mxu0 %v748
      %v3930 = vpop.f32.mrf.mxu0
      %v3931 = vadd.f32 %v3882, %v3930
      %v3932 = vpop.f32.mrf.mxu0
      %v3933 = vadd.f32 %v3884, %v3932
      %3934 = vmatmul.bf16.gmra.mxu0 %v751
      %v3935 = vpop.f32.mrf.mxu0
      %v3936 = vadd.f32 %v3887, %v3935
      %v3937 = vpop.f32.mrf.mxu0
      %v3938 = vadd.f32 %v3889, %v3937
      %3939 = vmatmul.bf16.gmra.mxu0 %v754
      %v3940 = vpop.f32.mrf.mxu0
      %v3941 = vadd.f32 %v3892, %v3940
      %v3942 = vpop.f32.mrf.mxu0
      %v3943 = vadd.f32 %v3894, %v3942
      %3944 = vmatmul.bf16.gmra.mxu0 %v757
      %v3945 = vpop.f32.mrf.mxu0
      %v3946 = vadd.f32 %v3897, %v3945
      %v3947 = vpop.f32.mrf.mxu0
      %v3948 = vadd.f32 %v3899, %v3947
      %3949 = vdwg.mxu0
      %3950 = vmatpush.bf16.msra.mxu0 0
      %3951 = vmatpush.bf16.msra.mxu0 0
      %3952 = vmatpush.bf16.msra.mxu0 0
      %3953 = vmatpush.bf16.msra.mxu0 0
      %3954 = vmatpush.bf16.msra.mxu0 %v2506
      %3955 = vmatpush.bf16.msra.mxu0 %v2104
      %3956 = vmatpush.bf16.msra.mxu0 %v2087
      %3957 = vmatpush.bf16.msra.mxu0 %v2070
      %3958 = vmatmul.bf16.gmra.mxu0 %v2454
      %v3959 = vpop.f32.mrf.mxu0
      %v3960 = vadd.f32 %v3911, %v3959
      %v3961 = vpop.f32.mrf.mxu0
      %v3962 = vadd.f32 %v3913, %v3961
      %3963 = vmatmul.bf16.gmra.mxu0 %v2457
      %v3964 = vpop.f32.mrf.mxu0
      %v3965 = vadd.f32 %v3916, %v3964
      %v3966 = vpop.f32.mrf.mxu0
      %v3967 = vadd.f32 %v3918, %v3966
      %3968 = vmatmul.bf16.gmra.mxu0 %v2460
      %v3969 = vpop.f32.mrf.mxu0
      %v3970 = vadd.f32 %v3921, %v3969
      %v3971 = vpop.f32.mrf.mxu0
      %v3972 = vadd.f32 %v3923, %v3971
      %3973 = vmatmul.bf16.gmra.mxu0 %v2463
      %v3974 = vpop.f32.mrf.mxu0
      %v3975 = vadd.f32 %v3926, %v3974
      %v3976 = vpop.f32.mrf.mxu0
      %v3977 = vadd.f32 %v3928, %v3976
      %3978 = vmatmul.bf16.gmra.mxu0 %v2466
      %v3979 = vpop.f32.mrf.mxu0
      %v3980 = vadd.f32 %v3931, %v3979
      %v3981 = vpop.f32.mrf.mxu0
      %v3982 = vadd.f32 %v3933, %v3981
      %3983 = vmatmul.bf16.gmra.mxu0 %v2469
      %v3984 = vpop.f32.mrf.mxu0
      %v3985 = vadd.f32 %v3936, %v3984
      %v3986 = vpop.f32.mrf.mxu0
      %v3987 = vadd.f32 %v3938, %v3986
      %3988 = vmatmul.bf16.gmra.mxu0 %v2472
      %v3989 = vpop.f32.mrf.mxu0
      %v3990 = vadd.f32 %v3941, %v3989
      %v3991 = vpop.f32.mrf.mxu0
      %v3992 = vadd.f32 %v3943, %v3991
      %3993 = vmatmul.bf16.gmra.mxu0 %v2475
      %v3994 = vpop.f32.mrf.mxu0
      %v3995 = vadd.f32 %v3946, %v3994
      %v3996 = vpop.f32.mrf.mxu0
      %v3997 = vadd.f32 %v3948, %v3996
      %3998 = vdwg.mxu0
      %3999 = vmatpush.bf16.msra.mxu0 %v1918
      %4000 = vmatpush.bf16.msra.mxu0 %v1901
      %4001 = vmatpush.bf16.msra.mxu0 %v1884
      %4002 = vmatpush.bf16.msra.mxu0 %v1867
      %4003 = vmatpush.bf16.msra.mxu0 %v1850
      %4004 = vmatpush.bf16.msra.mxu0 %v1833
      %4005 = vmatpush.bf16.msra.mxu0 %v1816
      %4006 = vmatpush.bf16.msra.mxu0 %v1799
      %4007 = vmatmul.bf16.gmra.mxu0 %v735
      %v4008 = vpop.f32.mrf.mxu0
      %v4009 = vadd.f32 %v631, %v4008
      %v4010 = vpop.f32.mrf.mxu0
      %v4011 = vadd.f32 %v631, %v4010
      %4012 = vmatmul.bf16.gmra.mxu0 %v738
      %v4013 = vpop.f32.mrf.mxu0
      %v4014 = vadd.f32 %v631, %v4013
      %v4015 = vpop.f32.mrf.mxu0
      %v4016 = vadd.f32 %v631, %v4015
      %4017 = vmatmul.bf16.gmra.mxu0 %v741
      %v4018 = vpop.f32.mrf.mxu0
      %v4019 = vadd.f32 %v631, %v4018
      %v4020 = vpop.f32.mrf.mxu0
      %v4021 = vadd.f32 %v631, %v4020
      %4022 = vmatmul.bf16.gmra.mxu0 %v744
      %v4023 = vpop.f32.mrf.mxu0
      %v4024 = vadd.f32 %v631, %v4023
      %v4025 = vpop.f32.mrf.mxu0
      %v4026 = vadd.f32 %v631, %v4025
      %4027 = vmatmul.bf16.gmra.mxu0 %v747
      %v4028 = vpop.f32.mrf.mxu0
      %v4029 = vadd.f32 %v631, %v4028
      %v4030 = vpop.f32.mrf.mxu0
      %v4031 = vadd.f32 %v631, %v4030
      %4032 = vmatmul.bf16.gmra.mxu0 %v750
      %v4033 = vpop.f32.mrf.mxu0
      %v4034 = vadd.f32 %v631, %v4033
      %v4035 = vpop.f32.mrf.mxu0
      %v4036 = vadd.f32 %v631, %v4035
      %4037 = vmatmul.bf16.gmra.mxu0 %v753
      %v4038 = vpop.f32.mrf.mxu0
      %v4039 = vadd.f32 %v631, %v4038
      %v4040 = vpop.f32.mrf.mxu0
      %v4041 = vadd.f32 %v631, %v4040
      %4042 = vmatmul.bf16.gmra.mxu0 %v756
      %v4043 = vpop.f32.mrf.mxu0
      %v4044 = vadd.f32 %v631, %v4043
      %v4045 = vpop.f32.mrf.mxu0
      %v4046 = vadd.f32 %v631, %v4045
      %4047 = vdwg.mxu0
      %4048 = vmatpush.bf16.msra.mxu0 %v2054
      %4049 = vmatpush.bf16.msra.mxu0 %v2037
      %4050 = vmatpush.bf16.msra.mxu0 %v2020
      %4051 = vmatpush.bf16.msra.mxu0 %v2003
      %4052 = vmatpush.bf16.msra.mxu0 %v1986
      %4053 = vmatpush.bf16.msra.mxu0 %v1969
      %4054 = vmatpush.bf16.msra.mxu0 %v1952
      %4055 = vmatpush.bf16.msra.mxu0 %v1935
      %4056 = vmatmul.bf16.gmra.mxu0 %v736
      %v4057 = vpop.f32.mrf.mxu0
      %v4058 = vadd.f32 %v4009, %v4057
      %v4059 = vpop.f32.mrf.mxu0
      %v4060 = vadd.f32 %v4011, %v4059
      %4061 = vmatmul.bf16.gmra.mxu0 %v739
      %v4062 = vpop.f32.mrf.mxu0
      %v4063 = vadd.f32 %v4014, %v4062
      %v4064 = vpop.f32.mrf.mxu0
      %v4065 = vadd.f32 %v4016, %v4064
      %4066 = vmatmul.bf16.gmra.mxu0 %v742
      %v4067 = vpop.f32.mrf.mxu0
      %v4068 = vadd.f32 %v4019, %v4067
      %v4069 = vpop.f32.mrf.mxu0
      %v4070 = vadd.f32 %v4021, %v4069
      %4071 = vmatmul.bf16.gmra.mxu0 %v745
      %v4072 = vpop.f32.mrf.mxu0
      %v4073 = vadd.f32 %v4024, %v4072
      %v4074 = vpop.f32.mrf.mxu0
      %v4075 = vadd.f32 %v4026, %v4074
      %4076 = vmatmul.bf16.gmra.mxu0 %v748
      %v4077 = vpop.f32.mrf.mxu0
      %v4078 = vadd.f32 %v4029, %v4077
      %v4079 = vpop.f32.mrf.mxu0
      %v4080 = vadd.f32 %v4031, %v4079
      %4081 = vmatmul.bf16.gmra.mxu0 %v751
      %v4082 = vpop.f32.mrf.mxu0
      %v4083 = vadd.f32 %v4034, %v4082
      %v4084 = vpop.f32.mrf.mxu0
      %v4085 = vadd.f32 %v4036, %v4084
      %4086 = vmatmul.bf16.gmra.mxu0 %v754
      %v4087 = vpop.f32.mrf.mxu0
      %v4088 = vadd.f32 %v4039, %v4087
      %v4089 = vpop.f32.mrf.mxu0
      %v4090 = vadd.f32 %v4041, %v4089
      %4091 = vmatmul.bf16.gmra.mxu0 %v757
      %v4092 = vpop.f32.mrf.mxu0
      %v4093 = vadd.f32 %v4044, %v4092
      %v4094 = vpop.f32.mrf.mxu0
      %v4095 = vadd.f32 %v4046, %v4094
      %4096 = vdwg.mxu0
      %4097 = vmatpush.bf16.msra.mxu0 0
      %4098 = vmatpush.bf16.msra.mxu0 0
      %4099 = vmatpush.bf16.msra.mxu0 0
      %4100 = vmatpush.bf16.msra.mxu0 0
      %4101 = vmatpush.bf16.msra.mxu0 %v2509
      %4102 = vmatpush.bf16.msra.mxu0 %v2105
      %4103 = vmatpush.bf16.msra.mxu0 %v2088
      %4104 = vmatpush.bf16.msra.mxu0 %v2071
      %4105 = vmatmul.bf16.gmra.mxu0 %v2454
      %v4106 = vpop.f32.mrf.mxu0
      %v4107 = vadd.f32 %v4058, %v4106
      %v4108 = vpop.f32.mrf.mxu0
      %v4109 = vadd.f32 %v4060, %v4108
      %4110 = vmatmul.bf16.gmra.mxu0 %v2457
      %v4111 = vpop.f32.mrf.mxu0
      %v4112 = vadd.f32 %v4063, %v4111
      %v4113 = vpop.f32.mrf.mxu0
      %v4114 = vadd.f32 %v4065, %v4113
      %4115 = vmatmul.bf16.gmra.mxu0 %v2460
      %v4116 = vpop.f32.mrf.mxu0
      %v4117 = vadd.f32 %v4068, %v4116
      %v4118 = vpop.f32.mrf.mxu0
      %v4119 = vadd.f32 %v4070, %v4118
      %4120 = vmatmul.bf16.gmra.mxu0 %v2463
      %v4121 = vpop.f32.mrf.mxu0
      %v4122 = vadd.f32 %v4073, %v4121
      %v4123 = vpop.f32.mrf.mxu0
      %v4124 = vadd.f32 %v4075, %v4123
      %4125 = vmatmul.bf16.gmra.mxu0 %v2466
      %v4126 = vpop.f32.mrf.mxu0
      %v4127 = vadd.f32 %v4078, %v4126
      %v4128 = vpop.f32.mrf.mxu0
      %v4129 = vadd.f32 %v4080, %v4128
      %4130 = vmatmul.bf16.gmra.mxu0 %v2469
      %v4131 = vpop.f32.mrf.mxu0
      %v4132 = vadd.f32 %v4083, %v4131
      %v4133 = vpop.f32.mrf.mxu0
      %v4134 = vadd.f32 %v4085, %v4133
      %4135 = vmatmul.bf16.gmra.mxu0 %v2472
      %v4136 = vpop.f32.mrf.mxu0
      %v4137 = vadd.f32 %v4088, %v4136
      %v4138 = vpop.f32.mrf.mxu0
      %v4139 = vadd.f32 %v4090, %v4138
      %4140 = vmatmul.bf16.gmra.mxu0 %v2475
      %v4141 = vpop.f32.mrf.mxu0
      %v4142 = vadd.f32 %v4093, %v4141
      %v4143 = vpop.f32.mrf.mxu0
      %v4144 = vadd.f32 %v4095, %v4143
      %4145 = vdwg.mxu0
      %4146 = vmatpush.bf16.msra.mxu0 %v1919
      %4147 = vmatpush.bf16.msra.mxu0 %v1902
      %4148 = vmatpush.bf16.msra.mxu0 %v1885
      %4149 = vmatpush.bf16.msra.mxu0 %v1868
      %4150 = vmatpush.bf16.msra.mxu0 %v1851
      %4151 = vmatpush.bf16.msra.mxu0 %v1834
      %4152 = vmatpush.bf16.msra.mxu0 %v1817
      %4153 = vmatpush.bf16.msra.mxu0 %v1800
      %4154 = vmatmul.bf16.gmra.mxu0 %v735
      %v4155 = vpop.f32.mrf.mxu0
      %v4156 = vadd.f32 %v632, %v4155
      %v4157 = vpop.f32.mrf.mxu0
      %v4158 = vadd.f32 %v632, %v4157
      %4159 = vmatmul.bf16.gmra.mxu0 %v738
      %v4160 = vpop.f32.mrf.mxu0
      %v4161 = vadd.f32 %v632, %v4160
      %v4162 = vpop.f32.mrf.mxu0
      %v4163 = vadd.f32 %v632, %v4162
      %4164 = vmatmul.bf16.gmra.mxu0 %v741
      %v4165 = vpop.f32.mrf.mxu0
      %v4166 = vadd.f32 %v632, %v4165
      %v4167 = vpop.f32.mrf.mxu0
      %v4168 = vadd.f32 %v632, %v4167
      %4169 = vmatmul.bf16.gmra.mxu0 %v744
      %v4170 = vpop.f32.mrf.mxu0
      %v4171 = vadd.f32 %v632, %v4170
      %v4172 = vpop.f32.mrf.mxu0
      %v4173 = vadd.f32 %v632, %v4172
      %4174 = vmatmul.bf16.gmra.mxu0 %v747
      %v4175 = vpop.f32.mrf.mxu0
      %v4176 = vadd.f32 %v632, %v4175
      %v4177 = vpop.f32.mrf.mxu0
      %v4178 = vadd.f32 %v632, %v4177
      %4179 = vmatmul.bf16.gmra.mxu0 %v750
      %v4180 = vpop.f32.mrf.mxu0
      %v4181 = vadd.f32 %v632, %v4180
      %v4182 = vpop.f32.mrf.mxu0
      %v4183 = vadd.f32 %v632, %v4182
      %4184 = vmatmul.bf16.gmra.mxu0 %v753
      %v4185 = vpop.f32.mrf.mxu0
      %v4186 = vadd.f32 %v632, %v4185
      %v4187 = vpop.f32.mrf.mxu0
      %v4188 = vadd.f32 %v632, %v4187
      %4189 = vmatmul.bf16.gmra.mxu0 %v756
      %v4190 = vpop.f32.mrf.mxu0
      %v4191 = vadd.f32 %v632, %v4190
      %v4192 = vpop.f32.mrf.mxu0
      %v4193 = vadd.f32 %v632, %v4192
      %4194 = vdwg.mxu0
      %4195 = vmatpush.bf16.msra.mxu0 %v2055
      %4196 = vmatpush.bf16.msra.mxu0 %v2038
      %4197 = vmatpush.bf16.msra.mxu0 %v2021
      %4198 = vmatpush.bf16.msra.mxu0 %v2004
      %4199 = vmatpush.bf16.msra.mxu0 %v1987
      %4200 = vmatpush.bf16.msra.mxu0 %v1970
      %4201 = vmatpush.bf16.msra.mxu0 %v1953
      %4202 = vmatpush.bf16.msra.mxu0 %v1936
      %4203 = vmatmul.bf16.gmra.mxu0 %v736
      %v4204 = vpop.f32.mrf.mxu0
      %v4205 = vadd.f32 %v4156, %v4204
      %v4206 = vpop.f32.mrf.mxu0
      %v4207 = vadd.f32 %v4158, %v4206
      %4208 = vmatmul.bf16.gmra.mxu0 %v739
      %v4209 = vpop.f32.mrf.mxu0
      %v4210 = vadd.f32 %v4161, %v4209
      %v4211 = vpop.f32.mrf.mxu0
      %v4212 = vadd.f32 %v4163, %v4211
      %4213 = vmatmul.bf16.gmra.mxu0 %v742
      %v4214 = vpop.f32.mrf.mxu0
      %v4215 = vadd.f32 %v4166, %v4214
      %v4216 = vpop.f32.mrf.mxu0
      %v4217 = vadd.f32 %v4168, %v4216
      %4218 = vmatmul.bf16.gmra.mxu0 %v745
      %v4219 = vpop.f32.mrf.mxu0
      %v4220 = vadd.f32 %v4171, %v4219
      %v4221 = vpop.f32.mrf.mxu0
      %v4222 = vadd.f32 %v4173, %v4221
      %4223 = vmatmul.bf16.gmra.mxu0 %v748
      %v4224 = vpop.f32.mrf.mxu0
      %v4225 = vadd.f32 %v4176, %v4224
      %v4226 = vpop.f32.mrf.mxu0
      %v4227 = vadd.f32 %v4178, %v4226
      %4228 = vmatmul.bf16.gmra.mxu0 %v751
      %v4229 = vpop.f32.mrf.mxu0
      %v4230 = vadd.f32 %v4181, %v4229
      %v4231 = vpop.f32.mrf.mxu0
      %v4232 = vadd.f32 %v4183, %v4231
      %4233 = vmatmul.bf16.gmra.mxu0 %v754
      %v4234 = vpop.f32.mrf.mxu0
      %v4235 = vadd.f32 %v4186, %v4234
      %v4236 = vpop.f32.mrf.mxu0
      %v4237 = vadd.f32 %v4188, %v4236
      %4238 = vmatmul.bf16.gmra.mxu0 %v757
      %v4239 = vpop.f32.mrf.mxu0
      %v4240 = vadd.f32 %v4191, %v4239
      %v4241 = vpop.f32.mrf.mxu0
      %v4242 = vadd.f32 %v4193, %v4241
      %4243 = vdwg.mxu0
      %4244 = vmatpush.bf16.msra.mxu0 0
      %4245 = vmatpush.bf16.msra.mxu0 0
      %4246 = vmatpush.bf16.msra.mxu0 0
      %4247 = vmatpush.bf16.msra.mxu0 0
      %4248 = vmatpush.bf16.msra.mxu0 %v2512
      %4249 = vmatpush.bf16.msra.mxu0 %v2106
      %4250 = vmatpush.bf16.msra.mxu0 %v2089
      %4251 = vmatpush.bf16.msra.mxu0 %v2072
      %4252 = vmatmul.bf16.gmra.mxu0 %v2454
      %v4253 = vpop.f32.mrf.mxu0
      %v4254 = vadd.f32 %v4205, %v4253
      %v4255 = vpop.f32.mrf.mxu0
      %v4256 = vadd.f32 %v4207, %v4255
      %4257 = vmatmul.bf16.gmra.mxu0 %v2457
      %v4258 = vpop.f32.mrf.mxu0
      %v4259 = vadd.f32 %v4210, %v4258
      %v4260 = vpop.f32.mrf.mxu0
      %v4261 = vadd.f32 %v4212, %v4260
      %4262 = vmatmul.bf16.gmra.mxu0 %v2460
      %v4263 = vpop.f32.mrf.mxu0
      %v4264 = vadd.f32 %v4215, %v4263
      %v4265 = vpop.f32.mrf.mxu0
      %v4266 = vadd.f32 %v4217, %v4265
      %4267 = vmatmul.bf16.gmra.mxu0 %v2463
      %v4268 = vpop.f32.mrf.mxu0
      %v4269 = vadd.f32 %v4220, %v4268
      %v4270 = vpop.f32.mrf.mxu0
      %v4271 = vadd.f32 %v4222, %v4270
      %4272 = vmatmul.bf16.gmra.mxu0 %v2466
      %v4273 = vpop.f32.mrf.mxu0
      %v4274 = vadd.f32 %v4225, %v4273
      %v4275 = vpop.f32.mrf.mxu0
      %v4276 = vadd.f32 %v4227, %v4275
      %4277 = vmatmul.bf16.gmra.mxu0 %v2469
      %v4278 = vpop.f32.mrf.mxu0
      %v4279 = vadd.f32 %v4230, %v4278
      %v4280 = vpop.f32.mrf.mxu0
      %v4281 = vadd.f32 %v4232, %v4280
      %4282 = vmatmul.bf16.gmra.mxu0 %v2472
      %v4283 = vpop.f32.mrf.mxu0
      %v4284 = vadd.f32 %v4235, %v4283
      %v4285 = vpop.f32.mrf.mxu0
      %v4286 = vadd.f32 %v4237, %v4285
      %4287 = vmatmul.bf16.gmra.mxu0 %v2475
      %v4288 = vpop.f32.mrf.mxu0
      %v4289 = vadd.f32 %v4240, %v4288
      %v4290 = vpop.f32.mrf.mxu0
      %v4291 = vadd.f32 %v4242, %v4290
      %4292 = vdwg.mxu0
      %4293 = vmatpush.bf16.msra.mxu0 %v1920
      %4294 = vmatpush.bf16.msra.mxu0 %v1903
      %4295 = vmatpush.bf16.msra.mxu0 %v1886
      %4296 = vmatpush.bf16.msra.mxu0 %v1869
      %4297 = vmatpush.bf16.msra.mxu0 %v1852
      %4298 = vmatpush.bf16.msra.mxu0 %v1835
      %4299 = vmatpush.bf16.msra.mxu0 %v1818
      %4300 = vmatpush.bf16.msra.mxu0 %v1801
      %4301 = vmatmul.bf16.gmra.mxu0 %v735
      %v4302 = vpop.f32.mrf.mxu0
      %v4303 = vadd.f32 %v633, %v4302
      %v4304 = vpop.f32.mrf.mxu0
      %v4305 = vadd.f32 %v633, %v4304
      %4306 = vmatmul.bf16.gmra.mxu0 %v738
      %v4307 = vpop.f32.mrf.mxu0
      %v4308 = vadd.f32 %v633, %v4307
      %v4309 = vpop.f32.mrf.mxu0
      %v4310 = vadd.f32 %v633, %v4309
      %4311 = vmatmul.bf16.gmra.mxu0 %v741
      %v4312 = vpop.f32.mrf.mxu0
      %v4313 = vadd.f32 %v633, %v4312
      %v4314 = vpop.f32.mrf.mxu0
      %v4315 = vadd.f32 %v633, %v4314
      %4316 = vmatmul.bf16.gmra.mxu0 %v744
      %v4317 = vpop.f32.mrf.mxu0
      %v4318 = vadd.f32 %v633, %v4317
      %v4319 = vpop.f32.mrf.mxu0
      %v4320 = vadd.f32 %v633, %v4319
      %4321 = vmatmul.bf16.gmra.mxu0 %v747
      %v4322 = vpop.f32.mrf.mxu0
      %v4323 = vadd.f32 %v633, %v4322
      %v4324 = vpop.f32.mrf.mxu0
      %v4325 = vadd.f32 %v633, %v4324
      %4326 = vmatmul.bf16.gmra.mxu0 %v750
      %v4327 = vpop.f32.mrf.mxu0
      %v4328 = vadd.f32 %v633, %v4327
      %v4329 = vpop.f32.mrf.mxu0
      %v4330 = vadd.f32 %v633, %v4329
      %4331 = vmatmul.bf16.gmra.mxu0 %v753
      %v4332 = vpop.f32.mrf.mxu0
      %v4333 = vadd.f32 %v633, %v4332
      %v4334 = vpop.f32.mrf.mxu0
      %v4335 = vadd.f32 %v633, %v4334
      %4336 = vmatmul.bf16.gmra.mxu0 %v756
      %v4337 = vpop.f32.mrf.mxu0
      %v4338 = vadd.f32 %v633, %v4337
      %v4339 = vpop.f32.mrf.mxu0
      %v4340 = vadd.f32 %v633, %v4339
      %4341 = vdwg.mxu0
      %4342 = vmatpush.bf16.msra.mxu0 %v2056
      %4343 = vmatpush.bf16.msra.mxu0 %v2039
      %4344 = vmatpush.bf16.msra.mxu0 %v2022
      %4345 = vmatpush.bf16.msra.mxu0 %v2005
      %4346 = vmatpush.bf16.msra.mxu0 %v1988
      %4347 = vmatpush.bf16.msra.mxu0 %v1971
      %4348 = vmatpush.bf16.msra.mxu0 %v1954
      %4349 = vmatpush.bf16.msra.mxu0 %v1937
      %4350 = vmatmul.bf16.gmra.mxu0 %v736
      %v4351 = vpop.f32.mrf.mxu0
      %v4352 = vadd.f32 %v4303, %v4351
      %v4353 = vpop.f32.mrf.mxu0
      %v4354 = vadd.f32 %v4305, %v4353
      %4355 = vmatmul.bf16.gmra.mxu0 %v739
      %v4356 = vpop.f32.mrf.mxu0
      %v4357 = vadd.f32 %v4308, %v4356
      %v4358 = vpop.f32.mrf.mxu0
      %v4359 = vadd.f32 %v4310, %v4358
      %4360 = vmatmul.bf16.gmra.mxu0 %v742
      %v4361 = vpop.f32.mrf.mxu0
      %v4362 = vadd.f32 %v4313, %v4361
      %v4363 = vpop.f32.mrf.mxu0
      %v4364 = vadd.f32 %v4315, %v4363
      %4365 = vmatmul.bf16.gmra.mxu0 %v745
      %v4366 = vpop.f32.mrf.mxu0
      %v4367 = vadd.f32 %v4318, %v4366
      %v4368 = vpop.f32.mrf.mxu0
      %v4369 = vadd.f32 %v4320, %v4368
      %4370 = vmatmul.bf16.gmra.mxu0 %v748
      %v4371 = vpop.f32.mrf.mxu0
      %v4372 = vadd.f32 %v4323, %v4371
      %v4373 = vpop.f32.mrf.mxu0
      %v4374 = vadd.f32 %v4325, %v4373
      %4375 = vmatmul.bf16.gmra.mxu0 %v751
      %v4376 = vpop.f32.mrf.mxu0
      %v4377 = vadd.f32 %v4328, %v4376
      %v4378 = vpop.f32.mrf.mxu0
      %v4379 = vadd.f32 %v4330, %v4378
      %4380 = vmatmul.bf16.gmra.mxu0 %v754
      %v4381 = vpop.f32.mrf.mxu0
      %v4382 = vadd.f32 %v4333, %v4381
      %v4383 = vpop.f32.mrf.mxu0
      %v4384 = vadd.f32 %v4335, %v4383
      %4385 = vmatmul.bf16.gmra.mxu0 %v757
      %v4386 = vpop.f32.mrf.mxu0
      %v4387 = vadd.f32 %v4338, %v4386
      %v4388 = vpop.f32.mrf.mxu0
      %v4389 = vadd.f32 %v4340, %v4388
      %4390 = vdwg.mxu0
      %4391 = vmatpush.bf16.msra.mxu0 0
      %4392 = vmatpush.bf16.msra.mxu0 0
      %4393 = vmatpush.bf16.msra.mxu0 0
      %4394 = vmatpush.bf16.msra.mxu0 0
      %4395 = vmatpush.bf16.msra.mxu0 %v2515
      %4396 = vmatpush.bf16.msra.mxu0 %v2107
      %4397 = vmatpush.bf16.msra.mxu0 %v2090
      %4398 = vmatpush.bf16.msra.mxu0 %v2073
      %4399 = vmatmul.bf16.gmra.mxu0 %v2454
      %v4400 = vpop.f32.mrf.mxu0
      %v4401 = vadd.f32 %v4352, %v4400
      %v4402 = vpop.f32.mrf.mxu0
      %v4403 = vadd.f32 %v4354, %v4402
      %4404 = vmatmul.bf16.gmra.mxu0 %v2457
      %v4405 = vpop.f32.mrf.mxu0
      %v4406 = vadd.f32 %v4357, %v4405
      %v4407 = vpop.f32.mrf.mxu0
      %v4408 = vadd.f32 %v4359, %v4407
      %4409 = vmatmul.bf16.gmra.mxu0 %v2460
      %v4410 = vpop.f32.mrf.mxu0
      %v4411 = vadd.f32 %v4362, %v4410
      %v4412 = vpop.f32.mrf.mxu0
      %v4413 = vadd.f32 %v4364, %v4412
      %4414 = vmatmul.bf16.gmra.mxu0 %v2463
      %v4415 = vpop.f32.mrf.mxu0
      %v4416 = vadd.f32 %v4367, %v4415
      %v4417 = vpop.f32.mrf.mxu0
      %v4418 = vadd.f32 %v4369, %v4417
      %4419 = vmatmul.bf16.gmra.mxu0 %v2466
      %v4420 = vpop.f32.mrf.mxu0
      %v4421 = vadd.f32 %v4372, %v4420
      %v4422 = vpop.f32.mrf.mxu0
      %v4423 = vadd.f32 %v4374, %v4422
      %4424 = vmatmul.bf16.gmra.mxu0 %v2469
      %v4425 = vpop.f32.mrf.mxu0
      %v4426 = vadd.f32 %v4377, %v4425
      %v4427 = vpop.f32.mrf.mxu0
      %v4428 = vadd.f32 %v4379, %v4427
      %4429 = vmatmul.bf16.gmra.mxu0 %v2472
      %v4430 = vpop.f32.mrf.mxu0
      %v4431 = vadd.f32 %v4382, %v4430
      %v4432 = vpop.f32.mrf.mxu0
      %v4433 = vadd.f32 %v4384, %v4432
      %4434 = vmatmul.bf16.gmra.mxu0 %v2475
      %v4435 = vpop.f32.mrf.mxu0
      %v4436 = vadd.f32 %v4387, %v4435
      %v4437 = vpop.f32.mrf.mxu0
      %v4438 = vadd.f32 %v4389, %v4437
      %4439 = vdwg.mxu0
      %4440 = vmatpush.bf16.msra.mxu0 %v1921
      %4441 = vmatpush.bf16.msra.mxu0 %v1904
      %4442 = vmatpush.bf16.msra.mxu0 %v1887
      %4443 = vmatpush.bf16.msra.mxu0 %v1870
      %4444 = vmatpush.bf16.msra.mxu0 %v1853
      %4445 = vmatpush.bf16.msra.mxu0 %v1836
      %4446 = vmatpush.bf16.msra.mxu0 %v1819
      %4447 = vmatpush.bf16.msra.mxu0 %v1802
      %4448 = vmatmul.bf16.gmra.mxu0 %v735
      %v4449 = vpop.f32.mrf.mxu0
      %v4450 = vadd.f32 %v634, %v4449
      %v4451 = vpop.f32.mrf.mxu0
      %v4452 = vadd.f32 %v634, %v4451
      %4453 = vmatmul.bf16.gmra.mxu0 %v738
      %v4454 = vpop.f32.mrf.mxu0
      %v4455 = vadd.f32 %v634, %v4454
      %v4456 = vpop.f32.mrf.mxu0
      %v4457 = vadd.f32 %v634, %v4456
      %4458 = vmatmul.bf16.gmra.mxu0 %v741
      %v4459 = vpop.f32.mrf.mxu0
      %v4460 = vadd.f32 %v634, %v4459
      %v4461 = vpop.f32.mrf.mxu0
      %v4462 = vadd.f32 %v634, %v4461
      %4463 = vmatmul.bf16.gmra.mxu0 %v744
      %v4464 = vpop.f32.mrf.mxu0
      %v4465 = vadd.f32 %v634, %v4464
      %v4466 = vpop.f32.mrf.mxu0
      %v4467 = vadd.f32 %v634, %v4466
      %4468 = vmatmul.bf16.gmra.mxu0 %v747
      %v4469 = vpop.f32.mrf.mxu0
      %v4470 = vadd.f32 %v634, %v4469
      %v4471 = vpop.f32.mrf.mxu0
      %v4472 = vadd.f32 %v634, %v4471
      %4473 = vmatmul.bf16.gmra.mxu0 %v750
      %v4474 = vpop.f32.mrf.mxu0
      %v4475 = vadd.f32 %v634, %v4474
      %v4476 = vpop.f32.mrf.mxu0
      %v4477 = vadd.f32 %v634, %v4476
      %4478 = vmatmul.bf16.gmra.mxu0 %v753
      %v4479 = vpop.f32.mrf.mxu0
      %v4480 = vadd.f32 %v634, %v4479
      %v4481 = vpop.f32.mrf.mxu0
      %v4482 = vadd.f32 %v634, %v4481
      %4483 = vmatmul.bf16.gmra.mxu0 %v756
      %v4484 = vpop.f32.mrf.mxu0
      %v4485 = vadd.f32 %v634, %v4484
      %v4486 = vpop.f32.mrf.mxu0
      %v4487 = vadd.f32 %v634, %v4486
      %4488 = vdwg.mxu0
      %4489 = vmatpush.bf16.msra.mxu0 %v2057
      %4490 = vmatpush.bf16.msra.mxu0 %v2040
      %4491 = vmatpush.bf16.msra.mxu0 %v2023
      %4492 = vmatpush.bf16.msra.mxu0 %v2006
      %4493 = vmatpush.bf16.msra.mxu0 %v1989
      %4494 = vmatpush.bf16.msra.mxu0 %v1972
      %4495 = vmatpush.bf16.msra.mxu0 %v1955
      %4496 = vmatpush.bf16.msra.mxu0 %v1938
      %4497 = vmatmul.bf16.gmra.mxu0 %v736
      %v4498 = vpop.f32.mrf.mxu0
      %v4499 = vadd.f32 %v4450, %v4498
      %v4500 = vpop.f32.mrf.mxu0
      %v4501 = vadd.f32 %v4452, %v4500
      %4502 = vmatmul.bf16.gmra.mxu0 %v739
      %v4503 = vpop.f32.mrf.mxu0
      %v4504 = vadd.f32 %v4455, %v4503
      %v4505 = vpop.f32.mrf.mxu0
      %v4506 = vadd.f32 %v4457, %v4505
      %4507 = vmatmul.bf16.gmra.mxu0 %v742
      %v4508 = vpop.f32.mrf.mxu0
      %v4509 = vadd.f32 %v4460, %v4508
      %v4510 = vpop.f32.mrf.mxu0
      %v4511 = vadd.f32 %v4462, %v4510
      %4512 = vmatmul.bf16.gmra.mxu0 %v745
      %v4513 = vpop.f32.mrf.mxu0
      %v4514 = vadd.f32 %v4465, %v4513
      %v4515 = vpop.f32.mrf.mxu0
      %v4516 = vadd.f32 %v4467, %v4515
      %4517 = vmatmul.bf16.gmra.mxu0 %v748
      %v4518 = vpop.f32.mrf.mxu0
      %v4519 = vadd.f32 %v4470, %v4518
      %v4520 = vpop.f32.mrf.mxu0
      %v4521 = vadd.f32 %v4472, %v4520
      %4522 = vmatmul.bf16.gmra.mxu0 %v751
      %v4523 = vpop.f32.mrf.mxu0
      %v4524 = vadd.f32 %v4475, %v4523
      %v4525 = vpop.f32.mrf.mxu0
      %v4526 = vadd.f32 %v4477, %v4525
      %4527 = vmatmul.bf16.gmra.mxu0 %v754
      %v4528 = vpop.f32.mrf.mxu0
      %v4529 = vadd.f32 %v4480, %v4528
      %v4530 = vpop.f32.mrf.mxu0
      %v4531 = vadd.f32 %v4482, %v4530
      %4532 = vmatmul.bf16.gmra.mxu0 %v757
      %v4533 = vpop.f32.mrf.mxu0
      %v4534 = vadd.f32 %v4485, %v4533
      %v4535 = vpop.f32.mrf.mxu0
      %v4536 = vadd.f32 %v4487, %v4535
      %4537 = vdwg.mxu0
      %4538 = vmatpush.bf16.msra.mxu0 0
      %4539 = vmatpush.bf16.msra.mxu0 0
      %4540 = vmatpush.bf16.msra.mxu0 0
      %4541 = vmatpush.bf16.msra.mxu0 0
      %4542 = vmatpush.bf16.msra.mxu0 %v2518
      %4543 = vmatpush.bf16.msra.mxu0 %v2108
      %4544 = vmatpush.bf16.msra.mxu0 %v2091
      %4545 = vmatpush.bf16.msra.mxu0 %v2074
      %4546 = vmatmul.bf16.gmra.mxu0 %v2454
      %v4547 = vpop.f32.mrf.mxu0
      %v4548 = vadd.f32 %v4499, %v4547
      %v4549 = vpop.f32.mrf.mxu0
      %v4550 = vadd.f32 %v4501, %v4549
      %4551 = vmatmul.bf16.gmra.mxu0 %v2457
      %v4552 = vpop.f32.mrf.mxu0
      %v4553 = vadd.f32 %v4504, %v4552
      %v4554 = vpop.f32.mrf.mxu0
      %v4555 = vadd.f32 %v4506, %v4554
      %4556 = vmatmul.bf16.gmra.mxu0 %v2460
      %v4557 = vpop.f32.mrf.mxu0
      %v4558 = vadd.f32 %v4509, %v4557
      %v4559 = vpop.f32.mrf.mxu0
      %v4560 = vadd.f32 %v4511, %v4559
      %4561 = vmatmul.bf16.gmra.mxu0 %v2463
      %v4562 = vpop.f32.mrf.mxu0
      %v4563 = vadd.f32 %v4514, %v4562
      %v4564 = vpop.f32.mrf.mxu0
      %v4565 = vadd.f32 %v4516, %v4564
      %4566 = vmatmul.bf16.gmra.mxu0 %v2466
      %v4567 = vpop.f32.mrf.mxu0
      %v4568 = vadd.f32 %v4519, %v4567
      %v4569 = vpop.f32.mrf.mxu0
      %v4570 = vadd.f32 %v4521, %v4569
      %4571 = vmatmul.bf16.gmra.mxu0 %v2469
      %v4572 = vpop.f32.mrf.mxu0
      %v4573 = vadd.f32 %v4524, %v4572
      %v4574 = vpop.f32.mrf.mxu0
      %v4575 = vadd.f32 %v4526, %v4574
      %4576 = vmatmul.bf16.gmra.mxu0 %v2472
      %v4577 = vpop.f32.mrf.mxu0
      %v4578 = vadd.f32 %v4529, %v4577
      %v4579 = vpop.f32.mrf.mxu0
      %v4580 = vadd.f32 %v4531, %v4579
      %4581 = vmatmul.bf16.gmra.mxu0 %v2475
      %v4582 = vpop.f32.mrf.mxu0
      %v4583 = vadd.f32 %v4534, %v4582
      %v4584 = vpop.f32.mrf.mxu0
      %v4585 = vadd.f32 %v4536, %v4584
      %4586 = vdwg.mxu0
      %4587 = vmatpush.bf16.msra.mxu0 %v1922
      %4588 = vmatpush.bf16.msra.mxu0 %v1905
      %4589 = vmatpush.bf16.msra.mxu0 %v1888
      %4590 = vmatpush.bf16.msra.mxu0 %v1871
      %4591 = vmatpush.bf16.msra.mxu0 %v1854
      %4592 = vmatpush.bf16.msra.mxu0 %v1837
      %4593 = vmatpush.bf16.msra.mxu0 %v1820
      %4594 = vmatpush.bf16.msra.mxu0 %v1803
      %4595 = vmatmul.bf16.gmra.mxu0 %v735
      %v4596 = vpop.f32.mrf.mxu0
      %v4597 = vadd.f32 %v635, %v4596
      %v4598 = vpop.f32.mrf.mxu0
      %v4599 = vadd.f32 %v635, %v4598
      %4600 = vmatmul.bf16.gmra.mxu0 %v738
      %v4601 = vpop.f32.mrf.mxu0
      %v4602 = vadd.f32 %v635, %v4601
      %v4603 = vpop.f32.mrf.mxu0
      %v4604 = vadd.f32 %v635, %v4603
      %4605 = vmatmul.bf16.gmra.mxu0 %v741
      %v4606 = vpop.f32.mrf.mxu0
      %v4607 = vadd.f32 %v635, %v4606
      %v4608 = vpop.f32.mrf.mxu0
      %v4609 = vadd.f32 %v635, %v4608
      %4610 = vmatmul.bf16.gmra.mxu0 %v744
      %v4611 = vpop.f32.mrf.mxu0
      %v4612 = vadd.f32 %v635, %v4611
      %v4613 = vpop.f32.mrf.mxu0
      %v4614 = vadd.f32 %v635, %v4613
      %4615 = vmatmul.bf16.gmra.mxu0 %v747
      %v4616 = vpop.f32.mrf.mxu0
      %v4617 = vadd.f32 %v635, %v4616
      %v4618 = vpop.f32.mrf.mxu0
      %v4619 = vadd.f32 %v635, %v4618
      %4620 = vmatmul.bf16.gmra.mxu0 %v750
      %v4621 = vpop.f32.mrf.mxu0
      %v4622 = vadd.f32 %v635, %v4621
      %v4623 = vpop.f32.mrf.mxu0
      %v4624 = vadd.f32 %v635, %v4623
      %4625 = vmatmul.bf16.gmra.mxu0 %v753
      %v4626 = vpop.f32.mrf.mxu0
      %v4627 = vadd.f32 %v635, %v4626
      %v4628 = vpop.f32.mrf.mxu0
      %v4629 = vadd.f32 %v635, %v4628
      %4630 = vmatmul.bf16.gmra.mxu0 %v756
      %v4631 = vpop.f32.mrf.mxu0
      %v4632 = vadd.f32 %v635, %v4631
      %v4633 = vpop.f32.mrf.mxu0
      %v4634 = vadd.f32 %v635, %v4633
      %4635 = vdwg.mxu0
      %4636 = vmatpush.bf16.msra.mxu0 %v2058
      %4637 = vmatpush.bf16.msra.mxu0 %v2041
      %4638 = vmatpush.bf16.msra.mxu0 %v2024
      %4639 = vmatpush.bf16.msra.mxu0 %v2007
      %4640 = vmatpush.bf16.msra.mxu0 %v1990
      %4641 = vmatpush.bf16.msra.mxu0 %v1973
      %4642 = vmatpush.bf16.msra.mxu0 %v1956
      %4643 = vmatpush.bf16.msra.mxu0 %v1939
      %4644 = vmatmul.bf16.gmra.mxu0 %v736
      %v4645 = vpop.f32.mrf.mxu0
      %v4646 = vadd.f32 %v4597, %v4645
      %v4647 = vpop.f32.mrf.mxu0
      %v4648 = vadd.f32 %v4599, %v4647
      %4649 = vmatmul.bf16.gmra.mxu0 %v739
      %v4650 = vpop.f32.mrf.mxu0
      %v4651 = vadd.f32 %v4602, %v4650
      %v4652 = vpop.f32.mrf.mxu0
      %v4653 = vadd.f32 %v4604, %v4652
      %4654 = vmatmul.bf16.gmra.mxu0 %v742
      %v4655 = vpop.f32.mrf.mxu0
      %v4656 = vadd.f32 %v4607, %v4655
      %v4657 = vpop.f32.mrf.mxu0
      %v4658 = vadd.f32 %v4609, %v4657
      %4659 = vmatmul.bf16.gmra.mxu0 %v745
      %v4660 = vpop.f32.mrf.mxu0
      %v4661 = vadd.f32 %v4612, %v4660
      %v4662 = vpop.f32.mrf.mxu0
      %v4663 = vadd.f32 %v4614, %v4662
      %4664 = vmatmul.bf16.gmra.mxu0 %v748
      %v4665 = vpop.f32.mrf.mxu0
      %v4666 = vadd.f32 %v4617, %v4665
      %v4667 = vpop.f32.mrf.mxu0
      %v4668 = vadd.f32 %v4619, %v4667
      %4669 = vmatmul.bf16.gmra.mxu0 %v751
      %v4670 = vpop.f32.mrf.mxu0
      %v4671 = vadd.f32 %v4622, %v4670
      %v4672 = vpop.f32.mrf.mxu0
      %v4673 = vadd.f32 %v4624, %v4672
      %4674 = vmatmul.bf16.gmra.mxu0 %v754
      %v4675 = vpop.f32.mrf.mxu0
      %v4676 = vadd.f32 %v4627, %v4675
      %v4677 = vpop.f32.mrf.mxu0
      %v4678 = vadd.f32 %v4629, %v4677
      %4679 = vmatmul.bf16.gmra.mxu0 %v757
      %v4680 = vpop.f32.mrf.mxu0
      %v4681 = vadd.f32 %v4632, %v4680
      %v4682 = vpop.f32.mrf.mxu0
      %v4683 = vadd.f32 %v4634, %v4682
      %4684 = vdwg.mxu0
      %4685 = vmatpush.bf16.msra.mxu0 0
      %4686 = vmatpush.bf16.msra.mxu0 0
      %4687 = vmatpush.bf16.msra.mxu0 0
      %4688 = vmatpush.bf16.msra.mxu0 0
      %4689 = vmatpush.bf16.msra.mxu0 %v2521
      %4690 = vmatpush.bf16.msra.mxu0 %v2109
      %4691 = vmatpush.bf16.msra.mxu0 %v2092
      %4692 = vmatpush.bf16.msra.mxu0 %v2075
      %4693 = vmatmul.bf16.gmra.mxu0 %v2454
      %v4694 = vpop.f32.mrf.mxu0
      %v4695 = vadd.f32 %v4646, %v4694
      %v4696 = vpop.f32.mrf.mxu0
      %v4697 = vadd.f32 %v4648, %v4696
      %4698 = vmatmul.bf16.gmra.mxu0 %v2457
      %v4699 = vpop.f32.mrf.mxu0
      %v4700 = vadd.f32 %v4651, %v4699
      %v4701 = vpop.f32.mrf.mxu0
      %v4702 = vadd.f32 %v4653, %v4701
      %4703 = vmatmul.bf16.gmra.mxu0 %v2460
      %v4704 = vpop.f32.mrf.mxu0
      %v4705 = vadd.f32 %v4656, %v4704
      %v4706 = vpop.f32.mrf.mxu0
      %v4707 = vadd.f32 %v4658, %v4706
      %4708 = vmatmul.bf16.gmra.mxu0 %v2463
      %v4709 = vpop.f32.mrf.mxu0
      %v4710 = vadd.f32 %v4661, %v4709
      %v4711 = vpop.f32.mrf.mxu0
      %v4712 = vadd.f32 %v4663, %v4711
      %4713 = vmatmul.bf16.gmra.mxu0 %v2466
      %v4714 = vpop.f32.mrf.mxu0
      %v4715 = vadd.f32 %v4666, %v4714
      %v4716 = vpop.f32.mrf.mxu0
      %v4717 = vadd.f32 %v4668, %v4716
      %4718 = vmatmul.bf16.gmra.mxu0 %v2469
      %v4719 = vpop.f32.mrf.mxu0
      %v4720 = vadd.f32 %v4671, %v4719
      %v4721 = vpop.f32.mrf.mxu0
      %v4722 = vadd.f32 %v4673, %v4721
      %4723 = vmatmul.bf16.gmra.mxu0 %v2472
      %v4724 = vpop.f32.mrf.mxu0
      %v4725 = vadd.f32 %v4676, %v4724
      %v4726 = vpop.f32.mrf.mxu0
      %v4727 = vadd.f32 %v4678, %v4726
      %4728 = vmatmul.bf16.gmra.mxu0 %v2475
      %v4729 = vpop.f32.mrf.mxu0
      %v4730 = vadd.f32 %v4681, %v4729
      %v4731 = vpop.f32.mrf.mxu0
      %v4732 = vadd.f32 %v4683, %v4731
      %4733 = vdwg.mxu0
      %4734 = vmatpush.bf16.msra.mxu0 %v1923
      %4735 = vmatpush.bf16.msra.mxu0 %v1906
      %4736 = vmatpush.bf16.msra.mxu0 %v1889
      %4737 = vmatpush.bf16.msra.mxu0 %v1872
      %4738 = vmatpush.bf16.msra.mxu0 %v1855
      %4739 = vmatpush.bf16.msra.mxu0 %v1838
      %4740 = vmatpush.bf16.msra.mxu0 %v1821
      %4741 = vmatpush.bf16.msra.mxu0 %v1804
      %4742 = vmatmul.bf16.gmra.mxu0 %v735
      %v4743 = vpop.f32.mrf.mxu0
      %v4744 = vadd.f32 %v636, %v4743
      %v4745 = vpop.f32.mrf.mxu0
      %v4746 = vadd.f32 %v636, %v4745
      %4747 = vmatmul.bf16.gmra.mxu0 %v738
      %v4748 = vpop.f32.mrf.mxu0
      %v4749 = vadd.f32 %v636, %v4748
      %v4750 = vpop.f32.mrf.mxu0
      %v4751 = vadd.f32 %v636, %v4750
      %4752 = vmatmul.bf16.gmra.mxu0 %v741
      %v4753 = vpop.f32.mrf.mxu0
      %v4754 = vadd.f32 %v636, %v4753
      %v4755 = vpop.f32.mrf.mxu0
      %v4756 = vadd.f32 %v636, %v4755
      %4757 = vmatmul.bf16.gmra.mxu0 %v744
      %v4758 = vpop.f32.mrf.mxu0
      %v4759 = vadd.f32 %v636, %v4758
      %v4760 = vpop.f32.mrf.mxu0
      %v4761 = vadd.f32 %v636, %v4760
      %4762 = vmatmul.bf16.gmra.mxu0 %v747
      %v4763 = vpop.f32.mrf.mxu0
      %v4764 = vadd.f32 %v636, %v4763
      %v4765 = vpop.f32.mrf.mxu0
      %v4766 = vadd.f32 %v636, %v4765
      %4767 = vmatmul.bf16.gmra.mxu0 %v750
      %v4768 = vpop.f32.mrf.mxu0
      %v4769 = vadd.f32 %v636, %v4768
      %v4770 = vpop.f32.mrf.mxu0
      %v4771 = vadd.f32 %v636, %v4770
      %4772 = vmatmul.bf16.gmra.mxu0 %v753
      %v4773 = vpop.f32.mrf.mxu0
      %v4774 = vadd.f32 %v636, %v4773
      %v4775 = vpop.f32.mrf.mxu0
      %v4776 = vadd.f32 %v636, %v4775
      %4777 = vmatmul.bf16.gmra.mxu0 %v756
      %v4778 = vpop.f32.mrf.mxu0
      %v4779 = vadd.f32 %v636, %v4778
      %v4780 = vpop.f32.mrf.mxu0
      %v4781 = vadd.f32 %v636, %v4780
      %4782 = vdwg.mxu0
      %4783 = vmatpush.bf16.msra.mxu0 %v2059
      %4784 = vmatpush.bf16.msra.mxu0 %v2042
      %4785 = vmatpush.bf16.msra.mxu0 %v2025
      %4786 = vmatpush.bf16.msra.mxu0 %v2008
      %4787 = vmatpush.bf16.msra.mxu0 %v1991
      %4788 = vmatpush.bf16.msra.mxu0 %v1974
      %4789 = vmatpush.bf16.msra.mxu0 %v1957
      %4790 = vmatpush.bf16.msra.mxu0 %v1940
      %4791 = vmatmul.bf16.gmra.mxu0 %v736
      %v4792 = vpop.f32.mrf.mxu0
      %v4793 = vadd.f32 %v4744, %v4792
      %v4794 = vpop.f32.mrf.mxu0
      %v4795 = vadd.f32 %v4746, %v4794
      %4796 = vmatmul.bf16.gmra.mxu0 %v739
      %v4797 = vpop.f32.mrf.mxu0
      %v4798 = vadd.f32 %v4749, %v4797
      %v4799 = vpop.f32.mrf.mxu0
      %v4800 = vadd.f32 %v4751, %v4799
      %4801 = vmatmul.bf16.gmra.mxu0 %v742
      %v4802 = vpop.f32.mrf.mxu0
      %v4803 = vadd.f32 %v4754, %v4802
      %v4804 = vpop.f32.mrf.mxu0
      %v4805 = vadd.f32 %v4756, %v4804
      %4806 = vmatmul.bf16.gmra.mxu0 %v745
      %v4807 = vpop.f32.mrf.mxu0
      %v4808 = vadd.f32 %v4759, %v4807
      %v4809 = vpop.f32.mrf.mxu0
      %v4810 = vadd.f32 %v4761, %v4809
      %4811 = vmatmul.bf16.gmra.mxu0 %v748
      %v4812 = vpop.f32.mrf.mxu0
      %v4813 = vadd.f32 %v4764, %v4812
      %v4814 = vpop.f32.mrf.mxu0
      %v4815 = vadd.f32 %v4766, %v4814
      %4816 = vmatmul.bf16.gmra.mxu0 %v751
      %v4817 = vpop.f32.mrf.mxu0
      %v4818 = vadd.f32 %v4769, %v4817
      %v4819 = vpop.f32.mrf.mxu0
      %v4820 = vadd.f32 %v4771, %v4819
      %4821 = vmatmul.bf16.gmra.mxu0 %v754
      %v4822 = vpop.f32.mrf.mxu0
      %v4823 = vadd.f32 %v4774, %v4822
      %v4824 = vpop.f32.mrf.mxu0
      %v4825 = vadd.f32 %v4776, %v4824
      %4826 = vmatmul.bf16.gmra.mxu0 %v757
      %v4827 = vpop.f32.mrf.mxu0
      %v4828 = vadd.f32 %v4779, %v4827
      %v4829 = vpop.f32.mrf.mxu0
      %v4830 = vadd.f32 %v4781, %v4829
      %4831 = vdwg.mxu0
      %4832 = vmatpush.bf16.msra.mxu0 0
      %4833 = vmatpush.bf16.msra.mxu0 0
      %4834 = vmatpush.bf16.msra.mxu0 0
      %4835 = vmatpush.bf16.msra.mxu0 0
      %4836 = vmatpush.bf16.msra.mxu0 %v2524
      %4837 = vmatpush.bf16.msra.mxu0 %v2110
      %4838 = vmatpush.bf16.msra.mxu0 %v2093
      %4839 = vmatpush.bf16.msra.mxu0 %v2076
      %4840 = vmatmul.bf16.gmra.mxu0 %v2454
      %v4841 = vpop.f32.mrf.mxu0
      %v4842 = vadd.f32 %v4793, %v4841
      %v4843 = vpop.f32.mrf.mxu0
      %v4844 = vadd.f32 %v4795, %v4843
      %4845 = vmatmul.bf16.gmra.mxu0 %v2457
      %v4846 = vpop.f32.mrf.mxu0
      %v4847 = vadd.f32 %v4798, %v4846
      %v4848 = vpop.f32.mrf.mxu0
      %v4849 = vadd.f32 %v4800, %v4848
      %4850 = vmatmul.bf16.gmra.mxu0 %v2460
      %v4851 = vpop.f32.mrf.mxu0
      %v4852 = vadd.f32 %v4803, %v4851
      %v4853 = vpop.f32.mrf.mxu0
      %v4854 = vadd.f32 %v4805, %v4853
      %4855 = vmatmul.bf16.gmra.mxu0 %v2463
      %v4856 = vpop.f32.mrf.mxu0
      %v4857 = vadd.f32 %v4808, %v4856
      %v4858 = vpop.f32.mrf.mxu0
      %v4859 = vadd.f32 %v4810, %v4858
      %4860 = vmatmul.bf16.gmra.mxu0 %v2466
      %v4861 = vpop.f32.mrf.mxu0
      %v4862 = vadd.f32 %v4813, %v4861
      %v4863 = vpop.f32.mrf.mxu0
      %v4864 = vadd.f32 %v4815, %v4863
      %4865 = vmatmul.bf16.gmra.mxu0 %v2469
      %v4866 = vpop.f32.mrf.mxu0
      %v4867 = vadd.f32 %v4818, %v4866
      %v4868 = vpop.f32.mrf.mxu0
      %v4869 = vadd.f32 %v4820, %v4868
      %4870 = vmatmul.bf16.gmra.mxu0 %v2472
      %v4871 = vpop.f32.mrf.mxu0
      %v4872 = vadd.f32 %v4823, %v4871
      %v4873 = vpop.f32.mrf.mxu0
      %v4874 = vadd.f32 %v4825, %v4873
      %4875 = vmatmul.bf16.gmra.mxu0 %v2475
      %v4876 = vpop.f32.mrf.mxu0
      %v4877 = vadd.f32 %v4828, %v4876
      %v4878 = vpop.f32.mrf.mxu0
      %v4879 = vadd.f32 %v4830, %v4878
      %4880 = vdwg.mxu0
      %4881 = vmatpush.bf16.msra.mxu0 %v1924
      %4882 = vmatpush.bf16.msra.mxu0 %v1907
      %4883 = vmatpush.bf16.msra.mxu0 %v1890
      %4884 = vmatpush.bf16.msra.mxu0 %v1873
      %4885 = vmatpush.bf16.msra.mxu0 %v1856
      %4886 = vmatpush.bf16.msra.mxu0 %v1839
      %4887 = vmatpush.bf16.msra.mxu0 %v1822
      %4888 = vmatpush.bf16.msra.mxu0 %v1805
      %4889 = vmatmul.bf16.gmra.mxu0 %v735
      %v4890 = vpop.f32.mrf.mxu0
      %v4891 = vadd.f32 %v637, %v4890
      %v4892 = vpop.f32.mrf.mxu0
      %v4893 = vadd.f32 %v637, %v4892
      %4894 = vmatmul.bf16.gmra.mxu0 %v738
      %v4895 = vpop.f32.mrf.mxu0
      %v4896 = vadd.f32 %v637, %v4895
      %v4897 = vpop.f32.mrf.mxu0
      %v4898 = vadd.f32 %v637, %v4897
      %4899 = vmatmul.bf16.gmra.mxu0 %v741
      %v4900 = vpop.f32.mrf.mxu0
      %v4901 = vadd.f32 %v637, %v4900
      %v4902 = vpop.f32.mrf.mxu0
      %v4903 = vadd.f32 %v637, %v4902
      %4904 = vmatmul.bf16.gmra.mxu0 %v744
      %v4905 = vpop.f32.mrf.mxu0
      %v4906 = vadd.f32 %v637, %v4905
      %v4907 = vpop.f32.mrf.mxu0
      %v4908 = vadd.f32 %v637, %v4907
      %4909 = vmatmul.bf16.gmra.mxu0 %v747
      %v4910 = vpop.f32.mrf.mxu0
      %v4911 = vadd.f32 %v637, %v4910
      %v4912 = vpop.f32.mrf.mxu0
      %v4913 = vadd.f32 %v637, %v4912
      %4914 = vmatmul.bf16.gmra.mxu0 %v750
      %v4915 = vpop.f32.mrf.mxu0
      %v4916 = vadd.f32 %v637, %v4915
      %v4917 = vpop.f32.mrf.mxu0
      %v4918 = vadd.f32 %v637, %v4917
      %4919 = vmatmul.bf16.gmra.mxu0 %v753
      %v4920 = vpop.f32.mrf.mxu0
      %v4921 = vadd.f32 %v637, %v4920
      %v4922 = vpop.f32.mrf.mxu0
      %v4923 = vadd.f32 %v637, %v4922
      %4924 = vmatmul.bf16.gmra.mxu0 %v756
      %v4925 = vpop.f32.mrf.mxu0
      %v4926 = vadd.f32 %v637, %v4925
      %v4927 = vpop.f32.mrf.mxu0
      %v4928 = vadd.f32 %v637, %v4927
      %4929 = vdwg.mxu0
      %4930 = vmatpush.bf16.msra.mxu0 %v2060
      %4931 = vmatpush.bf16.msra.mxu0 %v2043
      %4932 = vmatpush.bf16.msra.mxu0 %v2026
      %4933 = vmatpush.bf16.msra.mxu0 %v2009
      %4934 = vmatpush.bf16.msra.mxu0 %v1992
      %4935 = vmatpush.bf16.msra.mxu0 %v1975
      %4936 = vmatpush.bf16.msra.mxu0 %v1958
      %4937 = vmatpush.bf16.msra.mxu0 %v1941
      %4938 = vmatmul.bf16.gmra.mxu0 %v736
      %v4939 = vpop.f32.mrf.mxu0
      %v4940 = vadd.f32 %v4891, %v4939
      %v4941 = vpop.f32.mrf.mxu0
      %v4942 = vadd.f32 %v4893, %v4941
      %4943 = vmatmul.bf16.gmra.mxu0 %v739
      %v4944 = vpop.f32.mrf.mxu0
      %v4945 = vadd.f32 %v4896, %v4944
      %v4946 = vpop.f32.mrf.mxu0
      %v4947 = vadd.f32 %v4898, %v4946
      %4948 = vmatmul.bf16.gmra.mxu0 %v742
      %v4949 = vpop.f32.mrf.mxu0
      %v4950 = vadd.f32 %v4901, %v4949
      %v4951 = vpop.f32.mrf.mxu0
      %v4952 = vadd.f32 %v4903, %v4951
      %4953 = vmatmul.bf16.gmra.mxu0 %v745
      %v4954 = vpop.f32.mrf.mxu0
      %v4955 = vadd.f32 %v4906, %v4954
      %v4956 = vpop.f32.mrf.mxu0
      %v4957 = vadd.f32 %v4908, %v4956
      %4958 = vmatmul.bf16.gmra.mxu0 %v748
      %v4959 = vpop.f32.mrf.mxu0
      %v4960 = vadd.f32 %v4911, %v4959
      %v4961 = vpop.f32.mrf.mxu0
      %v4962 = vadd.f32 %v4913, %v4961
      %4963 = vmatmul.bf16.gmra.mxu0 %v751
      %v4964 = vpop.f32.mrf.mxu0
      %v4965 = vadd.f32 %v4916, %v4964
      %v4966 = vpop.f32.mrf.mxu0
      %v4967 = vadd.f32 %v4918, %v4966
      %4968 = vmatmul.bf16.gmra.mxu0 %v754
      %v4969 = vpop.f32.mrf.mxu0
      %v4970 = vadd.f32 %v4921, %v4969
      %v4971 = vpop.f32.mrf.mxu0
      %v4972 = vadd.f32 %v4923, %v4971
      %4973 = vmatmul.bf16.gmra.mxu0 %v757
      %v4974 = vpop.f32.mrf.mxu0
      %v4975 = vadd.f32 %v4926, %v4974
      %v4976 = vpop.f32.mrf.mxu0
      %v4977 = vadd.f32 %v4928, %v4976
      %4978 = vdwg.mxu0
      %4979 = vmatpush.bf16.msra.mxu0 0
      %4980 = vmatpush.bf16.msra.mxu0 0
      %4981 = vmatpush.bf16.msra.mxu0 0
      %4982 = vmatpush.bf16.msra.mxu0 0
      %4983 = vmatpush.bf16.msra.mxu0 %v2527
      %4984 = vmatpush.bf16.msra.mxu0 %v2111
      %4985 = vmatpush.bf16.msra.mxu0 %v2094
      %4986 = vmatpush.bf16.msra.mxu0 %v2077
      %4987 = vmatmul.bf16.gmra.mxu0 %v2454
      %v4988 = vpop.f32.mrf.mxu0
      %v4989 = vadd.f32 %v4940, %v4988
      %v4990 = vpop.f32.mrf.mxu0
      %v4991 = vadd.f32 %v4942, %v4990
      %4992 = vmatmul.bf16.gmra.mxu0 %v2457
      %v4993 = vpop.f32.mrf.mxu0
      %v4994 = vadd.f32 %v4945, %v4993
      %v4995 = vpop.f32.mrf.mxu0
      %v4996 = vadd.f32 %v4947, %v4995
      %4997 = vmatmul.bf16.gmra.mxu0 %v2460
      %v4998 = vpop.f32.mrf.mxu0
      %v4999 = vadd.f32 %v4950, %v4998
      %v5000 = vpop.f32.mrf.mxu0
      %v5001 = vadd.f32 %v4952, %v5000
      %5002 = vmatmul.bf16.gmra.mxu0 %v2463
      %v5003 = vpop.f32.mrf.mxu0
      %v5004 = vadd.f32 %v4955, %v5003
      %v5005 = vpop.f32.mrf.mxu0
      %v5006 = vadd.f32 %v4957, %v5005
      %5007 = vmatmul.bf16.gmra.mxu0 %v2466
      %v5008 = vpop.f32.mrf.mxu0
      %v5009 = vadd.f32 %v4960, %v5008
      %v5010 = vpop.f32.mrf.mxu0
      %v5011 = vadd.f32 %v4962, %v5010
      %5012 = vmatmul.bf16.gmra.mxu0 %v2469
      %v5013 = vpop.f32.mrf.mxu0
      %v5014 = vadd.f32 %v4965, %v5013
      %v5015 = vpop.f32.mrf.mxu0
      %v5016 = vadd.f32 %v4967, %v5015
      %5017 = vmatmul.bf16.gmra.mxu0 %v2472
      %v5018 = vpop.f32.mrf.mxu0
      %v5019 = vadd.f32 %v4970, %v5018
      %v5020 = vpop.f32.mrf.mxu0
      %v5021 = vadd.f32 %v4972, %v5020
      %5022 = vmatmul.bf16.gmra.mxu0 %v2475
      %v5023 = vpop.f32.mrf.mxu0
      %v5024 = vadd.f32 %v4975, %v5023
      %v5025 = vpop.f32.mrf.mxu0
      %v5026 = vadd.f32 %v4977, %v5025
      %5027 = vdwg.mxu0
      %v5028 = vmax.f32 %v2637, 0.0
      %v5029 = vmax.f32 %v2784, 0.0
      %v5030 = vmax.f32 %v2931, 0.0
      %v5031 = vmax.f32 %v3078, 0.0
      %v5032 = vmax.f32 %v3225, 0.0
      %v5033 = vmax.f32 %v3372, 0.0
      %v5034 = vmax.f32 %v3519, 0.0
      %v5035 = vmax.f32 %v3666, 0.0
      %v5036 = vmax.f32 %v3813, 0.0
      %v5037 = vmax.f32 %v3960, 0.0
      %v5038 = vmax.f32 %v4107, 0.0
      %v5039 = vmax.f32 %v4254, 0.0
      %v5040 = vmax.f32 %v4401, 0.0
      %v5041 = vmax.f32 %v4548, 0.0
      %v5042 = vmax.f32 %v4695, 0.0
      %v5043 = vmax.f32 %v4842, 0.0
      %v5044 = vmax.f32 %v4989, 0.0
      %v5045 = vmax.f32 %v2639, 0.0
      %v5046 = vmax.f32 %v2786, 0.0
      %v5047 = vmax.f32 %v2933, 0.0
      %v5048 = vmax.f32 %v3080, 0.0
      %v5049 = vmax.f32 %v3227, 0.0
      %v5050 = vmax.f32 %v3374, 0.0
      %v5051 = vmax.f32 %v3521, 0.0
      %v5052 = vmax.f32 %v3668, 0.0
      %v5053 = vmax.f32 %v3815, 0.0
      %v5054 = vmax.f32 %v3962, 0.0
      %v5055 = vmax.f32 %v4109, 0.0
      %v5056 = vmax.f32 %v4256, 0.0
      %v5057 = vmax.f32 %v4403, 0.0
      %v5058 = vmax.f32 %v4550, 0.0
      %v5059 = vmax.f32 %v4697, 0.0
      %v5060 = vmax.f32 %v4844, 0.0
      %v5061 = vmax.f32 %v4991, 0.0
      %v5062 = vmax.f32 %v2642, 0.0
      %v5063 = vmax.f32 %v2789, 0.0
      %v5064 = vmax.f32 %v2936, 0.0
      %v5065 = vmax.f32 %v3083, 0.0
      %v5066 = vmax.f32 %v3230, 0.0
      %v5067 = vmax.f32 %v3377, 0.0
      %v5068 = vmax.f32 %v3524, 0.0
      %v5069 = vmax.f32 %v3671, 0.0
      %v5070 = vmax.f32 %v3818, 0.0
      %v5071 = vmax.f32 %v3965, 0.0
      %v5072 = vmax.f32 %v4112, 0.0
      %v5073 = vmax.f32 %v4259, 0.0
      %v5074 = vmax.f32 %v4406, 0.0
      %v5075 = vmax.f32 %v4553, 0.0
      %v5076 = vmax.f32 %v4700, 0.0
      %v5077 = vmax.f32 %v4847, 0.0
      %v5078 = vmax.f32 %v4994, 0.0
      %v5079 = vmax.f32 %v2644, 0.0
      %v5080 = vmax.f32 %v2791, 0.0
      %v5081 = vmax.f32 %v2938, 0.0
      %v5082 = vmax.f32 %v3085, 0.0
      %v5083 = vmax.f32 %v3232, 0.0
      %v5084 = vmax.f32 %v3379, 0.0
      %v5085 = vmax.f32 %v3526, 0.0
      %v5086 = vmax.f32 %v3673, 0.0
      %v5087 = vmax.f32 %v3820, 0.0
      %v5088 = vmax.f32 %v3967, 0.0
      %v5089 = vmax.f32 %v4114, 0.0
      %v5090 = vmax.f32 %v4261, 0.0
      %v5091 = vmax.f32 %v4408, 0.0
      %v5092 = vmax.f32 %v4555, 0.0
      %v5093 = vmax.f32 %v4702, 0.0
      %v5094 = vmax.f32 %v4849, 0.0
      %v5095 = vmax.f32 %v4996, 0.0
      %v5096 = vmax.f32 %v2647, 0.0
      %v5097 = vmax.f32 %v2794, 0.0
      %v5098 = vmax.f32 %v2941, 0.0
      %v5099 = vmax.f32 %v3088, 0.0
      %v5100 = vmax.f32 %v3235, 0.0
      %v5101 = vmax.f32 %v3382, 0.0
      %v5102 = vmax.f32 %v3529, 0.0
      %v5103 = vmax.f32 %v3676, 0.0
      %v5104 = vmax.f32 %v3823, 0.0
      %v5105 = vmax.f32 %v3970, 0.0
      %v5106 = vmax.f32 %v4117, 0.0
      %v5107 = vmax.f32 %v4264, 0.0
      %v5108 = vmax.f32 %v4411, 0.0
      %v5109 = vmax.f32 %v4558, 0.0
      %v5110 = vmax.f32 %v4705, 0.0
      %v5111 = vmax.f32 %v4852, 0.0
      %v5112 = vmax.f32 %v4999, 0.0
      %v5113 = vmax.f32 %v2649, 0.0
      %v5114 = vmax.f32 %v2796, 0.0
      %v5115 = vmax.f32 %v2943, 0.0
      %v5116 = vmax.f32 %v3090, 0.0
      %v5117 = vmax.f32 %v3237, 0.0
      %v5118 = vmax.f32 %v3384, 0.0
      %v5119 = vmax.f32 %v3531, 0.0
      %v5120 = vmax.f32 %v3678, 0.0
      %v5121 = vmax.f32 %v3825, 0.0
      %v5122 = vmax.f32 %v3972, 0.0
      %v5123 = vmax.f32 %v4119, 0.0
      %v5124 = vmax.f32 %v4266, 0.0
      %v5125 = vmax.f32 %v4413, 0.0
      %v5126 = vmax.f32 %v4560, 0.0
      %v5127 = vmax.f32 %v4707, 0.0
      %v5128 = vmax.f32 %v4854, 0.0
      %v5129 = vmax.f32 %v5001, 0.0
      %v5130 = vmax.f32 %v2652, 0.0
      %v5131 = vmax.f32 %v2799, 0.0
      %v5132 = vmax.f32 %v2946, 0.0
      %v5133 = vmax.f32 %v3093, 0.0
      %v5134 = vmax.f32 %v3240, 0.0
      %v5135 = vmax.f32 %v3387, 0.0
      %v5136 = vmax.f32 %v3534, 0.0
      %v5137 = vmax.f32 %v3681, 0.0
      %v5138 = vmax.f32 %v3828, 0.0
      %v5139 = vmax.f32 %v3975, 0.0
      %v5140 = vmax.f32 %v4122, 0.0
      %v5141 = vmax.f32 %v4269, 0.0
      %v5142 = vmax.f32 %v4416, 0.0
      %v5143 = vmax.f32 %v4563, 0.0
      %v5144 = vmax.f32 %v4710, 0.0
      %v5145 = vmax.f32 %v4857, 0.0
      %v5146 = vmax.f32 %v5004, 0.0
      %v5147 = vmax.f32 %v2654, 0.0
      %v5148 = vmax.f32 %v2801, 0.0
      %v5149 = vmax.f32 %v2948, 0.0
      %v5150 = vmax.f32 %v3095, 0.0
      %v5151 = vmax.f32 %v3242, 0.0
      %v5152 = vmax.f32 %v3389, 0.0
      %v5153 = vmax.f32 %v3536, 0.0
      %v5154 = vmax.f32 %v3683, 0.0
      %v5155 = vmax.f32 %v3830, 0.0
      %v5156 = vmax.f32 %v3977, 0.0
      %v5157 = vmax.f32 %v4124, 0.0
      %v5158 = vmax.f32 %v4271, 0.0
      %v5159 = vmax.f32 %v4418, 0.0
      %v5160 = vmax.f32 %v4565, 0.0
      %v5161 = vmax.f32 %v4712, 0.0
      %v5162 = vmax.f32 %v4859, 0.0
      %v5163 = vmax.f32 %v5006, 0.0
      %v5164 = vmax.f32 %v2657, 0.0
      %v5165 = vmax.f32 %v2804, 0.0
      %v5166 = vmax.f32 %v2951, 0.0
      %v5167 = vmax.f32 %v3098, 0.0
      %v5168 = vmax.f32 %v3245, 0.0
      %v5169 = vmax.f32 %v3392, 0.0
      %v5170 = vmax.f32 %v3539, 0.0
      %v5171 = vmax.f32 %v3686, 0.0
      %v5172 = vmax.f32 %v3833, 0.0
      %v5173 = vmax.f32 %v3980, 0.0
      %v5174 = vmax.f32 %v4127, 0.0
      %v5175 = vmax.f32 %v4274, 0.0
      %v5176 = vmax.f32 %v4421, 0.0
      %v5177 = vmax.f32 %v4568, 0.0
      %v5178 = vmax.f32 %v4715, 0.0
      %v5179 = vmax.f32 %v4862, 0.0
      %v5180 = vmax.f32 %v5009, 0.0
      %v5181 = vmax.f32 %v2659, 0.0
      %v5182 = vmax.f32 %v2806, 0.0
      %v5183 = vmax.f32 %v2953, 0.0
      %v5184 = vmax.f32 %v3100, 0.0
      %v5185 = vmax.f32 %v3247, 0.0
      %v5186 = vmax.f32 %v3394, 0.0
      %v5187 = vmax.f32 %v3541, 0.0
      %v5188 = vmax.f32 %v3688, 0.0
      %v5189 = vmax.f32 %v3835, 0.0
      %v5190 = vmax.f32 %v3982, 0.0
      %v5191 = vmax.f32 %v4129, 0.0
      %v5192 = vmax.f32 %v4276, 0.0
      %v5193 = vmax.f32 %v4423, 0.0
      %v5194 = vmax.f32 %v4570, 0.0
      %v5195 = vmax.f32 %v4717, 0.0
      %v5196 = vmax.f32 %v4864, 0.0
      %v5197 = vmax.f32 %v5011, 0.0
      %v5198 = vmax.f32 %v2662, 0.0
      %v5199 = vmax.f32 %v2809, 0.0
      %v5200 = vmax.f32 %v2956, 0.0
      %v5201 = vmax.f32 %v3103, 0.0
      %v5202 = vmax.f32 %v3250, 0.0
      %v5203 = vmax.f32 %v3397, 0.0
      %v5204 = vmax.f32 %v3544, 0.0
      %v5205 = vmax.f32 %v3691, 0.0
      %v5206 = vmax.f32 %v3838, 0.0
      %v5207 = vmax.f32 %v3985, 0.0
      %v5208 = vmax.f32 %v4132, 0.0
      %v5209 = vmax.f32 %v4279, 0.0
      %v5210 = vmax.f32 %v4426, 0.0
      %v5211 = vmax.f32 %v4573, 0.0
      %v5212 = vmax.f32 %v4720, 0.0
      %v5213 = vmax.f32 %v4867, 0.0
      %v5214 = vmax.f32 %v5014, 0.0
      %v5215 = vmax.f32 %v2664, 0.0
      %v5216 = vmax.f32 %v2811, 0.0
      %v5217 = vmax.f32 %v2958, 0.0
      %v5218 = vmax.f32 %v3105, 0.0
      %v5219 = vmax.f32 %v3252, 0.0
      %v5220 = vmax.f32 %v3399, 0.0
      %v5221 = vmax.f32 %v3546, 0.0
      %v5222 = vmax.f32 %v3693, 0.0
      %v5223 = vmax.f32 %v3840, 0.0
      %v5224 = vmax.f32 %v3987, 0.0
      %v5225 = vmax.f32 %v4134, 0.0
      %v5226 = vmax.f32 %v4281, 0.0
      %v5227 = vmax.f32 %v4428, 0.0
      %v5228 = vmax.f32 %v4575, 0.0
      %v5229 = vmax.f32 %v4722, 0.0
      %v5230 = vmax.f32 %v4869, 0.0
      %v5231 = vmax.f32 %v5016, 0.0
      %v5232 = vmax.f32 %v2667, 0.0
      %v5233 = vmax.f32 %v2814, 0.0
      %v5234 = vmax.f32 %v2961, 0.0
      %v5235 = vmax.f32 %v3108, 0.0
      %v5236 = vmax.f32 %v3255, 0.0
      %v5237 = vmax.f32 %v3402, 0.0
      %v5238 = vmax.f32 %v3549, 0.0
      %v5239 = vmax.f32 %v3696, 0.0
      %v5240 = vmax.f32 %v3843, 0.0
      %v5241 = vmax.f32 %v3990, 0.0
      %v5242 = vmax.f32 %v4137, 0.0
      %v5243 = vmax.f32 %v4284, 0.0
      %v5244 = vmax.f32 %v4431, 0.0
      %v5245 = vmax.f32 %v4578, 0.0
      %v5246 = vmax.f32 %v4725, 0.0
      %v5247 = vmax.f32 %v4872, 0.0
      %v5248 = vmax.f32 %v5019, 0.0
      %v5249 = vmax.f32 %v2669, 0.0
      %v5250 = vmax.f32 %v2816, 0.0
      %v5251 = vmax.f32 %v2963, 0.0
      %v5252 = vmax.f32 %v3110, 0.0
      %v5253 = vmax.f32 %v3257, 0.0
      %v5254 = vmax.f32 %v3404, 0.0
      %v5255 = vmax.f32 %v3551, 0.0
      %v5256 = vmax.f32 %v3698, 0.0
      %v5257 = vmax.f32 %v3845, 0.0
      %v5258 = vmax.f32 %v3992, 0.0
      %v5259 = vmax.f32 %v4139, 0.0
      %v5260 = vmax.f32 %v4286, 0.0
      %v5261 = vmax.f32 %v4433, 0.0
      %v5262 = vmax.f32 %v4580, 0.0
      %v5263 = vmax.f32 %v4727, 0.0
      %v5264 = vmax.f32 %v4874, 0.0
      %v5265 = vmax.f32 %v5021, 0.0
      %v5266 = vmax.f32 %v2672, 0.0
      %v5267 = vmax.f32 %v2819, 0.0
      %v5268 = vmax.f32 %v2966, 0.0
      %v5269 = vmax.f32 %v3113, 0.0
      %v5270 = vmax.f32 %v3260, 0.0
      %v5271 = vmax.f32 %v3407, 0.0
      %v5272 = vmax.f32 %v3554, 0.0
      %v5273 = vmax.f32 %v3701, 0.0
      %v5274 = vmax.f32 %v3848, 0.0
      %v5275 = vmax.f32 %v3995, 0.0
      %v5276 = vmax.f32 %v4142, 0.0
      %v5277 = vmax.f32 %v4289, 0.0
      %v5278 = vmax.f32 %v4436, 0.0
      %v5279 = vmax.f32 %v4583, 0.0
      %v5280 = vmax.f32 %v4730, 0.0
      %v5281 = vmax.f32 %v4877, 0.0
      %v5282 = vmax.f32 %v5024, 0.0
      %v5283 = vmax.f32 %v2674, 0.0
      %v5284 = vmax.f32 %v2821, 0.0
      %v5285 = vmax.f32 %v2968, 0.0
      %v5286 = vmax.f32 %v3115, 0.0
      %v5287 = vmax.f32 %v3262, 0.0
      %v5288 = vmax.f32 %v3409, 0.0
      %v5289 = vmax.f32 %v3556, 0.0
      %v5290 = vmax.f32 %v3703, 0.0
      %v5291 = vmax.f32 %v3850, 0.0
      %v5292 = vmax.f32 %v3997, 0.0
      %v5293 = vmax.f32 %v4144, 0.0
      %v5294 = vmax.f32 %v4291, 0.0
      %v5295 = vmax.f32 %v4438, 0.0
      %v5296 = vmax.f32 %v4585, 0.0
      %v5297 = vmax.f32 %v4732, 0.0
      %v5298 = vmax.f32 %v4879, 0.0
      %v5299 = vmax.f32 %v5026, 0.0
      %v5300 = vpack.c.bf16 %v5045, %v5028
      %v5301 = vpack.c.bf16 %v5046, %v5029
      %v5302 = vpack.c.bf16 %v5047, %v5030
      %v5303 = vpack.c.bf16 %v5048, %v5031
      %v5304 = vpack.c.bf16 %v5049, %v5032
      %v5305 = vpack.c.bf16 %v5050, %v5033
      %v5306 = vpack.c.bf16 %v5051, %v5034
      %v5307 = vpack.c.bf16 %v5052, %v5035
      %v5308 = vpack.c.bf16 %v5053, %v5036
      %v5309 = vpack.c.bf16 %v5054, %v5037
      %v5310 = vpack.c.bf16 %v5055, %v5038
      %v5311 = vpack.c.bf16 %v5056, %v5039
      %v5312 = vpack.c.bf16 %v5057, %v5040
      %v5313 = vpack.c.bf16 %v5058, %v5041
      %v5314 = vpack.c.bf16 %v5059, %v5042
      %v5315 = vpack.c.bf16 %v5060, %v5043
      %v5316 = vpack.c.bf16 %v5061, %v5044
      %v5317 = vpack.c.bf16 %v5079, %v5062
      %v5318 = vpack.c.bf16 %v5080, %v5063
      %v5319 = vpack.c.bf16 %v5081, %v5064
      %v5320 = vpack.c.bf16 %v5082, %v5065
      %v5321 = vpack.c.bf16 %v5083, %v5066
      %v5322 = vpack.c.bf16 %v5084, %v5067
      %v5323 = vpack.c.bf16 %v5085, %v5068
      %v5324 = vpack.c.bf16 %v5086, %v5069
      %v5325 = vpack.c.bf16 %v5087, %v5070
      %v5326 = vpack.c.bf16 %v5088, %v5071
      %v5327 = vpack.c.bf16 %v5089, %v5072
      %v5328 = vpack.c.bf16 %v5090, %v5073
      %v5329 = vpack.c.bf16 %v5091, %v5074
      %v5330 = vpack.c.bf16 %v5092, %v5075
      %v5331 = vpack.c.bf16 %v5093, %v5076
      %v5332 = vpack.c.bf16 %v5094, %v5077
      %v5333 = vpack.c.bf16 %v5095, %v5078
      %v5334 = vpack.c.bf16 %v5113, %v5096
      %v5335 = vpack.c.bf16 %v5114, %v5097
      %v5336 = vpack.c.bf16 %v5115, %v5098
      %v5337 = vpack.c.bf16 %v5116, %v5099
      %v5338 = vpack.c.bf16 %v5117, %v5100
      %v5339 = vpack.c.bf16 %v5118, %v5101
      %v5340 = vpack.c.bf16 %v5119, %v5102
      %v5341 = vpack.c.bf16 %v5120, %v5103
      %v5342 = vpack.c.bf16 %v5121, %v5104
      %v5343 = vpack.c.bf16 %v5122, %v5105
      %v5344 = vpack.c.bf16 %v5123, %v5106
      %v5345 = vpack.c.bf16 %v5124, %v5107
      %v5346 = vpack.c.bf16 %v5125, %v5108
      %v5347 = vpack.c.bf16 %v5126, %v5109
      %v5348 = vpack.c.bf16 %v5127, %v5110
      %v5349 = vpack.c.bf16 %v5128, %v5111
      %v5350 = vpack.c.bf16 %v5129, %v5112
      %v5351 = vpack.c.bf16 %v5147, %v5130
      %v5352 = vpack.c.bf16 %v5148, %v5131
      %v5353 = vpack.c.bf16 %v5149, %v5132
      %v5354 = vpack.c.bf16 %v5150, %v5133
      %v5355 = vpack.c.bf16 %v5151, %v5134
      %v5356 = vpack.c.bf16 %v5152, %v5135
      %v5357 = vpack.c.bf16 %v5153, %v5136
      %v5358 = vpack.c.bf16 %v5154, %v5137
      %v5359 = vpack.c.bf16 %v5155, %v5138
      %v5360 = vpack.c.bf16 %v5156, %v5139
      %v5361 = vpack.c.bf16 %v5157, %v5140
      %v5362 = vpack.c.bf16 %v5158, %v5141
      %v5363 = vpack.c.bf16 %v5159, %v5142
      %v5364 = vpack.c.bf16 %v5160, %v5143
      %v5365 = vpack.c.bf16 %v5161, %v5144
      %v5366 = vpack.c.bf16 %v5162, %v5145
      %v5367 = vpack.c.bf16 %v5163, %v5146
      %v5368 = vpack.c.bf16 %v5181, %v5164
      %v5369 = vpack.c.bf16 %v5182, %v5165
      %v5370 = vpack.c.bf16 %v5183, %v5166
      %v5371 = vpack.c.bf16 %v5184, %v5167
      %v5372 = vpack.c.bf16 %v5185, %v5168
      %v5373 = vpack.c.bf16 %v5186, %v5169
      %v5374 = vpack.c.bf16 %v5187, %v5170
      %v5375 = vpack.c.bf16 %v5188, %v5171
      %v5376 = vpack.c.bf16 %v5189, %v5172
      %v5377 = vpack.c.bf16 %v5190, %v5173
      %v5378 = vpack.c.bf16 %v5191, %v5174
      %v5379 = vpack.c.bf16 %v5192, %v5175
      %v5380 = vpack.c.bf16 %v5193, %v5176
      %v5381 = vpack.c.bf16 %v5194, %v5177
      %v5382 = vpack.c.bf16 %v5195, %v5178
      %v5383 = vpack.c.bf16 %v5196, %v5179
      %v5384 = vpack.c.bf16 %v5197, %v5180
      %v5385 = vpack.c.bf16 %v5215, %v5198
      %v5386 = vpack.c.bf16 %v5216, %v5199
      %v5387 = vpack.c.bf16 %v5217, %v5200
      %v5388 = vpack.c.bf16 %v5218, %v5201
      %v5389 = vpack.c.bf16 %v5219, %v5202
      %v5390 = vpack.c.bf16 %v5220, %v5203
      %v5391 = vpack.c.bf16 %v5221, %v5204
      %v5392 = vpack.c.bf16 %v5222, %v5205
      %v5393 = vpack.c.bf16 %v5223, %v5206
      %v5394 = vpack.c.bf16 %v5224, %v5207
      %v5395 = vpack.c.bf16 %v5225, %v5208
      %v5396 = vpack.c.bf16 %v5226, %v5209
      %v5397 = vpack.c.bf16 %v5227, %v5210
      %v5398 = vpack.c.bf16 %v5228, %v5211
      %v5399 = vpack.c.bf16 %v5229, %v5212
      %v5400 = vpack.c.bf16 %v5230, %v5213
      %v5401 = vpack.c.bf16 %v5231, %v5214
      %v5402 = vpack.c.bf16 %v5249, %v5232
      %v5403 = vpack.c.bf16 %v5250, %v5233
      %v5404 = vpack.c.bf16 %v5251, %v5234
      %v5405 = vpack.c.bf16 %v5252, %v5235
      %v5406 = vpack.c.bf16 %v5253, %v5236
      %v5407 = vpack.c.bf16 %v5254, %v5237
      %v5408 = vpack.c.bf16 %v5255, %v5238
      %v5409 = vpack.c.bf16 %v5256, %v5239
      %v5410 = vpack.c.bf16 %v5257, %v5240
      %v5411 = vpack.c.bf16 %v5258, %v5241
      %v5412 = vpack.c.bf16 %v5259, %v5242
      %v5413 = vpack.c.bf16 %v5260, %v5243
      %v5414 = vpack.c.bf16 %v5261, %v5244
      %v5415 = vpack.c.bf16 %v5262, %v5245
      %v5416 = vpack.c.bf16 %v5263, %v5246
      %v5417 = vpack.c.bf16 %v5264, %v5247
      %v5418 = vpack.c.bf16 %v5265, %v5248
      %v5419 = vpack.c.bf16 %v5283, %v5266
      %v5420 = vpack.c.bf16 %v5284, %v5267
      %v5421 = vpack.c.bf16 %v5285, %v5268
      %v5422 = vpack.c.bf16 %v5286, %v5269
      %v5423 = vpack.c.bf16 %v5287, %v5270
      %v5424 = vpack.c.bf16 %v5288, %v5271
      %v5425 = vpack.c.bf16 %v5289, %v5272
      %v5426 = vpack.c.bf16 %v5290, %v5273
      %v5427 = vpack.c.bf16 %v5291, %v5274
      %v5428 = vpack.c.bf16 %v5292, %v5275
      %v5429 = vpack.c.bf16 %v5293, %v5276
      %v5430 = vpack.c.bf16 %v5294, %v5277
      %v5431 = vpack.c.bf16 %v5295, %v5278
      %v5432 = vpack.c.bf16 %v5296, %v5279
      %v5433 = vpack.c.bf16 %v5297, %v5280
      %v5434 = vpack.c.bf16 %v5298, %v5281
      %v5435 = vpack.c.bf16 %v5299, %v5282
      %v5436 = vld [vmem:[%s3] sm:$0xf]
      %v5437 = vld [vmem:[%s3 + $0x4] sm:$0xf]
      %v5438 = vld [vmem:[%s3 + $0x8] sm:$0xf]
      %v5439 = vld [vmem:[%s3 + $0xc] sm:$0xf]
      %v5440 = vld [vmem:[%s3 + $0x10] sm:$0xf]
      %v5441 = vld [vmem:[%s3 + $0x14] sm:$0xf]
      %v5442 = vld [vmem:[%s3 + $0x18] sm:$0xf]
      %v5443 = vld [vmem:[%s3 + $0x1c] sm:$0xf]
      %v5444 = vld [vmem:[%s3 + $0x20] sm:$0xf]
      %v5445 = vld [vmem:[%s3 + $0x24] sm:$0xf]
      %v5446 = vld [vmem:[%s3 + $0x28] sm:$0xf]
      %v5447 = vld [vmem:[%s3 + $0x2c] sm:$0xf]
      %v5448 = vld [vmem:[%s3 + $0x30] sm:$0xf]
      %v5449 = vld [vmem:[%s3 + $0x34] sm:$0xf]
      %v5450 = vld [vmem:[%s3 + $0x38] sm:$0xf]
      %v5451 = vld [vmem:[%s3 + $0x3c] sm:$0xf]
      %v5452 = vld [vmem:[%s3 + $0x40] sm:$0xf]
      %v5453 = vld [vmem:[%s3 + $0x44] sm:$0xf]
      %v5454 = vld [vmem:[%s3 + $0x48] sm:$0xf]
      %v5455 = vld [vmem:[%s3 + $0x4c] sm:$0xf]
      %v5456 = vld [vmem:[%s3 + $0x50] sm:$0xf]
      %v5457 = vld [vmem:[%s3 + $0x54] sm:$0xf]
      %v5458 = vld [vmem:[%s3 + $0x58] sm:$0xf]
      %v5459 = vld [vmem:[%s3 + $0x5c] sm:$0xf]
      %v5460 = vld [vmem:[%s3 + $0x60] sm:$0xf]
      %v5461 = vld [vmem:[%s3 + $0x64] sm:$0xf]
      %v5462 = vld [vmem:[%s3 + $0x68] sm:$0xf]
      %v5463 = vld [vmem:[%s3 + $0x6c] sm:$0xf]
      %v5464 = vld [vmem:[%s3 + $0x70] sm:$0xf]
      %v5465 = vld [vmem:[%s3 + $0x74] sm:$0xf]
      %v5466 = vld [vmem:[%s3 + $0x78] sm:$0xf]
      %v5467 = vld [vmem:[%s3 + $0x7c] sm:$0xf]
      %v5468 = vld [vmem:[%s3 + $0x80] sm:$0xf]
      %v5469 = vld [vmem:[%s3 + $0x84] sm:$0xf]
      %v5470 = vld [vmem:[%s3 + $0x88] sm:$0xf]
      %v5471 = vld [vmem:[%s3 + $0x8c] sm:$0xf]
      %v5472 = vld [vmem:[%s3 + $0x90] sm:$0xf]
      %v5473 = vld [vmem:[%s3 + $0x94] sm:$0xf]
      %v5474 = vld [vmem:[%s3 + $0x98] sm:$0xf]
      %v5475 = vld [vmem:[%s3 + $0x9c] sm:$0xf]
      %v5476 = vld [vmem:[%s3 + $0xa0] sm:$0xf]
      %v5477 = vld [vmem:[%s3 + $0xa4] sm:$0xf]
      %v5478 = vld [vmem:[%s3 + $0xa8] sm:$0xf]
      %v5479 = vld [vmem:[%s3 + $0xac] sm:$0xf]
      %v5480 = vld [vmem:[%s3 + $0xb0] sm:$0xf]
      %v5481 = vld [vmem:[%s3 + $0xb4] sm:$0xf]
      %v5482 = vld [vmem:[%s3 + $0xb8] sm:$0xf]
      %v5483 = vld [vmem:[%s3 + $0xbc] sm:$0xf]
      %v5484 = vld [vmem:[%s3 + $0xc0] sm:$0xf]
      %v5485 = vld [vmem:[%s3 + $0xc4] sm:$0xf]
      %v5486 = vld [vmem:[%s3 + $0xc8] sm:$0xf]
      %v5487 = vld [vmem:[%s3 + $0xcc] sm:$0xf]
      %v5488 = vld [vmem:[%s3 + $0xd0] sm:$0xf]
      %v5489 = vld [vmem:[%s3 + $0xd4] sm:$0xf]
      %v5490 = vld [vmem:[%s3 + $0xd8] sm:$0xf]
      %v5491 = vld [vmem:[%s3 + $0xdc] sm:$0xf]
      %v5492 = vld [vmem:[%s3 + $0xe0] sm:$0xf]
      %v5493 = vld [vmem:[%s3 + $0xe4] sm:$0xf]
      %v5494 = vld [vmem:[%s3 + $0xe8] sm:$0xf]
      %v5495 = vld [vmem:[%s3 + $0xec] sm:$0xf]
      %v5496 = vld [vmem:[%s3 + $0xf0] sm:$0xf]
      %v5497 = vld [vmem:[%s3 + $0xf4] sm:$0xf]
      %v5498 = vld [vmem:[%s3 + $0xf8] sm:$0xf]
      %v5499 = vld [vmem:[%s3 + $0xfc] sm:$0xf]
      %v5500 = vld [vmem:[%s3 + $0x100] sm:$0xf]
      %v5501 = vld [vmem:[%s3 + $0x104] sm:$0xf]
      %v5502 = vld [vmem:[%s3 + $0x108] sm:$0xf]
      %v5503 = vld [vmem:[%s3 + $0x10c] sm:$0xf]
      %v5504 = vld [vmem:[%s3 + $0x110] sm:$0xf]
      %v5505 = vld [vmem:[%s3 + $0x114] sm:$0xf]
      %v5506 = vld [vmem:[%s3 + $0x118] sm:$0xf]
      %v5507 = vld [vmem:[%s3 + $0x11c] sm:$0xf]
      %v5508 = vld [vmem:[%s3 + $0x120] sm:$0xf]
      %v5509 = vld [vmem:[%s3 + $0x124] sm:$0xf]
      %v5510 = vld [vmem:[%s3 + $0x128] sm:$0xf]
      %v5511 = vld [vmem:[%s3 + $0x12c] sm:$0xf]
      %v5512 = vld [vmem:[%s3 + $0x130] sm:$0xf]
      %v5513 = vld [vmem:[%s3 + $0x134] sm:$0xf]
      %v5514 = vld [vmem:[%s3 + $0x138] sm:$0xf]
      %v5515 = vld [vmem:[%s3 + $0x13c] sm:$0xf]
      %v5516 = vld [vmem:[%s3 + $0x140] sm:$0xf]
      %v5517 = vld [vmem:[%s3 + $0x144] sm:$0xf]
      %v5518 = vld [vmem:[%s3 + $0x148] sm:$0xf]
      %v5519 = vld [vmem:[%s3 + $0x14c] sm:$0xf]
      %v5520 = vld [vmem:[%s3 + $0x150] sm:$0xf]
      %v5521 = vld [vmem:[%s3 + $0x154] sm:$0xf]
      %v5522 = vld [vmem:[%s3 + $0x158] sm:$0xf]
      %v5523 = vld [vmem:[%s3 + $0x15c] sm:$0xf]
      %v5524 = vld [vmem:[%s3 + $0x160] sm:$0xf]
      %v5525 = vld [vmem:[%s3 + $0x164] sm:$0xf]
      %v5526 = vld [vmem:[%s3 + $0x168] sm:$0xf]
      %v5527 = vld [vmem:[%s3 + $0x16c] sm:$0xf]
      %v5528 = vld [vmem:[%s3 + $0x170] sm:$0xf]
      %v5529 = vld [vmem:[%s3 + $0x174] sm:$0xf]
      %v5530 = vld [vmem:[%s3 + $0x178] sm:$0xf]
      %v5531 = vld [vmem:[%s3 + $0x17c] sm:$0xf]
      %v5532 = vld [vmem:[%s3 + $0x180] sm:$0xf]
      %v5533 = vld [vmem:[%s3 + $0x184] sm:$0xf]
      %v5534 = vld [vmem:[%s3 + $0x188] sm:$0xf]
      %v5535 = vld [vmem:[%s3 + $0x18c] sm:$0xf]
      %v5536 = vld [vmem:[%s3 + $0x190] sm:$0xf]
      %v5537 = vld [vmem:[%s3 + $0x194] sm:$0xf]
      %v5538 = vld [vmem:[%s3 + $0x198] sm:$0xf]
      %v5539 = vld [vmem:[%s3 + $0x19c] sm:$0xf]
      %v5540 = vld [vmem:[%s3 + $0x1a0] sm:$0xf]
      %v5541 = vld [vmem:[%s3 + $0x1a4] sm:$0xf]
      %v5542 = vld [vmem:[%s3 + $0x1a8] sm:$0xf]
      %v5543 = vld [vmem:[%s3 + $0x1ac] sm:$0xf]
      %v5544 = vld [vmem:[%s3 + $0x1b0] sm:$0xf]
      %v5545 = vld [vmem:[%s3 + $0x1b4] sm:$0xf]
      %v5546 = vld [vmem:[%s3 + $0x1b8] sm:$0xf]
      %v5547 = vld [vmem:[%s3 + $0x1bc] sm:$0xf]
      %v5548 = vld [vmem:[%s3 + $0x1c0] sm:$0xf]
      %v5549 = vld [vmem:[%s3 + $0x1c4] sm:$0xf]
      %v5550 = vld [vmem:[%s3 + $0x1c8] sm:$0xf]
      %v5551 = vld [vmem:[%s3 + $0x1cc] sm:$0xf]
      %v5552 = vld [vmem:[%s3 + $0x1d0] sm:$0xf]
      %v5553 = vld [vmem:[%s3 + $0x1d4] sm:$0xf]
      %v5554 = vld [vmem:[%s3 + $0x1d8] sm:$0xf]
      %v5555 = vld [vmem:[%s3 + $0x1dc] sm:$0xf]
      %v5556 = vld [vmem:[%s3 + $0x1e0] sm:$0xf]
      %v5557 = vld [vmem:[%s3 + $0x1e4] sm:$0xf]
      %v5558 = vld [vmem:[%s3 + $0x1e8] sm:$0xf]
      %v5559 = vld [vmem:[%s3 + $0x1ec] sm:$0xf]
      %v5560 = vld [vmem:[%s3 + $0x1f0] sm:$0xf]
      %v5561 = vld [vmem:[%s3 + $0x1f4] sm:$0xf]
      %v5562 = vld [vmem:[%s3 + $0x1f8] sm:$0xf]
      %v5563 = vld [vmem:[%s3 + $0x1fc] sm:$0xf]
      %v5564 = vld [vmem:[%s3 + $0x200] sm:$0xf]
      %v5565 = vld [vmem:[%s3 + $0x204] sm:$0xf]
      %v5566 = vld [vmem:[%s3 + $0x208] sm:$0xf]
      %v5567 = vld [vmem:[%s3 + $0x20c] sm:$0xf]
      %v5568 = vld [vmem:[%s3 + $0x210] sm:$0xf]
      %v5569 = vld [vmem:[%s3 + $0x214] sm:$0xf]
      %v5570 = vld [vmem:[%s3 + $0x218] sm:$0xf]
      %v5571 = vld [vmem:[%s3 + $0x21c] sm:$0xf]
      %v5572 = vld [vmem:[%s3 + $0x220] sm:$0xf]
      %v5573 = vld [vmem:[%s3 + $0x224] sm:$0xf]
      %v5574 = vld [vmem:[%s3 + $0x228] sm:$0xf]
      %v5575 = vld [vmem:[%s3 + $0x22c] sm:$0xf]
      %v5576 = vld [vmem:[%s3 + $0x230] sm:$0xf]
      %v5577 = vld [vmem:[%s3 + $0x234] sm:$0xf]
      %v5578 = vld [vmem:[%s3 + $0x238] sm:$0xf]
      %v5579 = vld [vmem:[%s3 + $0x23c] sm:$0xf]
      %v5580 = vld [vmem:[%s3 + $0x240] sm:$0xf]
      %v5581 = vld [vmem:[%s3 + $0x244] sm:$0xf]
      %v5582 = vld [vmem:[%s3 + $0x248] sm:$0xf]
      %v5583 = vld [vmem:[%s3 + $0x24c] sm:$0xf]
      %v5584 = vld [vmem:[%s3 + $0x250] sm:$0xf]
      %v5585 = vld [vmem:[%s3 + $0x254] sm:$0xf]
      %v5586 = vld [vmem:[%s3 + $0x258] sm:$0xf]
      %v5587 = vld [vmem:[%s3 + $0x25c] sm:$0xf]
      %v5588 = vld [vmem:[%s3 + $0x260] sm:$0xf]
      %v5589 = vld [vmem:[%s3 + $0x264] sm:$0xf]
      %v5590 = vld [vmem:[%s3 + $0x268] sm:$0xf]
      %v5591 = vld [vmem:[%s3 + $0x26c] sm:$0xf]
      %v5592 = vld [vmem:[%s3 + $0x270] sm:$0xf]
      %v5593 = vld [vmem:[%s3 + $0x274] sm:$0xf]
      %v5594 = vld [vmem:[%s3 + $0x278] sm:$0xf]
      %v5595 = vld [vmem:[%s3 + $0x27c] sm:$0xf]
      %v5596 = vld [vmem:[%s3 + $0x280] sm:$0xf]
      %v5597 = vld [vmem:[%s3 + $0x284] sm:$0xf]
      %v5598 = vld [vmem:[%s3 + $0x288] sm:$0xf]
      %v5599 = vld [vmem:[%s3 + $0x28c] sm:$0xf]
      %v5600 = vld [vmem:[%s3 + $0x290] sm:$0xf]
      %v5601 = vld [vmem:[%s3 + $0x294] sm:$0xf]
      %v5602 = vld [vmem:[%s3 + $0x298] sm:$0xf]
      %v5603 = vld [vmem:[%s3 + $0x29c] sm:$0xf]
      %v5604 = vld [vmem:[%s3 + $0x2a0] sm:$0xf]
      %v5605 = vld [vmem:[%s3 + $0x2a4] sm:$0xf]
      %v5606 = vld [vmem:[%s3 + $0x2a8] sm:$0xf]
      %v5607 = vld [vmem:[%s3 + $0x2ac] sm:$0xf]
      %v5608 = vld [vmem:[%s3 + $0x2b0] sm:$0xf]
      %v5609 = vld [vmem:[%s3 + $0x2b4] sm:$0xf]
      %v5610 = vld [vmem:[%s3 + $0x2b8] sm:$0xf]
      %v5611 = vld [vmem:[%s3 + $0x2bc] sm:$0xf]
      %v5612 = vld [vmem:[%s3 + $0x2c0] sm:$0xf]
      %v5613 = vld [vmem:[%s3 + $0x2c4] sm:$0xf]
      %v5614 = vld [vmem:[%s3 + $0x2c8] sm:$0xf]
      %v5615 = vld [vmem:[%s3 + $0x2cc] sm:$0xf]
      %v5616 = vld [vmem:[%s3 + $0x2d0] sm:$0xf]
      %v5617 = vld [vmem:[%s3 + $0x2d4] sm:$0xf]
      %v5618 = vld [vmem:[%s3 + $0x2d8] sm:$0xf]
      %v5619 = vld [vmem:[%s3 + $0x2dc] sm:$0xf]
      %v5620 = vld [vmem:[%s3 + $0x2e0] sm:$0xf]
      %v5621 = vld [vmem:[%s3 + $0x2e4] sm:$0xf]
      %v5622 = vld [vmem:[%s3 + $0x2e8] sm:$0xf]
      %v5623 = vld [vmem:[%s3 + $0x2ec] sm:$0xf]
      %v5624 = vld [vmem:[%s3 + $0x2f0] sm:$0xf]
      %v5625 = vld [vmem:[%s3 + $0x2f4] sm:$0xf]
      %v5626 = vld [vmem:[%s3 + $0x2f8] sm:$0xf]
      %v5627 = vld [vmem:[%s3 + $0x2fc] sm:$0xf]
      %v5628 = vld [vmem:[%s3 + $0x300] sm:$0xf]
      %v5629 = vld [vmem:[%s3 + $0x304] sm:$0xf]
      %v5630 = vld [vmem:[%s3 + $0x308] sm:$0xf]
      %v5631 = vld [vmem:[%s3 + $0x30c] sm:$0xf]
      %v5632 = vld [vmem:[%s3 + $0x310] sm:$0xf]
      %v5633 = vld [vmem:[%s3 + $0x314] sm:$0xf]
      %v5634 = vld [vmem:[%s3 + $0x318] sm:$0xf]
      %v5635 = vld [vmem:[%s3 + $0x31c] sm:$0xf]
      %v5636 = vld [vmem:[%s3 + $0x320] sm:$0xf]
      %v5637 = vld [vmem:[%s3 + $0x324] sm:$0xf]
      %v5638 = vld [vmem:[%s3 + $0x328] sm:$0xf]
      %v5639 = vld [vmem:[%s3 + $0x32c] sm:$0xf]
      %v5640 = vld [vmem:[%s3 + $0x330] sm:$0xf]
      %v5641 = vld [vmem:[%s3 + $0x334] sm:$0xf]
      %v5642 = vld [vmem:[%s3 + $0x338] sm:$0xf]
      %v5643 = vld [vmem:[%s3 + $0x33c] sm:$0xf]
      %v5644 = vld [vmem:[%s3 + $0x340] sm:$0xf]
      %v5645 = vld [vmem:[%s3 + $0x344] sm:$0xf]
      %v5646 = vld [vmem:[%s3 + $0x348] sm:$0xf]
      %v5647 = vld [vmem:[%s3 + $0x34c] sm:$0xf]
      %v5648 = vld [vmem:[%s3 + $0x350] sm:$0xf]
      %v5649 = vld [vmem:[%s3 + $0x354] sm:$0xf]
      %v5650 = vld [vmem:[%s3 + $0x358] sm:$0xf]
      %v5651 = vld [vmem:[%s3 + $0x35c] sm:$0xf]
      %v5652 = vld [vmem:[%s3 + $0x360] sm:$0xf]
      %v5653 = vld [vmem:[%s3 + $0x364] sm:$0xf]
      %v5654 = vld [vmem:[%s3 + $0x368] sm:$0xf]
      %v5655 = vld [vmem:[%s3 + $0x36c] sm:$0xf]
      %v5656 = vld [vmem:[%s3 + $0x370] sm:$0xf]
      %v5657 = vld [vmem:[%s3 + $0x374] sm:$0xf]
      %v5658 = vld [vmem:[%s3 + $0x378] sm:$0xf]
      %v5659 = vld [vmem:[%s3 + $0x37c] sm:$0xf]
      %v5660 = vld [vmem:[%s3 + $0x380] sm:$0xf]
      %v5661 = vld [vmem:[%s3 + $0x384] sm:$0xf]
      %v5662 = vld [vmem:[%s3 + $0x388] sm:$0xf]
      %v5663 = vld [vmem:[%s3 + $0x38c] sm:$0xf]
      %v5664 = vld [vmem:[%s3 + $0x390] sm:$0xf]
      %v5665 = vld [vmem:[%s3 + $0x394] sm:$0xf]
      %v5666 = vld [vmem:[%s3 + $0x398] sm:$0xf]
      %v5667 = vld [vmem:[%s3 + $0x39c] sm:$0xf]
      %v5668 = vld [vmem:[%s3 + $0x3a0] sm:$0xf]
      %v5669 = vld [vmem:[%s3 + $0x3a4] sm:$0xf]
      %v5670 = vld [vmem:[%s3 + $0x3a8] sm:$0xf]
      %v5671 = vld [vmem:[%s3 + $0x3ac] sm:$0xf]
      %v5672 = vld [vmem:[%s3 + $0x3b0] sm:$0xf]
      %v5673 = vld [vmem:[%s3 + $0x3b4] sm:$0xf]
      %v5674 = vld [vmem:[%s3 + $0x3b8] sm:$0xf]
      %v5675 = vld [vmem:[%s3 + $0x3bc] sm:$0xf]
      %v5676 = vld [vmem:[%s3 + $0x3c0] sm:$0xf]
      %v5677 = vld [vmem:[%s3 + $0x3c4] sm:$0xf]
      %v5678 = vld [vmem:[%s3 + $0x3c8] sm:$0xf]
      %v5679 = vld [vmem:[%s3 + $0x3cc] sm:$0xf]
      %v5680 = vld [vmem:[%s3 + $0x3d0] sm:$0xf]
      %v5681 = vld [vmem:[%s3 + $0x3d4] sm:$0xf]
      %v5682 = vld [vmem:[%s3 + $0x3d8] sm:$0xf]
      %v5683 = vld [vmem:[%s3 + $0x3dc] sm:$0xf]
      %v5684 = vld [vmem:[%s3 + $0x3e0] sm:$0xf]
      %v5685 = vld [vmem:[%s3 + $0x3e4] sm:$0xf]
      %v5686 = vld [vmem:[%s3 + $0x3e8] sm:$0xf]
      %v5687 = vld [vmem:[%s3 + $0x3ec] sm:$0xf]
      %v5688 = vld [vmem:[%s3 + $0x3f0] sm:$0xf]
      %v5689 = vld [vmem:[%s3 + $0x3f4] sm:$0xf]
      %v5690 = vld [vmem:[%s3 + $0x3f8] sm:$0xf]
      %v5691 = vld [vmem:[%s3 + $0x3fc] sm:$0xf]
      %v5692 = vld [vmem:[%s3 + $0x400] sm:$0xf]
      %v5693 = vld [vmem:[%s3 + $0x404] sm:$0xf]
      %v5694 = vld [vmem:[%s3 + $0x408] sm:$0xf]
      %v5695 = vld [vmem:[%s3 + $0x40c] sm:$0xf]
      %v5696 = vld [vmem:[%s3 + $0x410] sm:$0xf]
      %v5697 = vld [vmem:[%s3 + $0x414] sm:$0xf]
      %v5698 = vld [vmem:[%s3 + $0x418] sm:$0xf]
      %v5699 = vld [vmem:[%s3 + $0x41c] sm:$0xf]
      %v5700 = vld [vmem:[%s3 + $0x420] sm:$0xf]
      %v5701 = vld [vmem:[%s3 + $0x424] sm:$0xf]
      %v5702 = vld [vmem:[%s3 + $0x428] sm:$0xf]
      %v5703 = vld [vmem:[%s3 + $0x42c] sm:$0xf]
      %v5704 = vld [vmem:[%s3 + $0x430] sm:$0xf]
      %v5705 = vld [vmem:[%s3 + $0x434] sm:$0xf]
      %v5706 = vld [vmem:[%s3 + $0x438] sm:$0xf]
      %v5707 = vld [vmem:[%s3 + $0x43c] sm:$0xf]
      %v5708 = vld [vmem:[%s4] sm:$0x1]
      %v5710 = vperm.slane %v5708, 0
      %v5984 = vunpack.c.l.b16 %v5436
      %v5985 = vunpack.c.l.b16 %v5437
      %v5986 = vunpack.c.l.b16 %v5438
      %v5987 = vunpack.c.l.b16 %v5439
      %v5988 = vunpack.c.l.b16 %v5440
      %v5989 = vunpack.c.l.b16 %v5441
      %v5990 = vunpack.c.l.b16 %v5442
      %v5991 = vunpack.c.l.b16 %v5443
      %v5992 = vunpack.c.l.b16 %v5444
      %v5993 = vunpack.c.l.b16 %v5445
      %v5994 = vunpack.c.l.b16 %v5446
      %v5995 = vunpack.c.l.b16 %v5447
      %v5996 = vunpack.c.l.b16 %v5448
      %v5997 = vunpack.c.l.b16 %v5449
      %v5998 = vunpack.c.l.b16 %v5450
      %v5999 = vunpack.c.l.b16 %v5451
      %v6000 = vunpack.c.l.b16 %v5452
      %v6001 = vunpack.c.l.b16 %v5453
      %v6002 = vunpack.c.l.b16 %v5454
      %v6003 = vunpack.c.l.b16 %v5455
      %v6004 = vunpack.c.l.b16 %v5456
      %v6005 = vunpack.c.l.b16 %v5457
      %v6006 = vunpack.c.l.b16 %v5458
      %v6007 = vunpack.c.l.b16 %v5459
      %v6008 = vunpack.c.l.b16 %v5460
      %v6009 = vunpack.c.l.b16 %v5461
      %v6010 = vunpack.c.l.b16 %v5462
      %v6011 = vunpack.c.l.b16 %v5463
      %v6012 = vunpack.c.l.b16 %v5464
      %v6013 = vunpack.c.l.b16 %v5465
      %v6014 = vunpack.c.l.b16 %v5466
      %v6015 = vunpack.c.l.b16 %v5467
      %v6016 = vunpack.c.l.b16 %v5468
      %v6017 = vunpack.c.l.b16 %v5469
      %v6018 = vunpack.c.l.b16 %v5470
      %v6019 = vunpack.c.l.b16 %v5471
      %v6020 = vunpack.c.l.b16 %v5472
      %v6021 = vunpack.c.l.b16 %v5473
      %v6022 = vunpack.c.l.b16 %v5474
      %v6023 = vunpack.c.l.b16 %v5475
      %v6024 = vunpack.c.l.b16 %v5476
      %v6025 = vunpack.c.l.b16 %v5477
      %v6026 = vunpack.c.l.b16 %v5478
      %v6027 = vunpack.c.l.b16 %v5479
      %v6028 = vunpack.c.l.b16 %v5480
      %v6029 = vunpack.c.l.b16 %v5481
      %v6030 = vunpack.c.l.b16 %v5482
      %v6031 = vunpack.c.l.b16 %v5483
      %v6032 = vunpack.c.l.b16 %v5484
      %v6033 = vunpack.c.l.b16 %v5485
      %v6034 = vunpack.c.l.b16 %v5486
      %v6035 = vunpack.c.l.b16 %v5487
      %v6036 = vunpack.c.l.b16 %v5488
      %v6037 = vunpack.c.l.b16 %v5489
      %v6038 = vunpack.c.l.b16 %v5490
      %v6039 = vunpack.c.l.b16 %v5491
      %v6040 = vunpack.c.l.b16 %v5492
      %v6041 = vunpack.c.l.b16 %v5493
      %v6042 = vunpack.c.l.b16 %v5494
      %v6043 = vunpack.c.l.b16 %v5495
      %v6044 = vunpack.c.l.b16 %v5496
      %v6045 = vunpack.c.l.b16 %v5497
      %v6046 = vunpack.c.l.b16 %v5498
      %v6047 = vunpack.c.l.b16 %v5499
      %v6048 = vunpack.c.l.b16 %v5500
      %v6049 = vunpack.c.l.b16 %v5501
      %v6050 = vunpack.c.l.b16 %v5502
      %v6051 = vunpack.c.l.b16 %v5503
      %v6052 = vunpack.c.l.b16 %v5504
      %v6053 = vunpack.c.l.b16 %v5505
      %v6054 = vunpack.c.l.b16 %v5506
      %v6055 = vunpack.c.l.b16 %v5507
      %v6056 = vunpack.c.l.b16 %v5508
      %v6057 = vunpack.c.l.b16 %v5509
      %v6058 = vunpack.c.l.b16 %v5510
      %v6059 = vunpack.c.l.b16 %v5511
      %v6060 = vunpack.c.l.b16 %v5512
      %v6061 = vunpack.c.l.b16 %v5513
      %v6062 = vunpack.c.l.b16 %v5514
      %v6063 = vunpack.c.l.b16 %v5515
      %v6064 = vunpack.c.l.b16 %v5516
      %v6065 = vunpack.c.l.b16 %v5517
      %v6066 = vunpack.c.l.b16 %v5518
      %v6067 = vunpack.c.l.b16 %v5519
      %v6068 = vunpack.c.l.b16 %v5520
      %v6069 = vunpack.c.l.b16 %v5521
      %v6070 = vunpack.c.l.b16 %v5522
      %v6071 = vunpack.c.l.b16 %v5523
      %v6072 = vunpack.c.l.b16 %v5524
      %v6073 = vunpack.c.l.b16 %v5525
      %v6074 = vunpack.c.l.b16 %v5526
      %v6075 = vunpack.c.l.b16 %v5527
      %v6076 = vunpack.c.l.b16 %v5528
      %v6077 = vunpack.c.l.b16 %v5529
      %v6078 = vunpack.c.l.b16 %v5530
      %v6079 = vunpack.c.l.b16 %v5531
      %v6080 = vunpack.c.l.b16 %v5532
      %v6081 = vunpack.c.l.b16 %v5533
      %v6082 = vunpack.c.l.b16 %v5534
      %v6083 = vunpack.c.l.b16 %v5535
      %v6084 = vunpack.c.l.b16 %v5536
      %v6085 = vunpack.c.l.b16 %v5537
      %v6086 = vunpack.c.l.b16 %v5538
      %v6087 = vunpack.c.l.b16 %v5539
      %v6088 = vunpack.c.l.b16 %v5540
      %v6089 = vunpack.c.l.b16 %v5541
      %v6090 = vunpack.c.l.b16 %v5542
      %v6091 = vunpack.c.l.b16 %v5543
      %v6092 = vunpack.c.l.b16 %v5544
      %v6093 = vunpack.c.l.b16 %v5545
      %v6094 = vunpack.c.l.b16 %v5546
      %v6095 = vunpack.c.l.b16 %v5547
      %v6096 = vunpack.c.l.b16 %v5548
      %v6097 = vunpack.c.l.b16 %v5549
      %v6098 = vunpack.c.l.b16 %v5550
      %v6099 = vunpack.c.l.b16 %v5551
      %v6100 = vunpack.c.l.b16 %v5552
      %v6101 = vunpack.c.l.b16 %v5553
      %v6102 = vunpack.c.l.b16 %v5554
      %v6103 = vunpack.c.l.b16 %v5555
      %v6104 = vunpack.c.l.b16 %v5556
      %v6105 = vunpack.c.l.b16 %v5557
      %v6106 = vunpack.c.l.b16 %v5558
      %v6107 = vunpack.c.l.b16 %v5559
      %v6108 = vunpack.c.l.b16 %v5560
      %v6109 = vunpack.c.l.b16 %v5561
      %v6110 = vunpack.c.l.b16 %v5562
      %v6111 = vunpack.c.l.b16 %v5563
      %v6112 = vunpack.c.l.b16 %v5564
      %v6113 = vunpack.c.l.b16 %v5565
      %v6114 = vunpack.c.l.b16 %v5566
      %v6115 = vunpack.c.l.b16 %v5567
      %v6116 = vunpack.c.l.b16 %v5568
      %v6117 = vunpack.c.l.b16 %v5569
      %v6118 = vunpack.c.l.b16 %v5570
      %v6119 = vunpack.c.l.b16 %v5571
      %v6120 = vunpack.c.l.b16 %v5572
      %v6121 = vunpack.c.l.b16 %v5573
      %v6122 = vunpack.c.l.b16 %v5574
      %v6123 = vunpack.c.l.b16 %v5575
      %v6124 = vunpack.c.l.b16 %v5576
      %v6125 = vunpack.c.l.b16 %v5577
      %v6126 = vunpack.c.l.b16 %v5578
      %v6127 = vunpack.c.l.b16 %v5579
      %v6128 = vunpack.c.l.b16 %v5580
      %v6129 = vunpack.c.l.b16 %v5581
      %v6130 = vunpack.c.l.b16 %v5582
      %v6131 = vunpack.c.l.b16 %v5583
      %v6132 = vunpack.c.l.b16 %v5584
      %v6133 = vunpack.c.l.b16 %v5585
      %v6134 = vunpack.c.l.b16 %v5586
      %v6135 = vunpack.c.l.b16 %v5587
      %v6136 = vunpack.c.l.b16 %v5588
      %v6137 = vunpack.c.l.b16 %v5589
      %v6138 = vunpack.c.l.b16 %v5590
      %v6139 = vunpack.c.l.b16 %v5591
      %v6140 = vunpack.c.l.b16 %v5592
      %v6141 = vunpack.c.l.b16 %v5593
      %v6142 = vunpack.c.l.b16 %v5594
      %v6143 = vunpack.c.l.b16 %v5595
      %v6144 = vunpack.c.l.b16 %v5596
      %v6145 = vunpack.c.l.b16 %v5597
      %v6146 = vunpack.c.l.b16 %v5598
      %v6147 = vunpack.c.l.b16 %v5599
      %v6148 = vunpack.c.l.b16 %v5600
      %v6149 = vunpack.c.l.b16 %v5601
      %v6150 = vunpack.c.l.b16 %v5602
      %v6151 = vunpack.c.l.b16 %v5603
      %v6152 = vunpack.c.l.b16 %v5604
      %v6153 = vunpack.c.l.b16 %v5605
      %v6154 = vunpack.c.l.b16 %v5606
      %v6155 = vunpack.c.l.b16 %v5607
      %v6156 = vunpack.c.l.b16 %v5608
      %v6157 = vunpack.c.l.b16 %v5609
      %v6158 = vunpack.c.l.b16 %v5610
      %v6159 = vunpack.c.l.b16 %v5611
      %v6160 = vunpack.c.l.b16 %v5612
      %v6161 = vunpack.c.l.b16 %v5613
      %v6162 = vunpack.c.l.b16 %v5614
      %v6163 = vunpack.c.l.b16 %v5615
      %v6164 = vunpack.c.l.b16 %v5616
      %v6165 = vunpack.c.l.b16 %v5617
      %v6166 = vunpack.c.l.b16 %v5618
      %v6167 = vunpack.c.l.b16 %v5619
      %v6168 = vunpack.c.l.b16 %v5620
      %v6169 = vunpack.c.l.b16 %v5621
      %v6170 = vunpack.c.l.b16 %v5622
      %v6171 = vunpack.c.l.b16 %v5623
      %v6172 = vunpack.c.l.b16 %v5624
      %v6173 = vunpack.c.l.b16 %v5625
      %v6174 = vunpack.c.l.b16 %v5626
      %v6175 = vunpack.c.l.b16 %v5627
      %v6176 = vunpack.c.l.b16 %v5628
      %v6177 = vunpack.c.l.b16 %v5629
      %v6178 = vunpack.c.l.b16 %v5630
      %v6179 = vunpack.c.l.b16 %v5631
      %v6180 = vunpack.c.l.b16 %v5632
      %v6181 = vunpack.c.l.b16 %v5633
      %v6182 = vunpack.c.l.b16 %v5634
      %v6183 = vunpack.c.l.b16 %v5635
      %v6184 = vunpack.c.l.b16 %v5636
      %v6185 = vunpack.c.l.b16 %v5637
      %v6186 = vunpack.c.l.b16 %v5638
      %v6187 = vunpack.c.l.b16 %v5639
      %v6188 = vunpack.c.l.b16 %v5640
      %v6189 = vunpack.c.l.b16 %v5641
      %v6190 = vunpack.c.l.b16 %v5642
      %v6191 = vunpack.c.l.b16 %v5643
      %v6192 = vunpack.c.l.b16 %v5644
      %v6193 = vunpack.c.l.b16 %v5645
      %v6194 = vunpack.c.l.b16 %v5646
      %v6195 = vunpack.c.l.b16 %v5647
      %v6196 = vunpack.c.l.b16 %v5648
      %v6197 = vunpack.c.l.b16 %v5649
      %v6198 = vunpack.c.l.b16 %v5650
      %v6199 = vunpack.c.l.b16 %v5651
      %v6200 = vunpack.c.l.b16 %v5652
      %v6201 = vunpack.c.l.b16 %v5653
      %v6202 = vunpack.c.l.b16 %v5654
      %v6203 = vunpack.c.l.b16 %v5655
      %v6204 = vunpack.c.l.b16 %v5656
      %v6205 = vunpack.c.l.b16 %v5657
      %v6206 = vunpack.c.l.b16 %v5658
      %v6207 = vunpack.c.l.b16 %v5659
      %v6208 = vunpack.c.l.b16 %v5660
      %v6209 = vunpack.c.l.b16 %v5661
      %v6210 = vunpack.c.l.b16 %v5662
      %v6211 = vunpack.c.l.b16 %v5663
      %v6212 = vunpack.c.l.b16 %v5664
      %v6213 = vunpack.c.l.b16 %v5665
      %v6214 = vunpack.c.l.b16 %v5666
      %v6215 = vunpack.c.l.b16 %v5667
      %v6216 = vunpack.c.l.b16 %v5668
      %v6217 = vunpack.c.l.b16 %v5669
      %v6218 = vunpack.c.l.b16 %v5670
      %v6219 = vunpack.c.l.b16 %v5671
      %v6220 = vunpack.c.l.b16 %v5672
      %v6221 = vunpack.c.l.b16 %v5673
      %v6222 = vunpack.c.l.b16 %v5674
      %v6223 = vunpack.c.l.b16 %v5675
      %v6224 = vunpack.c.l.b16 %v5676
      %v6225 = vunpack.c.l.b16 %v5677
      %v6226 = vunpack.c.l.b16 %v5678
      %v6227 = vunpack.c.l.b16 %v5679
      %v6228 = vunpack.c.l.b16 %v5680
      %v6229 = vunpack.c.l.b16 %v5681
      %v6230 = vunpack.c.l.b16 %v5682
      %v6231 = vunpack.c.l.b16 %v5683
      %v6232 = vunpack.c.l.b16 %v5684
      %v6233 = vunpack.c.l.b16 %v5685
      %v6234 = vunpack.c.l.b16 %v5686
      %v6235 = vunpack.c.l.b16 %v5687
      %v6236 = vunpack.c.l.b16 %v5688
      %v6237 = vunpack.c.l.b16 %v5689
      %v6238 = vunpack.c.l.b16 %v5690
      %v6239 = vunpack.c.l.b16 %v5691
      %v6240 = vunpack.c.l.b16 %v5692
      %v6241 = vunpack.c.l.b16 %v5693
      %v6242 = vunpack.c.l.b16 %v5694
      %v6243 = vunpack.c.l.b16 %v5695
      %v6244 = vunpack.c.l.b16 %v5696
      %v6245 = vunpack.c.l.b16 %v5697
      %v6246 = vunpack.c.l.b16 %v5698
      %v6247 = vunpack.c.l.b16 %v5699
      %v6248 = vunpack.c.l.b16 %v5700
      %v6249 = vunpack.c.l.b16 %v5701
      %v6250 = vunpack.c.l.b16 %v5702
      %v6251 = vunpack.c.l.b16 %v5703
      %v6252 = vunpack.c.l.b16 %v5704
      %v6253 = vunpack.c.l.b16 %v5705
      %v6254 = vunpack.c.l.b16 %v5706
      %v6255 = vunpack.c.l.b16 %v5707
      %v6256 = vpack.c.b16 %v5985, %v5984
      %v6257 = vpack.c.b16 %v5987, %v5986
      %v6258 = vpack.c.b16 %v5989, %v5988
      %v6259 = vpack.c.b16 %v5991, %v5990
      %v6260 = vpack.c.b16 %v5993, %v5992
      %v6261 = vpack.c.b16 %v5995, %v5994
      %v6262 = vpack.c.b16 %v5997, %v5996
      %v6263 = vpack.c.b16 %v5999, %v5998
      %v6264 = vpack.c.b16 %v6001, %v6000
      %v6265 = vpack.c.b16 %v6003, %v6002
      %v6266 = vpack.c.b16 %v6005, %v6004
      %v6267 = vpack.c.b16 %v6007, %v6006
      %v6268 = vpack.c.b16 %v6009, %v6008
      %v6269 = vpack.c.b16 %v6011, %v6010
      %v6270 = vpack.c.b16 %v6013, %v6012
      %v6271 = vpack.c.b16 %v6015, %v6014
      %v6272 = vpack.c.b16 %v6017, %v6016
      %v6273 = vpack.c.b16 %v6019, %v6018
      %v6274 = vpack.c.b16 %v6021, %v6020
      %v6275 = vpack.c.b16 %v6023, %v6022
      %v6276 = vpack.c.b16 %v6025, %v6024
      %v6277 = vpack.c.b16 %v6027, %v6026
      %v6278 = vpack.c.b16 %v6029, %v6028
      %v6279 = vpack.c.b16 %v6031, %v6030
      %v6280 = vpack.c.b16 %v6033, %v6032
      %v6281 = vpack.c.b16 %v6035, %v6034
      %v6282 = vpack.c.b16 %v6037, %v6036
      %v6283 = vpack.c.b16 %v6039, %v6038
      %v6284 = vpack.c.b16 %v6041, %v6040
      %v6285 = vpack.c.b16 %v6043, %v6042
      %v6286 = vpack.c.b16 %v6045, %v6044
      %v6287 = vpack.c.b16 %v6047, %v6046
      %v6288 = vpack.c.b16 %v6049, %v6048
      %v6289 = vpack.c.b16 %v6051, %v6050
      %v6290 = vpack.c.b16 %v6053, %v6052
      %v6291 = vpack.c.b16 %v6055, %v6054
      %v6292 = vpack.c.b16 %v6057, %v6056
      %v6293 = vpack.c.b16 %v6059, %v6058
      %v6294 = vpack.c.b16 %v6061, %v6060
      %v6295 = vpack.c.b16 %v6063, %v6062
      %v6296 = vpack.c.b16 %v6065, %v6064
      %v6297 = vpack.c.b16 %v6067, %v6066
      %v6298 = vpack.c.b16 %v6069, %v6068
      %v6299 = vpack.c.b16 %v6071, %v6070
      %v6300 = vpack.c.b16 %v6073, %v6072
      %v6301 = vpack.c.b16 %v6075, %v6074
      %v6302 = vpack.c.b16 %v6077, %v6076
      %v6303 = vpack.c.b16 %v6079, %v6078
      %v6304 = vpack.c.b16 %v6081, %v6080
      %v6305 = vpack.c.b16 %v6083, %v6082
      %v6306 = vpack.c.b16 %v6085, %v6084
      %v6307 = vpack.c.b16 %v6087, %v6086
      %v6308 = vpack.c.b16 %v6089, %v6088
      %v6309 = vpack.c.b16 %v6091, %v6090
      %v6310 = vpack.c.b16 %v6093, %v6092
      %v6311 = vpack.c.b16 %v6095, %v6094
      %v6312 = vpack.c.b16 %v6097, %v6096
      %v6313 = vpack.c.b16 %v6099, %v6098
      %v6314 = vpack.c.b16 %v6101, %v6100
      %v6315 = vpack.c.b16 %v6103, %v6102
      %v6316 = vpack.c.b16 %v6105, %v6104
      %v6317 = vpack.c.b16 %v6107, %v6106
      %v6318 = vpack.c.b16 %v6109, %v6108
      %v6319 = vpack.c.b16 %v6111, %v6110
      %v6320 = vpack.c.b16 %v6113, %v6112
      %v6321 = vpack.c.b16 %v6115, %v6114
      %v6322 = vpack.c.b16 %v6117, %v6116
      %v6323 = vpack.c.b16 %v6119, %v6118
      %v6324 = vpack.c.b16 %v6121, %v6120
      %v6325 = vpack.c.b16 %v6123, %v6122
      %v6326 = vpack.c.b16 %v6125, %v6124
      %v6327 = vpack.c.b16 %v6127, %v6126
      %v6328 = vpack.c.b16 %v6129, %v6128
      %v6329 = vpack.c.b16 %v6131, %v6130
      %v6330 = vpack.c.b16 %v6133, %v6132
      %v6331 = vpack.c.b16 %v6135, %v6134
      %v6332 = vpack.c.b16 %v6137, %v6136
      %v6333 = vpack.c.b16 %v6139, %v6138
      %v6334 = vpack.c.b16 %v6141, %v6140
      %v6335 = vpack.c.b16 %v6143, %v6142
      %v6336 = vpack.c.b16 %v6145, %v6144
      %v6337 = vpack.c.b16 %v6147, %v6146
      %v6338 = vpack.c.b16 %v6149, %v6148
      %v6339 = vpack.c.b16 %v6151, %v6150
      %v6340 = vpack.c.b16 %v6153, %v6152
      %v6341 = vpack.c.b16 %v6155, %v6154
      %v6342 = vpack.c.b16 %v6157, %v6156
      %v6343 = vpack.c.b16 %v6159, %v6158
      %v6344 = vpack.c.b16 %v6161, %v6160
      %v6345 = vpack.c.b16 %v6163, %v6162
      %v6346 = vpack.c.b16 %v6165, %v6164
      %v6347 = vpack.c.b16 %v6167, %v6166
      %v6348 = vpack.c.b16 %v6169, %v6168
      %v6349 = vpack.c.b16 %v6171, %v6170
      %v6350 = vpack.c.b16 %v6173, %v6172
      %v6351 = vpack.c.b16 %v6175, %v6174
      %v6352 = vpack.c.b16 %v6177, %v6176
      %v6353 = vpack.c.b16 %v6179, %v6178
      %v6354 = vpack.c.b16 %v6181, %v6180
      %v6355 = vpack.c.b16 %v6183, %v6182
      %v6356 = vpack.c.b16 %v6185, %v6184
      %v6357 = vpack.c.b16 %v6187, %v6186
      %v6358 = vpack.c.b16 %v6189, %v6188
      %v6359 = vpack.c.b16 %v6191, %v6190
      %v6360 = vpack.c.b16 %v6193, %v6192
      %v6361 = vpack.c.b16 %v6195, %v6194
      %v6362 = vpack.c.b16 %v6197, %v6196
      %v6363 = vpack.c.b16 %v6199, %v6198
      %v6364 = vpack.c.b16 %v6201, %v6200
      %v6365 = vpack.c.b16 %v6203, %v6202
      %v6366 = vpack.c.b16 %v6205, %v6204
      %v6367 = vpack.c.b16 %v6207, %v6206
      %v6368 = vpack.c.b16 %v6209, %v6208
      %v6369 = vpack.c.b16 %v6211, %v6210
      %v6370 = vpack.c.b16 %v6213, %v6212
      %v6371 = vpack.c.b16 %v6215, %v6214
      %v6372 = vpack.c.b16 %v6217, %v6216
      %v6373 = vpack.c.b16 %v6219, %v6218
      %v6374 = vpack.c.b16 %v6221, %v6220
      %v6375 = vpack.c.b16 %v6223, %v6222
      %v6376 = vpack.c.b16 %v6225, %v6224
      %v6377 = vpack.c.b16 %v6227, %v6226
      %v6378 = vpack.c.b16 %v6229, %v6228
      %v6379 = vpack.c.b16 %v6231, %v6230
      %v6380 = vpack.c.b16 %v6233, %v6232
      %v6381 = vpack.c.b16 %v6235, %v6234
      %v6382 = vpack.c.b16 %v6237, %v6236
      %v6383 = vpack.c.b16 %v6239, %v6238
      %v6384 = vpack.c.b16 %v6241, %v6240
      %v6385 = vpack.c.b16 %v6243, %v6242
      %v6386 = vpack.c.b16 %v6245, %v6244
      %v6387 = vpack.c.b16 %v6247, %v6246
      %v6388 = vpack.c.b16 %v6249, %v6248
      %v6389 = vpack.c.b16 %v6251, %v6250
      %v6390 = vpack.c.b16 %v6253, %v6252
      %v6391 = vpack.c.b16 %v6255, %v6254
      %6528 = vmatpush.bf16.msra.mxu0 %v6263
      %6529 = vmatpush.bf16.msra.mxu0 %v6262
      %6530 = vmatpush.bf16.msra.mxu0 %v6261
      %6531 = vmatpush.bf16.msra.mxu0 %v6260
      %6532 = vmatpush.bf16.msra.mxu0 %v6259
      %6533 = vmatpush.bf16.msra.mxu0 %v6258
      %6534 = vmatpush.bf16.msra.mxu0 %v6257
      %6535 = vmatpush.bf16.msra.mxu0 %v6256
      %6536 = vmatmul.bf16.gmra.mxu0 %v5300
      %v6537 = vpop.f32.mrf.mxu0
      %v6538 = vadd.f32 %v5710, %v6537
      %v6539 = vpop.f32.mrf.mxu0
      %v6540 = vadd.f32 %v5710, %v6539
      %6541 = vmatmul.bf16.gmra.mxu0 %v5317
      %v6542 = vpop.f32.mrf.mxu0
      %v6543 = vadd.f32 %v5710, %v6542
      %v6544 = vpop.f32.mrf.mxu0
      %v6545 = vadd.f32 %v5710, %v6544
      %6546 = vmatmul.bf16.gmra.mxu0 %v5334
      %v6547 = vpop.f32.mrf.mxu0
      %v6548 = vadd.f32 %v5710, %v6547
      %v6549 = vpop.f32.mrf.mxu0
      %v6550 = vadd.f32 %v5710, %v6549
      %6551 = vmatmul.bf16.gmra.mxu0 %v5351
      %v6552 = vpop.f32.mrf.mxu0
      %v6553 = vadd.f32 %v5710, %v6552
      %v6554 = vpop.f32.mrf.mxu0
      %v6555 = vadd.f32 %v5710, %v6554
      %6556 = vmatmul.bf16.gmra.mxu0 %v5368
      %v6557 = vpop.f32.mrf.mxu0
      %v6558 = vadd.f32 %v5710, %v6557
      %v6559 = vpop.f32.mrf.mxu0
      %v6560 = vadd.f32 %v5710, %v6559
      %6561 = vmatmul.bf16.gmra.mxu0 %v5385
      %v6562 = vpop.f32.mrf.mxu0
      %v6563 = vadd.f32 %v5710, %v6562
      %v6564 = vpop.f32.mrf.mxu0
      %v6565 = vadd.f32 %v5710, %v6564
      %6566 = vmatmul.bf16.gmra.mxu0 %v5402
      %v6567 = vpop.f32.mrf.mxu0
      %v6568 = vadd.f32 %v5710, %v6567
      %v6569 = vpop.f32.mrf.mxu0
      %v6570 = vadd.f32 %v5710, %v6569
      %6571 = vmatmul.bf16.gmra.mxu0 %v5419
      %v6572 = vpop.f32.mrf.mxu0
      %v6573 = vadd.f32 %v5710, %v6572
      %v6574 = vpop.f32.mrf.mxu0
      %v6575 = vadd.f32 %v5710, %v6574
      %6576 = vdwg.mxu0
      %6577 = vmatpush.bf16.msra.mxu0 %v6271
      %6578 = vmatpush.bf16.msra.mxu0 %v6270
      %6579 = vmatpush.bf16.msra.mxu0 %v6269
      %6580 = vmatpush.bf16.msra.mxu0 %v6268
      %6581 = vmatpush.bf16.msra.mxu0 %v6267
      %6582 = vmatpush.bf16.msra.mxu0 %v6266
      %6583 = vmatpush.bf16.msra.mxu0 %v6265
      %6584 = vmatpush.bf16.msra.mxu0 %v6264
      %6585 = vmatmul.bf16.gmra.mxu0 %v5301
      %v6586 = vpop.f32.mrf.mxu0
      %v6587 = vadd.f32 %v6538, %v6586
      %v6588 = vpop.f32.mrf.mxu0
      %v6589 = vadd.f32 %v6540, %v6588
      %6590 = vmatmul.bf16.gmra.mxu0 %v5318
      %v6591 = vpop.f32.mrf.mxu0
      %v6592 = vadd.f32 %v6543, %v6591
      %v6593 = vpop.f32.mrf.mxu0
      %v6594 = vadd.f32 %v6545, %v6593
      %6595 = vmatmul.bf16.gmra.mxu0 %v5335
      %v6596 = vpop.f32.mrf.mxu0
      %v6597 = vadd.f32 %v6548, %v6596
      %v6598 = vpop.f32.mrf.mxu0
      %v6599 = vadd.f32 %v6550, %v6598
      %6600 = vmatmul.bf16.gmra.mxu0 %v5352
      %v6601 = vpop.f32.mrf.mxu0
      %v6602 = vadd.f32 %v6553, %v6601
      %v6603 = vpop.f32.mrf.mxu0
      %v6604 = vadd.f32 %v6555, %v6603
      %6605 = vmatmul.bf16.gmra.mxu0 %v5369
      %v6606 = vpop.f32.mrf.mxu0
      %v6607 = vadd.f32 %v6558, %v6606
      %v6608 = vpop.f32.mrf.mxu0
      %v6609 = vadd.f32 %v6560, %v6608
      %6610 = vmatmul.bf16.gmra.mxu0 %v5386
      %v6611 = vpop.f32.mrf.mxu0
      %v6612 = vadd.f32 %v6563, %v6611
      %v6613 = vpop.f32.mrf.mxu0
      %v6614 = vadd.f32 %v6565, %v6613
      %6615 = vmatmul.bf16.gmra.mxu0 %v5403
      %v6616 = vpop.f32.mrf.mxu0
      %v6617 = vadd.f32 %v6568, %v6616
      %v6618 = vpop.f32.mrf.mxu0
      %v6619 = vadd.f32 %v6570, %v6618
      %6620 = vmatmul.bf16.gmra.mxu0 %v5420
      %v6621 = vpop.f32.mrf.mxu0
      %v6622 = vadd.f32 %v6573, %v6621
      %v6623 = vpop.f32.mrf.mxu0
      %v6624 = vadd.f32 %v6575, %v6623
      %6625 = vdwg.mxu0
      %6626 = vmatpush.bf16.msra.mxu0 %v6279
      %6627 = vmatpush.bf16.msra.mxu0 %v6278
      %6628 = vmatpush.bf16.msra.mxu0 %v6277
      %6629 = vmatpush.bf16.msra.mxu0 %v6276
      %6630 = vmatpush.bf16.msra.mxu0 %v6275
      %6631 = vmatpush.bf16.msra.mxu0 %v6274
      %6632 = vmatpush.bf16.msra.mxu0 %v6273
      %6633 = vmatpush.bf16.msra.mxu0 %v6272
      %6634 = vmatmul.bf16.gmra.mxu0 %v5302
      %v6635 = vpop.f32.mrf.mxu0
      %v6636 = vadd.f32 %v6587, %v6635
      %v6637 = vpop.f32.mrf.mxu0
      %v6638 = vadd.f32 %v6589, %v6637
      %6639 = vmatmul.bf16.gmra.mxu0 %v5319
      %v6640 = vpop.f32.mrf.mxu0
      %v6641 = vadd.f32 %v6592, %v6640
      %v6642 = vpop.f32.mrf.mxu0
      %v6643 = vadd.f32 %v6594, %v6642
      %6644 = vmatmul.bf16.gmra.mxu0 %v5336
      %v6645 = vpop.f32.mrf.mxu0
      %v6646 = vadd.f32 %v6597, %v6645
      %v6647 = vpop.f32.mrf.mxu0
      %v6648 = vadd.f32 %v6599, %v6647
      %6649 = vmatmul.bf16.gmra.mxu0 %v5353
      %v6650 = vpop.f32.mrf.mxu0
      %v6651 = vadd.f32 %v6602, %v6650
      %v6652 = vpop.f32.mrf.mxu0
      %v6653 = vadd.f32 %v6604, %v6652
      %6654 = vmatmul.bf16.gmra.mxu0 %v5370
      %v6655 = vpop.f32.mrf.mxu0
      %v6656 = vadd.f32 %v6607, %v6655
      %v6657 = vpop.f32.mrf.mxu0
      %v6658 = vadd.f32 %v6609, %v6657
      %6659 = vmatmul.bf16.gmra.mxu0 %v5387
      %v6660 = vpop.f32.mrf.mxu0
      %v6661 = vadd.f32 %v6612, %v6660
      %v6662 = vpop.f32.mrf.mxu0
      %v6663 = vadd.f32 %v6614, %v6662
      %6664 = vmatmul.bf16.gmra.mxu0 %v5404
      %v6665 = vpop.f32.mrf.mxu0
      %v6666 = vadd.f32 %v6617, %v6665
      %v6667 = vpop.f32.mrf.mxu0
      %v6668 = vadd.f32 %v6619, %v6667
      %6669 = vmatmul.bf16.gmra.mxu0 %v5421
      %v6670 = vpop.f32.mrf.mxu0
      %v6671 = vadd.f32 %v6622, %v6670
      %v6672 = vpop.f32.mrf.mxu0
      %v6673 = vadd.f32 %v6624, %v6672
      %6674 = vdwg.mxu0
      %6675 = vmatpush.bf16.msra.mxu0 %v6287
      %6676 = vmatpush.bf16.msra.mxu0 %v6286
      %6677 = vmatpush.bf16.msra.mxu0 %v6285
      %6678 = vmatpush.bf16.msra.mxu0 %v6284
      %6679 = vmatpush.bf16.msra.mxu0 %v6283
      %6680 = vmatpush.bf16.msra.mxu0 %v6282
      %6681 = vmatpush.bf16.msra.mxu0 %v6281
      %6682 = vmatpush.bf16.msra.mxu0 %v6280
      %6683 = vmatmul.bf16.gmra.mxu0 %v5303
      %v6684 = vpop.f32.mrf.mxu0
      %v6685 = vadd.f32 %v6636, %v6684
      %v6686 = vpop.f32.mrf.mxu0
      %v6687 = vadd.f32 %v6638, %v6686
      %6688 = vmatmul.bf16.gmra.mxu0 %v5320
      %v6689 = vpop.f32.mrf.mxu0
      %v6690 = vadd.f32 %v6641, %v6689
      %v6691 = vpop.f32.mrf.mxu0
      %v6692 = vadd.f32 %v6643, %v6691
      %6693 = vmatmul.bf16.gmra.mxu0 %v5337
      %v6694 = vpop.f32.mrf.mxu0
      %v6695 = vadd.f32 %v6646, %v6694
      %v6696 = vpop.f32.mrf.mxu0
      %v6697 = vadd.f32 %v6648, %v6696
      %6698 = vmatmul.bf16.gmra.mxu0 %v5354
      %v6699 = vpop.f32.mrf.mxu0
      %v6700 = vadd.f32 %v6651, %v6699
      %v6701 = vpop.f32.mrf.mxu0
      %v6702 = vadd.f32 %v6653, %v6701
      %6703 = vmatmul.bf16.gmra.mxu0 %v5371
      %v6704 = vpop.f32.mrf.mxu0
      %v6705 = vadd.f32 %v6656, %v6704
      %v6706 = vpop.f32.mrf.mxu0
      %v6707 = vadd.f32 %v6658, %v6706
      %6708 = vmatmul.bf16.gmra.mxu0 %v5388
      %v6709 = vpop.f32.mrf.mxu0
      %v6710 = vadd.f32 %v6661, %v6709
      %v6711 = vpop.f32.mrf.mxu0
      %v6712 = vadd.f32 %v6663, %v6711
      %6713 = vmatmul.bf16.gmra.mxu0 %v5405
      %v6714 = vpop.f32.mrf.mxu0
      %v6715 = vadd.f32 %v6666, %v6714
      %v6716 = vpop.f32.mrf.mxu0
      %v6717 = vadd.f32 %v6668, %v6716
      %6718 = vmatmul.bf16.gmra.mxu0 %v5422
      %v6719 = vpop.f32.mrf.mxu0
      %v6720 = vadd.f32 %v6671, %v6719
      %v6721 = vpop.f32.mrf.mxu0
      %v6722 = vadd.f32 %v6673, %v6721
      %6723 = vdwg.mxu0
      %6724 = vmatpush.bf16.msra.mxu0 %v6295
      %6725 = vmatpush.bf16.msra.mxu0 %v6294
      %6726 = vmatpush.bf16.msra.mxu0 %v6293
      %6727 = vmatpush.bf16.msra.mxu0 %v6292
      %6728 = vmatpush.bf16.msra.mxu0 %v6291
      %6729 = vmatpush.bf16.msra.mxu0 %v6290
      %6730 = vmatpush.bf16.msra.mxu0 %v6289
      %6731 = vmatpush.bf16.msra.mxu0 %v6288
      %6732 = vmatmul.bf16.gmra.mxu0 %v5304
      %v6733 = vpop.f32.mrf.mxu0
      %v6734 = vadd.f32 %v6685, %v6733
      %v6735 = vpop.f32.mrf.mxu0
      %v6736 = vadd.f32 %v6687, %v6735
      %6737 = vmatmul.bf16.gmra.mxu0 %v5321
      %v6738 = vpop.f32.mrf.mxu0
      %v6739 = vadd.f32 %v6690, %v6738
      %v6740 = vpop.f32.mrf.mxu0
      %v6741 = vadd.f32 %v6692, %v6740
      %6742 = vmatmul.bf16.gmra.mxu0 %v5338
      %v6743 = vpop.f32.mrf.mxu0
      %v6744 = vadd.f32 %v6695, %v6743
      %v6745 = vpop.f32.mrf.mxu0
      %v6746 = vadd.f32 %v6697, %v6745
      %6747 = vmatmul.bf16.gmra.mxu0 %v5355
      %v6748 = vpop.f32.mrf.mxu0
      %v6749 = vadd.f32 %v6700, %v6748
      %v6750 = vpop.f32.mrf.mxu0
      %v6751 = vadd.f32 %v6702, %v6750
      %6752 = vmatmul.bf16.gmra.mxu0 %v5372
      %v6753 = vpop.f32.mrf.mxu0
      %v6754 = vadd.f32 %v6705, %v6753
      %v6755 = vpop.f32.mrf.mxu0
      %v6756 = vadd.f32 %v6707, %v6755
      %6757 = vmatmul.bf16.gmra.mxu0 %v5389
      %v6758 = vpop.f32.mrf.mxu0
      %v6759 = vadd.f32 %v6710, %v6758
      %v6760 = vpop.f32.mrf.mxu0
      %v6761 = vadd.f32 %v6712, %v6760
      %6762 = vmatmul.bf16.gmra.mxu0 %v5406
      %v6763 = vpop.f32.mrf.mxu0
      %v6764 = vadd.f32 %v6715, %v6763
      %v6765 = vpop.f32.mrf.mxu0
      %v6766 = vadd.f32 %v6717, %v6765
      %6767 = vmatmul.bf16.gmra.mxu0 %v5423
      %v6768 = vpop.f32.mrf.mxu0
      %v6769 = vadd.f32 %v6720, %v6768
      %v6770 = vpop.f32.mrf.mxu0
      %v6771 = vadd.f32 %v6722, %v6770
      %6772 = vdwg.mxu0
      %6773 = vmatpush.bf16.msra.mxu0 %v6303
      %6774 = vmatpush.bf16.msra.mxu0 %v6302
      %6775 = vmatpush.bf16.msra.mxu0 %v6301
      %6776 = vmatpush.bf16.msra.mxu0 %v6300
      %6777 = vmatpush.bf16.msra.mxu0 %v6299
      %6778 = vmatpush.bf16.msra.mxu0 %v6298
      %6779 = vmatpush.bf16.msra.mxu0 %v6297
      %6780 = vmatpush.bf16.msra.mxu0 %v6296
      %6781 = vmatmul.bf16.gmra.mxu0 %v5305
      %v6782 = vpop.f32.mrf.mxu0
      %v6783 = vadd.f32 %v6734, %v6782
      %v6784 = vpop.f32.mrf.mxu0
      %v6785 = vadd.f32 %v6736, %v6784
      %6786 = vmatmul.bf16.gmra.mxu0 %v5322
      %v6787 = vpop.f32.mrf.mxu0
      %v6788 = vadd.f32 %v6739, %v6787
      %v6789 = vpop.f32.mrf.mxu0
      %v6790 = vadd.f32 %v6741, %v6789
      %6791 = vmatmul.bf16.gmra.mxu0 %v5339
      %v6792 = vpop.f32.mrf.mxu0
      %v6793 = vadd.f32 %v6744, %v6792
      %v6794 = vpop.f32.mrf.mxu0
      %v6795 = vadd.f32 %v6746, %v6794
      %6796 = vmatmul.bf16.gmra.mxu0 %v5356
      %v6797 = vpop.f32.mrf.mxu0
      %v6798 = vadd.f32 %v6749, %v6797
      %v6799 = vpop.f32.mrf.mxu0
      %v6800 = vadd.f32 %v6751, %v6799
      %6801 = vmatmul.bf16.gmra.mxu0 %v5373
      %v6802 = vpop.f32.mrf.mxu0
      %v6803 = vadd.f32 %v6754, %v6802
      %v6804 = vpop.f32.mrf.mxu0
      %v6805 = vadd.f32 %v6756, %v6804
      %6806 = vmatmul.bf16.gmra.mxu0 %v5390
      %v6807 = vpop.f32.mrf.mxu0
      %v6808 = vadd.f32 %v6759, %v6807
      %v6809 = vpop.f32.mrf.mxu0
      %v6810 = vadd.f32 %v6761, %v6809
      %6811 = vmatmul.bf16.gmra.mxu0 %v5407
      %v6812 = vpop.f32.mrf.mxu0
      %v6813 = vadd.f32 %v6764, %v6812
      %v6814 = vpop.f32.mrf.mxu0
      %v6815 = vadd.f32 %v6766, %v6814
      %6816 = vmatmul.bf16.gmra.mxu0 %v5424
      %v6817 = vpop.f32.mrf.mxu0
      %v6818 = vadd.f32 %v6769, %v6817
      %v6819 = vpop.f32.mrf.mxu0
      %v6820 = vadd.f32 %v6771, %v6819
      %6821 = vdwg.mxu0
      %6822 = vmatpush.bf16.msra.mxu0 %v6311
      %6823 = vmatpush.bf16.msra.mxu0 %v6310
      %6824 = vmatpush.bf16.msra.mxu0 %v6309
      %6825 = vmatpush.bf16.msra.mxu0 %v6308
      %6826 = vmatpush.bf16.msra.mxu0 %v6307
      %6827 = vmatpush.bf16.msra.mxu0 %v6306
      %6828 = vmatpush.bf16.msra.mxu0 %v6305
      %6829 = vmatpush.bf16.msra.mxu0 %v6304
      %6830 = vmatmul.bf16.gmra.mxu0 %v5306
      %v6831 = vpop.f32.mrf.mxu0
      %v6832 = vadd.f32 %v6783, %v6831
      %v6833 = vpop.f32.mrf.mxu0
      %v6834 = vadd.f32 %v6785, %v6833
      %6835 = vmatmul.bf16.gmra.mxu0 %v5323
      %v6836 = vpop.f32.mrf.mxu0
      %v6837 = vadd.f32 %v6788, %v6836
      %v6838 = vpop.f32.mrf.mxu0
      %v6839 = vadd.f32 %v6790, %v6838
      %6840 = vmatmul.bf16.gmra.mxu0 %v5340
      %v6841 = vpop.f32.mrf.mxu0
      %v6842 = vadd.f32 %v6793, %v6841
      %v6843 = vpop.f32.mrf.mxu0
      %v6844 = vadd.f32 %v6795, %v6843
      %6845 = vmatmul.bf16.gmra.mxu0 %v5357
      %v6846 = vpop.f32.mrf.mxu0
      %v6847 = vadd.f32 %v6798, %v6846
      %v6848 = vpop.f32.mrf.mxu0
      %v6849 = vadd.f32 %v6800, %v6848
      %6850 = vmatmul.bf16.gmra.mxu0 %v5374
      %v6851 = vpop.f32.mrf.mxu0
      %v6852 = vadd.f32 %v6803, %v6851
      %v6853 = vpop.f32.mrf.mxu0
      %v6854 = vadd.f32 %v6805, %v6853
      %6855 = vmatmul.bf16.gmra.mxu0 %v5391
      %v6856 = vpop.f32.mrf.mxu0
      %v6857 = vadd.f32 %v6808, %v6856
      %v6858 = vpop.f32.mrf.mxu0
      %v6859 = vadd.f32 %v6810, %v6858
      %6860 = vmatmul.bf16.gmra.mxu0 %v5408
      %v6861 = vpop.f32.mrf.mxu0
      %v6862 = vadd.f32 %v6813, %v6861
      %v6863 = vpop.f32.mrf.mxu0
      %v6864 = vadd.f32 %v6815, %v6863
      %6865 = vmatmul.bf16.gmra.mxu0 %v5425
      %v6866 = vpop.f32.mrf.mxu0
      %v6867 = vadd.f32 %v6818, %v6866
      %v6868 = vpop.f32.mrf.mxu0
      %v6869 = vadd.f32 %v6820, %v6868
      %6870 = vdwg.mxu0
      %6871 = vmatpush.bf16.msra.mxu0 %v6319
      %6872 = vmatpush.bf16.msra.mxu0 %v6318
      %6873 = vmatpush.bf16.msra.mxu0 %v6317
      %6874 = vmatpush.bf16.msra.mxu0 %v6316
      %6875 = vmatpush.bf16.msra.mxu0 %v6315
      %6876 = vmatpush.bf16.msra.mxu0 %v6314
      %6877 = vmatpush.bf16.msra.mxu0 %v6313
      %6878 = vmatpush.bf16.msra.mxu0 %v6312
      %6879 = vmatmul.bf16.gmra.mxu0 %v5307
      %v6880 = vpop.f32.mrf.mxu0
      %v6881 = vadd.f32 %v6832, %v6880
      %v6882 = vpop.f32.mrf.mxu0
      %v6883 = vadd.f32 %v6834, %v6882
      %6884 = vmatmul.bf16.gmra.mxu0 %v5324
      %v6885 = vpop.f32.mrf.mxu0
      %v6886 = vadd.f32 %v6837, %v6885
      %v6887 = vpop.f32.mrf.mxu0
      %v6888 = vadd.f32 %v6839, %v6887
      %6889 = vmatmul.bf16.gmra.mxu0 %v5341
      %v6890 = vpop.f32.mrf.mxu0
      %v6891 = vadd.f32 %v6842, %v6890
      %v6892 = vpop.f32.mrf.mxu0
      %v6893 = vadd.f32 %v6844, %v6892
      %6894 = vmatmul.bf16.gmra.mxu0 %v5358
      %v6895 = vpop.f32.mrf.mxu0
      %v6896 = vadd.f32 %v6847, %v6895
      %v6897 = vpop.f32.mrf.mxu0
      %v6898 = vadd.f32 %v6849, %v6897
      %6899 = vmatmul.bf16.gmra.mxu0 %v5375
      %v6900 = vpop.f32.mrf.mxu0
      %v6901 = vadd.f32 %v6852, %v6900
      %v6902 = vpop.f32.mrf.mxu0
      %v6903 = vadd.f32 %v6854, %v6902
      %6904 = vmatmul.bf16.gmra.mxu0 %v5392
      %v6905 = vpop.f32.mrf.mxu0
      %v6906 = vadd.f32 %v6857, %v6905
      %v6907 = vpop.f32.mrf.mxu0
      %v6908 = vadd.f32 %v6859, %v6907
      %6909 = vmatmul.bf16.gmra.mxu0 %v5409
      %v6910 = vpop.f32.mrf.mxu0
      %v6911 = vadd.f32 %v6862, %v6910
      %v6912 = vpop.f32.mrf.mxu0
      %v6913 = vadd.f32 %v6864, %v6912
      %6914 = vmatmul.bf16.gmra.mxu0 %v5426
      %v6915 = vpop.f32.mrf.mxu0
      %v6916 = vadd.f32 %v6867, %v6915
      %v6917 = vpop.f32.mrf.mxu0
      %v6918 = vadd.f32 %v6869, %v6917
      %6919 = vdwg.mxu0
      %6920 = vmatpush.bf16.msra.mxu0 %v6327
      %6921 = vmatpush.bf16.msra.mxu0 %v6326
      %6922 = vmatpush.bf16.msra.mxu0 %v6325
      %6923 = vmatpush.bf16.msra.mxu0 %v6324
      %6924 = vmatpush.bf16.msra.mxu0 %v6323
      %6925 = vmatpush.bf16.msra.mxu0 %v6322
      %6926 = vmatpush.bf16.msra.mxu0 %v6321
      %6927 = vmatpush.bf16.msra.mxu0 %v6320
      %6928 = vmatmul.bf16.gmra.mxu0 %v5308
      %v6929 = vpop.f32.mrf.mxu0
      %v6930 = vadd.f32 %v6881, %v6929
      %v6931 = vpop.f32.mrf.mxu0
      %v6932 = vadd.f32 %v6883, %v6931
      %6933 = vmatmul.bf16.gmra.mxu0 %v5325
      %v6934 = vpop.f32.mrf.mxu0
      %v6935 = vadd.f32 %v6886, %v6934
      %v6936 = vpop.f32.mrf.mxu0
      %v6937 = vadd.f32 %v6888, %v6936
      %6938 = vmatmul.bf16.gmra.mxu0 %v5342
      %v6939 = vpop.f32.mrf.mxu0
      %v6940 = vadd.f32 %v6891, %v6939
      %v6941 = vpop.f32.mrf.mxu0
      %v6942 = vadd.f32 %v6893, %v6941
      %6943 = vmatmul.bf16.gmra.mxu0 %v5359
      %v6944 = vpop.f32.mrf.mxu0
      %v6945 = vadd.f32 %v6896, %v6944
      %v6946 = vpop.f32.mrf.mxu0
      %v6947 = vadd.f32 %v6898, %v6946
      %6948 = vmatmul.bf16.gmra.mxu0 %v5376
      %v6949 = vpop.f32.mrf.mxu0
      %v6950 = vadd.f32 %v6901, %v6949
      %v6951 = vpop.f32.mrf.mxu0
      %v6952 = vadd.f32 %v6903, %v6951
      %6953 = vmatmul.bf16.gmra.mxu0 %v5393
      %v6954 = vpop.f32.mrf.mxu0
      %v6955 = vadd.f32 %v6906, %v6954
      %v6956 = vpop.f32.mrf.mxu0
      %v6957 = vadd.f32 %v6908, %v6956
      %6958 = vmatmul.bf16.gmra.mxu0 %v5410
      %v6959 = vpop.f32.mrf.mxu0
      %v6960 = vadd.f32 %v6911, %v6959
      %v6961 = vpop.f32.mrf.mxu0
      %v6962 = vadd.f32 %v6913, %v6961
      %6963 = vmatmul.bf16.gmra.mxu0 %v5427
      %v6964 = vpop.f32.mrf.mxu0
      %v6965 = vadd.f32 %v6916, %v6964
      %v6966 = vpop.f32.mrf.mxu0
      %v6967 = vadd.f32 %v6918, %v6966
      %6968 = vdwg.mxu0
      %6969 = vmatpush.bf16.msra.mxu0 %v6335
      %6970 = vmatpush.bf16.msra.mxu0 %v6334
      %6971 = vmatpush.bf16.msra.mxu0 %v6333
      %6972 = vmatpush.bf16.msra.mxu0 %v6332
      %6973 = vmatpush.bf16.msra.mxu0 %v6331
      %6974 = vmatpush.bf16.msra.mxu0 %v6330
      %6975 = vmatpush.bf16.msra.mxu0 %v6329
      %6976 = vmatpush.bf16.msra.mxu0 %v6328
      %6977 = vmatmul.bf16.gmra.mxu0 %v5309
      %v6978 = vpop.f32.mrf.mxu0
      %v6979 = vadd.f32 %v6930, %v6978
      %v6980 = vpop.f32.mrf.mxu0
      %v6981 = vadd.f32 %v6932, %v6980
      %6982 = vmatmul.bf16.gmra.mxu0 %v5326
      %v6983 = vpop.f32.mrf.mxu0
      %v6984 = vadd.f32 %v6935, %v6983
      %v6985 = vpop.f32.mrf.mxu0
      %v6986 = vadd.f32 %v6937, %v6985
      %6987 = vmatmul.bf16.gmra.mxu0 %v5343
      %v6988 = vpop.f32.mrf.mxu0
      %v6989 = vadd.f32 %v6940, %v6988
      %v6990 = vpop.f32.mrf.mxu0
      %v6991 = vadd.f32 %v6942, %v6990
      %6992 = vmatmul.bf16.gmra.mxu0 %v5360
      %v6993 = vpop.f32.mrf.mxu0
      %v6994 = vadd.f32 %v6945, %v6993
      %v6995 = vpop.f32.mrf.mxu0
      %v6996 = vadd.f32 %v6947, %v6995
      %6997 = vmatmul.bf16.gmra.mxu0 %v5377
      %v6998 = vpop.f32.mrf.mxu0
      %v6999 = vadd.f32 %v6950, %v6998
      %v7000 = vpop.f32.mrf.mxu0
      %v7001 = vadd.f32 %v6952, %v7000
      %7002 = vmatmul.bf16.gmra.mxu0 %v5394
      %v7003 = vpop.f32.mrf.mxu0
      %v7004 = vadd.f32 %v6955, %v7003
      %v7005 = vpop.f32.mrf.mxu0
      %v7006 = vadd.f32 %v6957, %v7005
      %7007 = vmatmul.bf16.gmra.mxu0 %v5411
      %v7008 = vpop.f32.mrf.mxu0
      %v7009 = vadd.f32 %v6960, %v7008
      %v7010 = vpop.f32.mrf.mxu0
      %v7011 = vadd.f32 %v6962, %v7010
      %7012 = vmatmul.bf16.gmra.mxu0 %v5428
      %v7013 = vpop.f32.mrf.mxu0
      %v7014 = vadd.f32 %v6965, %v7013
      %v7015 = vpop.f32.mrf.mxu0
      %v7016 = vadd.f32 %v6967, %v7015
      %7017 = vdwg.mxu0
      %7018 = vmatpush.bf16.msra.mxu0 %v6343
      %7019 = vmatpush.bf16.msra.mxu0 %v6342
      %7020 = vmatpush.bf16.msra.mxu0 %v6341
      %7021 = vmatpush.bf16.msra.mxu0 %v6340
      %7022 = vmatpush.bf16.msra.mxu0 %v6339
      %7023 = vmatpush.bf16.msra.mxu0 %v6338
      %7024 = vmatpush.bf16.msra.mxu0 %v6337
      %7025 = vmatpush.bf16.msra.mxu0 %v6336
      %7026 = vmatmul.bf16.gmra.mxu0 %v5310
      %v7027 = vpop.f32.mrf.mxu0
      %v7028 = vadd.f32 %v6979, %v7027
      %v7029 = vpop.f32.mrf.mxu0
      %v7030 = vadd.f32 %v6981, %v7029
      %7031 = vmatmul.bf16.gmra.mxu0 %v5327
      %v7032 = vpop.f32.mrf.mxu0
      %v7033 = vadd.f32 %v6984, %v7032
      %v7034 = vpop.f32.mrf.mxu0
      %v7035 = vadd.f32 %v6986, %v7034
      %7036 = vmatmul.bf16.gmra.mxu0 %v5344
      %v7037 = vpop.f32.mrf.mxu0
      %v7038 = vadd.f32 %v6989, %v7037
      %v7039 = vpop.f32.mrf.mxu0
      %v7040 = vadd.f32 %v6991, %v7039
      %7041 = vmatmul.bf16.gmra.mxu0 %v5361
      %v7042 = vpop.f32.mrf.mxu0
      %v7043 = vadd.f32 %v6994, %v7042
      %v7044 = vpop.f32.mrf.mxu0
      %v7045 = vadd.f32 %v6996, %v7044
      %7046 = vmatmul.bf16.gmra.mxu0 %v5378
      %v7047 = vpop.f32.mrf.mxu0
      %v7048 = vadd.f32 %v6999, %v7047
      %v7049 = vpop.f32.mrf.mxu0
      %v7050 = vadd.f32 %v7001, %v7049
      %7051 = vmatmul.bf16.gmra.mxu0 %v5395
      %v7052 = vpop.f32.mrf.mxu0
      %v7053 = vadd.f32 %v7004, %v7052
      %v7054 = vpop.f32.mrf.mxu0
      %v7055 = vadd.f32 %v7006, %v7054
      %7056 = vmatmul.bf16.gmra.mxu0 %v5412
      %v7057 = vpop.f32.mrf.mxu0
      %v7058 = vadd.f32 %v7009, %v7057
      %v7059 = vpop.f32.mrf.mxu0
      %v7060 = vadd.f32 %v7011, %v7059
      %7061 = vmatmul.bf16.gmra.mxu0 %v5429
      %v7062 = vpop.f32.mrf.mxu0
      %v7063 = vadd.f32 %v7014, %v7062
      %v7064 = vpop.f32.mrf.mxu0
      %v7065 = vadd.f32 %v7016, %v7064
      %7066 = vdwg.mxu0
      %7067 = vmatpush.bf16.msra.mxu0 %v6351
      %7068 = vmatpush.bf16.msra.mxu0 %v6350
      %7069 = vmatpush.bf16.msra.mxu0 %v6349
      %7070 = vmatpush.bf16.msra.mxu0 %v6348
      %7071 = vmatpush.bf16.msra.mxu0 %v6347
      %7072 = vmatpush.bf16.msra.mxu0 %v6346
      %7073 = vmatpush.bf16.msra.mxu0 %v6345
      %7074 = vmatpush.bf16.msra.mxu0 %v6344
      %7075 = vmatmul.bf16.gmra.mxu0 %v5311
      %v7076 = vpop.f32.mrf.mxu0
      %v7077 = vadd.f32 %v7028, %v7076
      %v7078 = vpop.f32.mrf.mxu0
      %v7079 = vadd.f32 %v7030, %v7078
      %7080 = vmatmul.bf16.gmra.mxu0 %v5328
      %v7081 = vpop.f32.mrf.mxu0
      %v7082 = vadd.f32 %v7033, %v7081
      %v7083 = vpop.f32.mrf.mxu0
      %v7084 = vadd.f32 %v7035, %v7083
      %7085 = vmatmul.bf16.gmra.mxu0 %v5345
      %v7086 = vpop.f32.mrf.mxu0
      %v7087 = vadd.f32 %v7038, %v7086
      %v7088 = vpop.f32.mrf.mxu0
      %v7089 = vadd.f32 %v7040, %v7088
      %7090 = vmatmul.bf16.gmra.mxu0 %v5362
      %v7091 = vpop.f32.mrf.mxu0
      %v7092 = vadd.f32 %v7043, %v7091
      %v7093 = vpop.f32.mrf.mxu0
      %v7094 = vadd.f32 %v7045, %v7093
      %7095 = vmatmul.bf16.gmra.mxu0 %v5379
      %v7096 = vpop.f32.mrf.mxu0
      %v7097 = vadd.f32 %v7048, %v7096
      %v7098 = vpop.f32.mrf.mxu0
      %v7099 = vadd.f32 %v7050, %v7098
      %7100 = vmatmul.bf16.gmra.mxu0 %v5396
      %v7101 = vpop.f32.mrf.mxu0
      %v7102 = vadd.f32 %v7053, %v7101
      %v7103 = vpop.f32.mrf.mxu0
      %v7104 = vadd.f32 %v7055, %v7103
      %7105 = vmatmul.bf16.gmra.mxu0 %v5413
      %v7106 = vpop.f32.mrf.mxu0
      %v7107 = vadd.f32 %v7058, %v7106
      %v7108 = vpop.f32.mrf.mxu0
      %v7109 = vadd.f32 %v7060, %v7108
      %7110 = vmatmul.bf16.gmra.mxu0 %v5430
      %v7111 = vpop.f32.mrf.mxu0
      %v7112 = vadd.f32 %v7063, %v7111
      %v7113 = vpop.f32.mrf.mxu0
      %v7114 = vadd.f32 %v7065, %v7113
      %7115 = vdwg.mxu0
      %7116 = vmatpush.bf16.msra.mxu0 %v6359
      %7117 = vmatpush.bf16.msra.mxu0 %v6358
      %7118 = vmatpush.bf16.msra.mxu0 %v6357
      %7119 = vmatpush.bf16.msra.mxu0 %v6356
      %7120 = vmatpush.bf16.msra.mxu0 %v6355
      %7121 = vmatpush.bf16.msra.mxu0 %v6354
      %7122 = vmatpush.bf16.msra.mxu0 %v6353
      %7123 = vmatpush.bf16.msra.mxu0 %v6352
      %7124 = vmatmul.bf16.gmra.mxu0 %v5312
      %v7125 = vpop.f32.mrf.mxu0
      %v7126 = vadd.f32 %v7077, %v7125
      %v7127 = vpop.f32.mrf.mxu0
      %v7128 = vadd.f32 %v7079, %v7127
      %7129 = vmatmul.bf16.gmra.mxu0 %v5329
      %v7130 = vpop.f32.mrf.mxu0
      %v7131 = vadd.f32 %v7082, %v7130
      %v7132 = vpop.f32.mrf.mxu0
      %v7133 = vadd.f32 %v7084, %v7132
      %7134 = vmatmul.bf16.gmra.mxu0 %v5346
      %v7135 = vpop.f32.mrf.mxu0
      %v7136 = vadd.f32 %v7087, %v7135
      %v7137 = vpop.f32.mrf.mxu0
      %v7138 = vadd.f32 %v7089, %v7137
      %7139 = vmatmul.bf16.gmra.mxu0 %v5363
      %v7140 = vpop.f32.mrf.mxu0
      %v7141 = vadd.f32 %v7092, %v7140
      %v7142 = vpop.f32.mrf.mxu0
      %v7143 = vadd.f32 %v7094, %v7142
      %7144 = vmatmul.bf16.gmra.mxu0 %v5380
      %v7145 = vpop.f32.mrf.mxu0
      %v7146 = vadd.f32 %v7097, %v7145
      %v7147 = vpop.f32.mrf.mxu0
      %v7148 = vadd.f32 %v7099, %v7147
      %7149 = vmatmul.bf16.gmra.mxu0 %v5397
      %v7150 = vpop.f32.mrf.mxu0
      %v7151 = vadd.f32 %v7102, %v7150
      %v7152 = vpop.f32.mrf.mxu0
      %v7153 = vadd.f32 %v7104, %v7152
      %7154 = vmatmul.bf16.gmra.mxu0 %v5414
      %v7155 = vpop.f32.mrf.mxu0
      %v7156 = vadd.f32 %v7107, %v7155
      %v7157 = vpop.f32.mrf.mxu0
      %v7158 = vadd.f32 %v7109, %v7157
      %7159 = vmatmul.bf16.gmra.mxu0 %v5431
      %v7160 = vpop.f32.mrf.mxu0
      %v7161 = vadd.f32 %v7112, %v7160
      %v7162 = vpop.f32.mrf.mxu0
      %v7163 = vadd.f32 %v7114, %v7162
      %7164 = vdwg.mxu0
      %7165 = vmatpush.bf16.msra.mxu0 %v6367
      %7166 = vmatpush.bf16.msra.mxu0 %v6366
      %7167 = vmatpush.bf16.msra.mxu0 %v6365
      %7168 = vmatpush.bf16.msra.mxu0 %v6364
      %7169 = vmatpush.bf16.msra.mxu0 %v6363
      %7170 = vmatpush.bf16.msra.mxu0 %v6362
      %7171 = vmatpush.bf16.msra.mxu0 %v6361
      %7172 = vmatpush.bf16.msra.mxu0 %v6360
      %7173 = vmatmul.bf16.gmra.mxu0 %v5313
      %v7174 = vpop.f32.mrf.mxu0
      %v7175 = vadd.f32 %v7126, %v7174
      %v7176 = vpop.f32.mrf.mxu0
      %v7177 = vadd.f32 %v7128, %v7176
      %7178 = vmatmul.bf16.gmra.mxu0 %v5330
      %v7179 = vpop.f32.mrf.mxu0
      %v7180 = vadd.f32 %v7131, %v7179
      %v7181 = vpop.f32.mrf.mxu0
      %v7182 = vadd.f32 %v7133, %v7181
      %7183 = vmatmul.bf16.gmra.mxu0 %v5347
      %v7184 = vpop.f32.mrf.mxu0
      %v7185 = vadd.f32 %v7136, %v7184
      %v7186 = vpop.f32.mrf.mxu0
      %v7187 = vadd.f32 %v7138, %v7186
      %7188 = vmatmul.bf16.gmra.mxu0 %v5364
      %v7189 = vpop.f32.mrf.mxu0
      %v7190 = vadd.f32 %v7141, %v7189
      %v7191 = vpop.f32.mrf.mxu0
      %v7192 = vadd.f32 %v7143, %v7191
      %7193 = vmatmul.bf16.gmra.mxu0 %v5381
      %v7194 = vpop.f32.mrf.mxu0
      %v7195 = vadd.f32 %v7146, %v7194
      %v7196 = vpop.f32.mrf.mxu0
      %v7197 = vadd.f32 %v7148, %v7196
      %7198 = vmatmul.bf16.gmra.mxu0 %v5398
      %v7199 = vpop.f32.mrf.mxu0
      %v7200 = vadd.f32 %v7151, %v7199
      %v7201 = vpop.f32.mrf.mxu0
      %v7202 = vadd.f32 %v7153, %v7201
      %7203 = vmatmul.bf16.gmra.mxu0 %v5415
      %v7204 = vpop.f32.mrf.mxu0
      %v7205 = vadd.f32 %v7156, %v7204
      %v7206 = vpop.f32.mrf.mxu0
      %v7207 = vadd.f32 %v7158, %v7206
      %7208 = vmatmul.bf16.gmra.mxu0 %v5432
      %v7209 = vpop.f32.mrf.mxu0
      %v7210 = vadd.f32 %v7161, %v7209
      %v7211 = vpop.f32.mrf.mxu0
      %v7212 = vadd.f32 %v7163, %v7211
      %7213 = vdwg.mxu0
      %7214 = vmatpush.bf16.msra.mxu0 %v6375
      %7215 = vmatpush.bf16.msra.mxu0 %v6374
      %7216 = vmatpush.bf16.msra.mxu0 %v6373
      %7217 = vmatpush.bf16.msra.mxu0 %v6372
      %7218 = vmatpush.bf16.msra.mxu0 %v6371
      %7219 = vmatpush.bf16.msra.mxu0 %v6370
      %7220 = vmatpush.bf16.msra.mxu0 %v6369
      %7221 = vmatpush.bf16.msra.mxu0 %v6368
      %7222 = vmatmul.bf16.gmra.mxu0 %v5314
      %v7223 = vpop.f32.mrf.mxu0
      %v7224 = vadd.f32 %v7175, %v7223
      %v7225 = vpop.f32.mrf.mxu0
      %v7226 = vadd.f32 %v7177, %v7225
      %7227 = vmatmul.bf16.gmra.mxu0 %v5331
      %v7228 = vpop.f32.mrf.mxu0
      %v7229 = vadd.f32 %v7180, %v7228
      %v7230 = vpop.f32.mrf.mxu0
      %v7231 = vadd.f32 %v7182, %v7230
      %7232 = vmatmul.bf16.gmra.mxu0 %v5348
      %v7233 = vpop.f32.mrf.mxu0
      %v7234 = vadd.f32 %v7185, %v7233
      %v7235 = vpop.f32.mrf.mxu0
      %v7236 = vadd.f32 %v7187, %v7235
      %7237 = vmatmul.bf16.gmra.mxu0 %v5365
      %v7238 = vpop.f32.mrf.mxu0
      %v7239 = vadd.f32 %v7190, %v7238
      %v7240 = vpop.f32.mrf.mxu0
      %v7241 = vadd.f32 %v7192, %v7240
      %7242 = vmatmul.bf16.gmra.mxu0 %v5382
      %v7243 = vpop.f32.mrf.mxu0
      %v7244 = vadd.f32 %v7195, %v7243
      %v7245 = vpop.f32.mrf.mxu0
      %v7246 = vadd.f32 %v7197, %v7245
      %7247 = vmatmul.bf16.gmra.mxu0 %v5399
      %v7248 = vpop.f32.mrf.mxu0
      %v7249 = vadd.f32 %v7200, %v7248
      %v7250 = vpop.f32.mrf.mxu0
      %v7251 = vadd.f32 %v7202, %v7250
      %7252 = vmatmul.bf16.gmra.mxu0 %v5416
      %v7253 = vpop.f32.mrf.mxu0
      %v7254 = vadd.f32 %v7205, %v7253
      %v7255 = vpop.f32.mrf.mxu0
      %v7256 = vadd.f32 %v7207, %v7255
      %7257 = vmatmul.bf16.gmra.mxu0 %v5433
      %v7258 = vpop.f32.mrf.mxu0
      %v7259 = vadd.f32 %v7210, %v7258
      %v7260 = vpop.f32.mrf.mxu0
      %v7261 = vadd.f32 %v7212, %v7260
      %7262 = vdwg.mxu0
      %7263 = vmatpush.bf16.msra.mxu0 %v6383
      %7264 = vmatpush.bf16.msra.mxu0 %v6382
      %7265 = vmatpush.bf16.msra.mxu0 %v6381
      %7266 = vmatpush.bf16.msra.mxu0 %v6380
      %7267 = vmatpush.bf16.msra.mxu0 %v6379
      %7268 = vmatpush.bf16.msra.mxu0 %v6378
      %7269 = vmatpush.bf16.msra.mxu0 %v6377
      %7270 = vmatpush.bf16.msra.mxu0 %v6376
      %7271 = vmatmul.bf16.gmra.mxu0 %v5315
      %v7272 = vpop.f32.mrf.mxu0
      %v7273 = vadd.f32 %v7224, %v7272
      %v7274 = vpop.f32.mrf.mxu0
      %v7275 = vadd.f32 %v7226, %v7274
      %7276 = vmatmul.bf16.gmra.mxu0 %v5332
      %v7277 = vpop.f32.mrf.mxu0
      %v7278 = vadd.f32 %v7229, %v7277
      %v7279 = vpop.f32.mrf.mxu0
      %v7280 = vadd.f32 %v7231, %v7279
      %7281 = vmatmul.bf16.gmra.mxu0 %v5349
      %v7282 = vpop.f32.mrf.mxu0
      %v7283 = vadd.f32 %v7234, %v7282
      %v7284 = vpop.f32.mrf.mxu0
      %v7285 = vadd.f32 %v7236, %v7284
      %7286 = vmatmul.bf16.gmra.mxu0 %v5366
      %v7287 = vpop.f32.mrf.mxu0
      %v7288 = vadd.f32 %v7239, %v7287
      %v7289 = vpop.f32.mrf.mxu0
      %v7290 = vadd.f32 %v7241, %v7289
      %7291 = vmatmul.bf16.gmra.mxu0 %v5383
      %v7292 = vpop.f32.mrf.mxu0
      %v7293 = vadd.f32 %v7244, %v7292
      %v7294 = vpop.f32.mrf.mxu0
      %v7295 = vadd.f32 %v7246, %v7294
      %7296 = vmatmul.bf16.gmra.mxu0 %v5400
      %v7297 = vpop.f32.mrf.mxu0
      %v7298 = vadd.f32 %v7249, %v7297
      %v7299 = vpop.f32.mrf.mxu0
      %v7300 = vadd.f32 %v7251, %v7299
      %7301 = vmatmul.bf16.gmra.mxu0 %v5417
      %v7302 = vpop.f32.mrf.mxu0
      %v7303 = vadd.f32 %v7254, %v7302
      %v7304 = vpop.f32.mrf.mxu0
      %v7305 = vadd.f32 %v7256, %v7304
      %7306 = vmatmul.bf16.gmra.mxu0 %v5434
      %v7307 = vpop.f32.mrf.mxu0
      %v7308 = vadd.f32 %v7259, %v7307
      %v7309 = vpop.f32.mrf.mxu0
      %v7310 = vadd.f32 %v7261, %v7309
      %7311 = vdwg.mxu0
      %7312 = vmatpush.bf16.msra.mxu0 %v6391
      %7313 = vmatpush.bf16.msra.mxu0 %v6390
      %7314 = vmatpush.bf16.msra.mxu0 %v6389
      %7315 = vmatpush.bf16.msra.mxu0 %v6388
      %7316 = vmatpush.bf16.msra.mxu0 %v6387
      %7317 = vmatpush.bf16.msra.mxu0 %v6386
      %7318 = vmatpush.bf16.msra.mxu0 %v6385
      %7319 = vmatpush.bf16.msra.mxu0 %v6384
      %7320 = vmatmul.bf16.gmra.mxu0 %v5316
      %v7321 = vpop.f32.mrf.mxu0
      %v7322 = vadd.f32 %v7273, %v7321
      %v7323 = vpop.f32.mrf.mxu0
      %v7324 = vadd.f32 %v7275, %v7323
      %7325 = vmatmul.bf16.gmra.mxu0 %v5333
      %v7326 = vpop.f32.mrf.mxu0
      %v7327 = vadd.f32 %v7278, %v7326
      %v7328 = vpop.f32.mrf.mxu0
      %v7329 = vadd.f32 %v7280, %v7328
      %7330 = vmatmul.bf16.gmra.mxu0 %v5350
      %v7331 = vpop.f32.mrf.mxu0
      %v7332 = vadd.f32 %v7283, %v7331
      %v7333 = vpop.f32.mrf.mxu0
      %v7334 = vadd.f32 %v7285, %v7333
      %7335 = vmatmul.bf16.gmra.mxu0 %v5367
      %v7336 = vpop.f32.mrf.mxu0
      %v7337 = vadd.f32 %v7288, %v7336
      %v7338 = vpop.f32.mrf.mxu0
      %v7339 = vadd.f32 %v7290, %v7338
      %7340 = vmatmul.bf16.gmra.mxu0 %v5384
      %v7341 = vpop.f32.mrf.mxu0
      %v7342 = vadd.f32 %v7293, %v7341
      %v7343 = vpop.f32.mrf.mxu0
      %v7344 = vadd.f32 %v7295, %v7343
      %7345 = vmatmul.bf16.gmra.mxu0 %v5401
      %v7346 = vpop.f32.mrf.mxu0
      %v7347 = vadd.f32 %v7298, %v7346
      %v7348 = vpop.f32.mrf.mxu0
      %v7349 = vadd.f32 %v7300, %v7348
      %7350 = vmatmul.bf16.gmra.mxu0 %v5418
      %v7351 = vpop.f32.mrf.mxu0
      %v7352 = vadd.f32 %v7303, %v7351
      %v7353 = vpop.f32.mrf.mxu0
      %v7354 = vadd.f32 %v7305, %v7353
      %7355 = vmatmul.bf16.gmra.mxu0 %v5435
      %v7356 = vpop.f32.mrf.mxu0
      %v7357 = vadd.f32 %v7308, %v7356
      %v7358 = vpop.f32.mrf.mxu0
      %v7359 = vadd.f32 %v7310, %v7358
      %7360 = vdwg.mxu0
      %v7361 = vpack.c.bf16 %v7322, %v7322
      %v7362 = vpack.c.bf16 %v7324, %v7324
      %v7363 = vpack.c.bf16 %v7327, %v7327
      %v7364 = vpack.c.bf16 %v7329, %v7329
      %v7365 = vpack.c.bf16 %v7332, %v7332
      %v7366 = vpack.c.bf16 %v7334, %v7334
      %v7367 = vpack.c.bf16 %v7337, %v7337
      %v7368 = vpack.c.bf16 %v7339, %v7339
      %v7369 = vpack.c.bf16 %v7342, %v7342
      %v7370 = vpack.c.bf16 %v7344, %v7344
      %v7371 = vpack.c.bf16 %v7347, %v7347
      %v7372 = vpack.c.bf16 %v7349, %v7349
      %v7373 = vpack.c.bf16 %v7352, %v7352
      %v7374 = vpack.c.bf16 %v7354, %v7354
      %v7375 = vpack.c.bf16 %v7357, %v7357
      %v7376 = vpack.c.bf16 %v7359, %v7359
      %vm7377 = vcmask 519168
      %7378 = vst.msk [vmem:[%s229] sm:$0xf] %vm7377, %v7361
      %7379 = vst.msk [vmem:[%s229 + $0x4] sm:$0xf] %vm7377, %v7362
      %7380 = vst.msk [vmem:[%s229 + $0x8] sm:$0xf] %vm7377, %v7363
      %7381 = vst.msk [vmem:[%s229 + $0xc] sm:$0xf] %vm7377, %v7364
      %7382 = vst.msk [vmem:[%s229 + $0x10] sm:$0xf] %vm7377, %v7365
      %7383 = vst.msk [vmem:[%s229 + $0x14] sm:$0xf] %vm7377, %v7366
      %7384 = vst.msk [vmem:[%s229 + $0x18] sm:$0xf] %vm7377, %v7367
      %7385 = vst.msk [vmem:[%s229 + $0x1c] sm:$0xf] %vm7377, %v7368
      %7386 = vst.msk [vmem:[%s229 + $0x20] sm:$0xf] %vm7377, %v7369
      %7387 = vst.msk [vmem:[%s229 + $0x24] sm:$0xf] %vm7377, %v7370
      %7388 = vst.msk [vmem:[%s229 + $0x28] sm:$0xf] %vm7377, %v7371
      %7389 = vst.msk [vmem:[%s229 + $0x2c] sm:$0xf] %vm7377, %v7372
      %7390 = vst.msk [vmem:[%s229 + $0x30] sm:$0xf] %vm7377, %v7373
      %7391 = vst.msk [vmem:[%s229 + $0x34] sm:$0xf] %vm7377, %v7374
      %7392 = vst.msk [vmem:[%s229 + $0x38] sm:$0xf] %vm7377, %v7375
      %7393 = vst.msk [vmem:[%s229 + $0x3c] sm:$0xf] %vm7377, %v7376
      %s7394 = smul.u32 16, %s16
      %p7395 = scmp.lt.s32.totalorder %s7394, 47
      %s7396 = scalar_select %p7395, %s7394, 47
      %s7397 = smul.addr %s7396, 4
      %s7398 = scalar_lea.vmem %s5, %s7397
      // Predicated region
      $region41: #{pfn_forward.1} parent=39 // pred_check
        %p7399 = pneg %p144
      $region42: #{pfn_forward.1} parent=39 // pred_check_branch
        %7401 = sbr.rel (%p7399) target = $region44
      $region43: #{pfn_forward.1} parent=39 // pred_region
        %s7402 = smul.u32 16, %s16
      $region44: #{pfn_forward.1} parent=39 // pred_fallthru
        _
    $region40: #{pfn_forward.1} parent=5 // pred_fallthru
      _
    %p7403 = scmp.le.s32.totalorder 2, %s11
    // Predicated region
    $region45: #{pfn_forward.1} parent=5 // pred_check
      %p7404 = pneg %p7403
    $region46: #{pfn_forward.1} parent=5 // pred_check_branch
      %7406 = sbr.rel (%p7404) target = $region48
    $region47: #{pfn_forward.1} parent=5 // pred_region
      %s7407 = ssub.s32 %s11, 2
      // Predicated region
      $region49: #{pfn_forward.1} parent=47 // pred_check
        %p7408 = pneg %p150
      $region50: #{pfn_forward.1} parent=47 // pred_check_branch
        %7410 = sbr.rel (%p7408) target = $region52
      $region51: #{pfn_forward.1} parent=47 // pred_region
        %s7411 = smul.u32 16, %s17
        %p7412 = scmp.lt.s32.totalorder %s7411, 47
        %s7413 = scalar_select %p7412, %s7411, 47
        %s7414 = smul.addr %s7413, 4
        %s7415 = scalar_lea.vmem %s5, %s7414
      $region52: #{pfn_forward.1} parent=47 // pred_fallthru
        _
    $region48: #{pfn_forward.1} parent=5 // pred_fallthru
      _
  $region6: #{pfn_forward.1} parent=0 // loop_footer
    %s15 = sadd.s32 1, %s11
  $region7: #{pfn_forward.1} parent=0 // loop_footer_branch
    %10 = sbr.rel target = $region3
  $region8: #{pfn_forward.1} parent=0 // loop_exit
    _

</llo_original>
